<compile_context>
chip_gen: v7x
topology: tpu7x:2x2x1
jax: 0.10.0
libtpu: 0.0.40
codegen_flags: <defaults>
</compile_context>

<pallas_src>
import functools

import jax
import jax.numpy as jnp
from jax.experimental import pallas as pl
from jax.experimental.pallas import tpu as pltpu


def _round_up(x, m):
    return (x + m - 1) // m * m


# ----------------------------------------------------------------------------
# Pallas conv2d kernel (valid convolution, fused bias + optional ReLU)
# ----------------------------------------------------------------------------
def _conv2d_kernel(x_ref, w_ref, b_ref, o_ref, acc_ref, *,
                   kh, kw, tile_ho, wo, relu):
    # x_ref : (1, H_pad, W_pad, Cin)   full padded image, VMEM resident (bf16)
    # w_ref : (kh, kw, Cin, Cout)      b_ref: (1, Cout)  (f32)
    # o_ref : (1, tile_ho, Wo, Cout)   acc_ref: (tile_ho*W_pad, Cout) f32
    w_pad = x_ref.shape[2]
    cin = x_ref.shape[3]
    cout = o_ref.shape[3]
    m_out = tile_ho * w_pad                     # rows of the output tile
    m_in = (tile_ho + kh - 1) * w_pad           # rows used by the tap slices
    tile_ext = tile_ho + kh                     # +1 padded row -> shifts stay
                                                # in bounds for every tile

    r0 = pl.program_id(1) * tile_ho
    xt = x_ref[0, pl.ds(r0, tile_ext)]          # (tile_ext, W_pad, Cin)
    xt = xt.reshape(tile_ext * w_pad, cin)      # free: W_pad % 16 == 0
    # Column (dx) shifts are done on an f32 copy: unaligned sublane shifts of
    # packed bf16 are layout-hostile; the cast is cheap VPU work.
    xt32 = xt.astype(jnp.float32)

    first = True
    for dx in range(kw):
        if dx == 0:
            xs = xt[:m_in]                      # aligned bf16 slice
        else:
            xs = xt32[dx:dx + m_in].astype(xt.dtype)
        for dy in range(kh):
            xm = xs[dy * w_pad:dy * w_pad + m_out]   # 16-aligned sublane slice
            contrib = jnp.dot(xm, w_ref[dy, dx],
                              preferred_element_type=jnp.float32)
            if first:
                acc_ref[...] = contrib
                first = False
            else:
                acc_ref[...] += contrib

    acc = acc_ref[...] + b_ref[...]
    if relu:
        acc = jnp.maximum(acc, 0.0)
    acc = acc.reshape(tile_ho, w_pad, cout)
    o_ref[0] = acc[:, :wo, :].astype(o_ref.dtype)   # crop the W padding


def conv2d_pallas(x, w, b, *, relu=False):
    """Valid 2D conv.  x: (N,H,W,Cin), w: (kh,kw,Cin,Cout), b: (Cout,)."""
    n, h, w_in, cin = x.shape
    kh, kw, _, cout = w.shape
    ho, wo = h - kh + 1, w_in - kw + 1

    # Lane-dense output for tiny channel counts (e.g. the 2-class final conv).
    cout_p = cout if cout >= 64 else 128
    if cout_p != cout:
        w = jnp.pad(w, ((0, 0), (0, 0), (0, 0), (0, cout_p - cout)))
        b = jnp.pad(b, (0, cout_p - cout))

    # Width -> multiple of 16 (bf16 sublane tile, keeps reshapes/slices free);
    # height -> whole number of row tiles (~16 output rows each) + 1 pad row.
    w_pad = _round_up(w_in, 16)
    n_tiles = -(-ho // 16)
    tile_ho = -(-ho // n_tiles)
    ho_pad = n_tiles * tile_ho
    h_pad = ho_pad + kh                       # kh-1 halo rows + 1 shift row

    xp = jnp.pad(x.astype(jnp.bfloat16),
                 ((0, 0), (0, h_pad - h), (0, w_pad - w_in), (0, 0)))
    wb = w.astype(jnp.bfloat16)
    b2 = b.reshape(1, cout_p).astype(jnp.float32)

    kern = functools.partial(_conv2d_kernel, kh=kh, kw=kw,
                             tile_ho=tile_ho, wo=wo, relu=relu)
    out = pl.pallas_call(
        kern,
        out_shape=jax.ShapeDtypeStruct((n, ho_pad, wo, cout_p), jnp.bfloat16),
        grid=(n, n_tiles),
        in_specs=[
            # Full (padded) image per batch element; same block across the row
            # tile axis, so it is DMA'd once and stays resident.
            pl.BlockSpec((1, h_pad, w_pad, cin), lambda i, t: (i, 0, 0, 0)),
            pl.BlockSpec((kh, kw, cin, cout_p), lambda i, t: (0, 0, 0, 0)),
            pl.BlockSpec((1, cout_p), lambda i, t: (0, 0)),
        ],
        out_specs=pl.BlockSpec((1, tile_ho, wo, cout_p),
                               lambda i, t: (i, t, 0, 0)),
        scratch_shapes=[pltpu.VMEM((tile_ho * w_pad, cout_p), jnp.float32)],
        compiler_params=pltpu.CompilerParams(
            dimension_semantics=("parallel", "parallel"),
            vmem_limit_bytes=32 * 1024 * 1024,
        ),
    )(xp, wb, b2)

    if ho_pad != ho or cout_p != cout:
        out = out[:, :ho, :, :cout]
    return out


# ----------------------------------------------------------------------------
# ConvTranspose2d(k=3, stride=2, padding=1, output_padding=1) via phase
# (sub-pixel) decomposition: output pixel (2m+a, 2n+b) only depends on
# x[m:m+2, n:n+2], so the whole op is one 2x2 *valid* conv on x padded by one
# zero row/col, with 4*Cout output channels (one group per phase), followed by
# a cheap pixel shuffle.  No zero-dilated intermediate, ~2.25x fewer FLOPs.
# ----------------------------------------------------------------------------
def conv_transpose2x_pallas(x, w_t, b):
    """x: (N,H,W,Cin), w_t: (Cin,Cout,3,3) (PyTorch layout). Out (N,2H,2W,Cout)."""
    n, h, w_in, cin = x.shape
    cout = w_t.shape[1]
    wt = w_t.astype(jnp.float32)
    z = jnp.zeros((cin, cout), jnp.float32)

    def tap(dy, dx):  # (Cin, 4*Cout) weight for tap (dy, dx), phases ee,eo,oe,oo
        ee = wt[:, :, 1, 1] if (dy, dx) == (0, 0) else z
        eo = {(0, 0): wt[:, :, 1, 2], (0, 1): wt[:, :, 1, 0]}.get((dy, dx), z)
        oe = {(0, 0): wt[:, :, 2, 1], (1, 0): wt[:, :, 0, 1]}.get((dy, dx), z)
        oo = {(0, 0): wt[:, :, 2, 2], (0, 1): wt[:, :, 2, 0],
              (1, 0): wt[:, :, 0, 2], (1, 1): wt[:, :, 0, 0]}.get((dy, dx), z)
        return jnp.concatenate([ee, eo, oe, oo], axis=-1)

    w_f = jnp.stack([jnp.stack([tap(0, 0), tap(0, 1)], axis=0),
                     jnp.stack([tap(1, 0), tap(1, 1)], axis=0)], axis=0)
    b_f = jnp.tile(b, 4)
    xp = jnp.pad(x, ((0, 0), (0, 1), (0, 1), (0, 0)))   # absent taps -> 0
    y = conv2d_pallas(xp, w_f, b_f, relu=False)         # (N, H, W, 4*Cout)
    y = y.reshape(n, h, w_in, 2, 2, cout)
    y = jnp.transpose(y, (0, 1, 3, 2, 4, 5))            # (N, H, 2, W, 2, C)
    return y.reshape(n, 2 * h, 2 * w_in, cout)


# ----------------------------------------------------------------------------
# Plain-JAX glue: BN (training-mode batch stats), maxpool, crop/concat.
# BN directly followed by an *unpadded* conv is folded into that conv.
# ----------------------------------------------------------------------------
def _bn_scale_shift(x, gamma, beta, eps=1e-5):
    xf = x.astype(jnp.float32)
    mean = xf.mean(axis=(0, 1, 2))
    var = jnp.square(xf - mean).mean(axis=(0, 1, 2))    # biased, like PyTorch
    s = gamma * jax.lax.rsqrt(var + eps)
    t = beta - mean * s
    return s, t


def batchnorm2d_train(x, gamma, beta, eps=1e-5):
    s, t = _bn_scale_shift(x, gamma, beta, eps)
    return (x.astype(jnp.float32) * s + t).astype(x.dtype)


def conv_bn_folded(x, bn, conv, *, relu):
    """conv(BN(x)) with the per-channel BN affine folded exactly into the
    (unpadded) conv's weights/bias -> skips one full HBM round trip."""
    s, t = _bn_scale_shift(x, bn["gamma"], bn["beta"])
    w = conv["w"] * s[None, None, :, None]
    b = conv["b"] + jnp.einsum("hwio,i->o", conv["w"], t)
    return conv2d_pallas(x, w, b, relu=relu)


def maxpool2(x):
    n, h, w, c = x.shape
    h2, w2 = h // 2, w // 2
    x = x[:, :h2 * 2, :w2 * 2, :].reshape(n, h2, 2, w2, 2, c)
    return x.max(axis=(2, 4))


def crop_and_concat(upsampled, bypass, crop=False):
    if crop:
        c = (bypass.shape[1] - upsampled.shape[1]) // 2
        bypass = bypass[:, c:bypass.shape[1] - c, c:bypass.shape[2] - c, :]
    return jnp.concatenate([upsampled, bypass], axis=-1)


# ----------------------------------------------------------------------------
# Parameter initialization (deterministic, synthetic, PyTorch-style bounds)
# ----------------------------------------------------------------------------
class _KeyGen:
    def __init__(self, key):
        self.key = key

    def __call__(self):
        self.key, k = jax.random.split(self.key)
        return k


def _init_conv(kg, cin, cout, k=3):
    bound = (1.0 / (cin * k * k)) ** 0.5
    w = jax.random.uniform(kg(), (k, k, cin, cout), jnp.float32, -bound, bound)
    b = jax.random.uniform(kg(), (cout,), jnp.float32, -bound, bound)
    return {"w": w, "b": b}


def _init_convT(kg, cin, cout, k=3):
    bound = (1.0 / (cout * k * k)) ** 0.5
    w = jax.random.uniform(kg(), (cin, cout, k, k), jnp.float32, -bound, bound)
    b = jax.random.uniform(kg(), (cout,), jnp.float32, -bound, bound)
    return {"w": w, "b": b}


def _init_bn(c):
    return {"gamma": jnp.ones((c,), jnp.float32),
            "beta": jnp.zeros((c,), jnp.float32)}


def unet_init(key, in_channel, out_channel):
    kg = _KeyGen(key)

    def contracting(cin, cout):
        return {"conv1": _init_conv(kg, cin, cout), "bn1": _init_bn(cout),
                "conv2": _init_conv(kg, cout, cout), "bn2": _init_bn(cout)}

    def expansive(cin, cmid, cout):
        return {"conv1": _init_conv(kg, cin, cmid), "bn1": _init_bn(cmid),
                "conv2": _init_conv(kg, cmid, cmid), "bn2": _init_bn(cmid),
                "convT": _init_convT(kg, cmid, cout)}

    def final(cin, cmid, cout):
        return {"conv1": _init_conv(kg, cin, cmid), "bn1": _init_bn(cmid),
                "conv2": _init_conv(kg, cmid, cmid), "bn2": _init_bn(cmid),
                "conv3": _init_conv(kg, cmid, cout), "bn3": _init_bn(cout)}

    return {
        "enc1": contracting(in_channel, 64),
        "enc2": contracting(64, 128),
        "enc3": contracting(128, 256),
        "bottleneck": expansive(256, 512, 256),
        "dec3": expansive(512, 256, 128),
        "dec2": expansive(256, 128, 64),
        "final": final(128, 64, out_channel),
    }


# ----------------------------------------------------------------------------
# Block application  (reference order: Conv -> ReLU -> BN, twice per block)
# ----------------------------------------------------------------------------
def contracting_apply(p, x):
    a = conv2d_pallas(x, p["conv1"]["w"], p["conv1"]["b"], relu=True)
    a = conv_bn_folded(a, p["bn1"], p["conv2"], relu=True)   # BN1 folded
    return batchnorm2d_train(a, p["bn2"]["gamma"], p["bn2"]["beta"])


def expansive_apply(p, x):
    a = conv2d_pallas(x, p["conv1"]["w"], p["conv1"]["b"], relu=True)
    a = conv_bn_folded(a, p["bn1"], p["conv2"], relu=True)   # BN1 folded
    a = batchnorm2d_train(a, p["bn2"]["gamma"], p["bn2"]["beta"])
    return conv_transpose2x_pallas(a, p["convT"]["w"], p["convT"]["b"])


def final_apply(p, x):
    a = conv2d_pallas(x, p["conv1"]["w"], p["conv1"]["b"], relu=True)
    a = conv_bn_folded(a, p["bn1"], p["conv2"], relu=True)   # BN1 folded
    a = batchnorm2d_train(a, p["bn2"]["gamma"], p["bn2"]["beta"])
    # conv3 has padding=1 ("same"): BN cannot be folded across the zero border.
    a = jnp.pad(a, ((0, 0), (1, 1), (1, 1), (0, 0)))
    a = conv2d_pallas(a, p["conv3"]["w"], p["conv3"]["b"], relu=True)
    a = batchnorm2d_train(a, p["bn3"]["gamma"], p["bn3"]["beta"])
    return jnp.maximum(a, 0)     # reference final block ends ...BN -> ReLU


def unet_forward(params, x_nchw):
    x = jnp.transpose(x_nchw, (0, 2, 3, 1))             # NCHW -> NHWC
    e1 = contracting_apply(params["enc1"], x)
    p1 = maxpool2(e1)
    e2 = contracting_apply(params["enc2"], p1)
    p2 = maxpool2(e2)
    e3 = contracting_apply(params["enc3"], p2)
    p3 = maxpool2(e3)
    bn = expansive_apply(params["bottleneck"], p3)
    d3 = crop_and_concat(bn, e3, crop=True)
    c2 = expansive_apply(params["dec3"], d3)
    d2 = crop_and_concat(c2, e2, crop=True)
    c1 = expansive_apply(params["dec2"], d2)
    d1 = crop_and_concat(c1, e1, crop=True)
    out = final_apply(params["final"], d1)
    return jnp.transpose(out, (0, 3, 1, 2)).astype(jnp.float32)   # back to NCHW


# ----------------------------------------------------------------------------
# Self-tests: Pallas conv / convT vs XLA reference (bf16-rounded inputs)
# ----------------------------------------------------------------------------
def _self_test_conv():
    k1, k2, k3 = jax.random.split(jax.random.PRNGKey(7), 3)
    x = jax.random.normal(k1, (2, 13, 21, 32), jnp.float32)
    w = jax.random.normal(k2, (3, 3, 32, 64), jnp.float32) * 0.06
    b = jax.random.normal(k3, (64,), jnp.float32)
    xr = x.astype(jnp.bfloat16).astype(jnp.float32)
    wr = w.astype(jnp.bfloat16).astype(jnp.float32)
    ref = jax.lax.conv_general_dilated(
        xr, wr, (1, 1), "VALID",
        dimension_numbers=("NHWC", "HWIO", "NHWC"),
        precision=jax.lax.Precision.HIGHEST) + b
    ref = jnp.maximum(ref, 0.0)
    got = conv2d_pallas(x, w, b, relu=True).astype(jnp.float32)
    assert bool(jnp.allclose(got, ref, atol=2e-2, rtol=2e-2)), "conv mismatch"


def _self_test_convT():
    k1, k2, k3 = jax.random.split(jax.random.PRNGKey(11), 3)
    x = jax.random.normal(k1, (1, 5, 7, 16), jnp.float32)
    w_t = jax.random.normal(k2, (16, 8, 3, 3), jnp.float32) * 0.1
    b = jax.random.normal(k3, (8,), jnp.float32)
    xr = x.astype(jnp.bfloat16).astype(jnp.float32)
    wr = w_t.astype(jnp.bfloat16).astype(jnp.float32)
    wk = jnp.transpose(wr[:, :, ::-1, ::-1], (2, 3, 0, 1))
    ref = jax.lax.conv_general_dilated(
        xr, wk, (1, 1), ((1, 2), (1, 2)), lhs_dilation=(2, 2),
        dimension_numbers=("NHWC", "HWIO", "NHWC"),
        precision=jax.lax.Precision.HIGHEST) + b
    got = conv_transpose2x_pallas(x, w_t, b).astype(jnp.float32)
    assert bool(jnp.allclose(got, ref, atol=2e-2, rtol=2e-2)), "convT mismatch"


if __name__ == "__main__":
    _self_test_conv()
    _self_test_convT()

    key = jax.random.PRNGKey(0)
    pkey, xkey = jax.random.split(key)

    in_channel, out_channel = 1, 2
    batch, spatial = 2, 92       # 92 = smallest valid size for this UNet

    params = unet_init(pkey, in_channel, out_channel)
    x = jax.random.normal(xkey, (batch, in_channel, spatial, spatial),
                          jnp.float32)

    fwd = jax.jit(unet_forward)
    y = jax.block_until_ready(fwd(params, x))

    assert y.shape == (batch, out_channel, 4, 4), y.shape
    assert bool(jnp.all(jnp.isfinite(y)))
    # TODO(synk): BN stats could additionally be emitted as per-tile partial
    # sums from the conv kernel to remove the remaining reduction read.
    print("KERNEL_OK")
</pallas_src>

<mosaic_0001>
module attributes {stable_mosaic.version = 11 : i64} {
  func.func @_conv2d_kernel(%arg0: i32, %arg1: i32, %arg2: memref<1x14x32x32xbf16, #tpu.memory_space<vmem>>, %arg3: memref<3x3x32x64xbf16, #tpu.memory_space<vmem>>, %arg4: memref<1x64xf32, #tpu.memory_space<vmem>>, %arg5: memref<1x11x19x64xbf16, #tpu.memory_space<vmem>>, %arg6: memref<352x64xf32, #tpu.memory_space<vmem>>) attributes {dimension_semantics = [#tpu.dimension_semantics<parallel>, #tpu.dimension_semantics<parallel>], iteration_bounds = array<i64: 2, 1>, scalar_prefetch = 0 : i64, scratch_operands = 1 : i64, tpu.core_type = #tpu.core_type<tc>, window_params = [{transform_indices = @transform_0, window_bounds = array<i64: 1, 14, 32, 32>}, {pipeline_mode = #tpu.pipeline_mode<synchronous>, transform_indices = @transform_1, window_bounds = array<i64: 3, 3, 32, 64>}, {pipeline_mode = #tpu.pipeline_mode<synchronous>, transform_indices = @transform_2, window_bounds = array<i64: 1, 64>}, {transform_indices = @transform_3, window_bounds = array<i64: 1, 11, 19, 64>}]} {
    %c11_i32 = arith.constant 11 : i32
    %0 = arith.muli %arg1, %c11_i32 : i32
    %c0 = arith.constant 0 : index
    %1 = arith.index_cast %0 : i32 to index
    %c0_0 = arith.constant 0 : index
    %c0_1 = arith.constant 0 : index
    %2 = vector.load %arg2[%c0, %1, %c0_0, %c0_1] : memref<1x14x32x32xbf16, #tpu.memory_space<vmem>>, vector<1x14x32x32xbf16>
    %3 = vector.shape_cast %2 : vector<1x14x32x32xbf16> to vector<14x32x32xbf16>
    %4 = vector.shape_cast %3 : vector<14x32x32xbf16> to vector<448x32xbf16>
    %5 = arith.extf %4 : vector<448x32xbf16> to vector<448x32xf32>
    %6 = vector.extract_strided_slice %4 {offsets = [0, 0], sizes = [416, 32], strides = [1, 1]} : vector<448x32xbf16> to vector<416x32xbf16>
    %7 = vector.extract_strided_slice %6 {offsets = [0, 0], sizes = [352, 32], strides = [1, 1]} : vector<416x32xbf16> to vector<352x32xbf16>
    %c0_2 = arith.constant 0 : index
    %c0_3 = arith.constant 0 : index
    %c0_4 = arith.constant 0 : index
    %c0_5 = arith.constant 0 : index
    %8 = vector.load %arg3[%c0_2, %c0_3, %c0_4, %c0_5] : memref<3x3x32x64xbf16, #tpu.memory_space<vmem>>, vector<1x1x32x64xbf16>
    %9 = vector.shape_cast %8 : vector<1x1x32x64xbf16> to vector<32x64xbf16>
    %cst = arith.constant dense<0.000000e+00> : vector<352x64xf32>
    %10 = tpu.matmul %7, %9, %cst {dimension_numbers = #tpu.dot_dimension_numbers<[1], [0], [0], [1], [0, 0, 1, 1], [], []>} : vector<352x32xbf16>, vector<32x64xbf16>, vector<352x64xf32> -> vector<352x64xf32>
    %c0_6 = arith.constant 0 : index
    %c0_7 = arith.constant 0 : index
    %11 = vector.load %arg6[%c0_6, %c0_7] : memref<352x64xf32, #tpu.memory_space<vmem>>, vector<352x64xf32>
    tpu.vector_store %arg6[%c0_6, %c0_7], %10 {strides = array<i32>} : memref<352x64xf32, #tpu.memory_space<vmem>>, vector<352x64xf32>,
    %12 = vector.extract_strided_slice %6 {offsets = [32, 0], sizes = [352, 32], strides = [1, 1]} : vector<416x32xbf16> to vector<352x32xbf16>
    %c1 = arith.constant 1 : index
    %c0_8 = arith.constant 0 : index
    %c0_9 = arith.constant 0 : index
    %c0_10 = arith.constant 0 : index
    %13 = vector.load %arg3[%c1, %c0_8, %c0_9, %c0_10] : memref<3x3x32x64xbf16, #tpu.memory_space<vmem>>, vector<1x1x32x64xbf16>
    %14 = vector.shape_cast %13 : vector<1x1x32x64xbf16> to vector<32x64xbf16>
    %cst_11 = arith.constant dense<0.000000e+00> : vector<352x64xf32>
    %15 = tpu.matmul %12, %14, %cst_11 {dimension_numbers = #tpu.dot_dimension_numbers<[1], [0], [0], [1], [0, 0, 1, 1], [], []>} : vector<352x32xbf16>, vector<32x64xbf16>, vector<352x64xf32> -> vector<352x64xf32>
    %c0_12 = arith.constant 0 : index
    %c0_13 = arith.constant 0 : index
    %16 = vector.load %arg6[%c0_12, %c0_13] : memref<352x64xf32, #tpu.memory_space<vmem>>, vector<352x64xf32>
    %17 = arith.addf %16, %15 : vector<352x64xf32>
    %c0_14 = arith.constant 0 : index
    %c0_15 = arith.constant 0 : index
    %18 = vector.load %arg6[%c0_14, %c0_15] : memref<352x64xf32, #tpu.memory_space<vmem>>, vector<352x64xf32>
    tpu.vector_store %arg6[%c0_14, %c0_15], %17 {strides = array<i32>} : memref<352x64xf32, #tpu.memory_space<vmem>>, vector<352x64xf32>,
    %19 = vector.extract_strided_slice %6 {offsets = [64, 0], sizes = [352, 32], strides = [1, 1]} : vector<416x32xbf16> to vector<352x32xbf16>
    %c2 = arith.constant 2 : index
    %c0_16 = arith.constant 0 : index
    %c0_17 = arith.constant 0 : index
    %c0_18 = arith.constant 0 : index
    %20 = vector.load %arg3[%c2, %c0_16, %c0_17, %c0_18] : memref<3x3x32x64xbf16, #tpu.memory_space<vmem>>, vector<1x1x32x64xbf16>
    %21 = vector.shape_cast %20 : vector<1x1x32x64xbf16> to vector<32x64xbf16>
    %cst_19 = arith.constant dense<0.000000e+00> : vector<352x64xf32>
    %22 = tpu.matmul %19, %21, %cst_19 {dimension_numbers = #tpu.dot_dimension_numbers<[1], [0], [0], [1], [0, 0, 1, 1], [], []>} : vector<352x32xbf16>, vector<32x64xbf16>, vector<352x64xf32> -> vector<352x64xf32>
    %c0_20 = arith.constant 0 : index
    %c0_21 = arith.constant 0 : index
    %23 = vector.load %arg6[%c0_20, %c0_21] : memref<352x64xf32, #tpu.memory_space<vmem>>, vector<352x64xf32>
    %24 = arith.addf %23, %22 : vector<352x64xf32>
    %c0_22 = arith.constant 0 : index
    %c0_23 = arith.constant 0 : index
    %25 = vector.load %arg6[%c0_22, %c0_23] : memref<352x64xf32, #tpu.memory_space<vmem>>, vector<352x64xf32>
    tpu.vector_store %arg6[%c0_22, %c0_23], %24 {strides = array<i32>} : memref<352x64xf32, #tpu.memory_space<vmem>>, vector<352x64xf32>,
    %26 = vector.extract_strided_slice %5 {offsets = [1, 0], sizes = [416, 32], strides = [1, 1]} : vector<448x32xf32> to vector<416x32xf32>
    %27 = arith.truncf %26 : vector<416x32xf32> to vector<416x32xbf16>
    %28 = vector.extract_strided_slice %27 {offsets = [0, 0], sizes = [352, 32], strides = [1, 1]} : vector<416x32xbf16> to vector<352x32xbf16>
    %c0_24 = arith.constant 0 : index
    %c1_25 = arith.constant 1 : index
    %c0_26 = arith.constant 0 : index
    %c0_27 = arith.constant 0 : index
    %29 = vector.load %arg3[%c0_24, %c1_25, %c0_26, %c0_27] : memref<3x3x32x64xbf16, #tpu.memory_space<vmem>>, vector<1x1x32x64xbf16>
    %30 = vector.shape_cast %29 : vector<1x1x32x64xbf16> to vector<32x64xbf16>
    %cst_28 = arith.constant dense<0.000000e+00> : vector<352x64xf32>
    %31 = tpu.matmul %28, %30, %cst_28 {dimension_numbers = #tpu.dot_dimension_numbers<[1], [0], [0], [1], [0, 0, 1, 1], [], []>} : vector<352x32xbf16>, vector<32x64xbf16>, vector<352x64xf32> -> vector<352x64xf32>
    %c0_29 = arith.constant 0 : index
    %c0_30 = arith.constant 0 : index
    %32 = vector.load %arg6[%c0_29, %c0_30] : memref<352x64xf32, #tpu.memory_space<vmem>>, vector<352x64xf32>
    %33 = arith.addf %32, %31 : vector<352x64xf32>
    %c0_31 = arith.constant 0 : index
    %c0_32 = arith.constant 0 : index
    %34 = vector.load %arg6[%c0_31, %c0_32] : memref<352x64xf32, #tpu.memory_space<vmem>>, vector<352x64xf32>
    tpu.vector_store %arg6[%c0_31, %c0_32], %33 {strides = array<i32>} : memref<352x64xf32, #tpu.memory_space<vmem>>, vector<352x64xf32>,
    %35 = vector.extract_strided_slice %27 {offsets = [32, 0], sizes = [352, 32], strides = [1, 1]} : vector<416x32xbf16> to vector<352x32xbf16>
    %c1_33 = arith.constant 1 : index
    %c1_34 = arith.constant 1 : index
    %c0_35 = arith.constant 0 : index
    %c0_36 = arith.constant 0 : index
    %36 = vector.load %arg3[%c1_33, %c1_34, %c0_35, %c0_36] : memref<3x3x32x64xbf16, #tpu.memory_space<vmem>>, vector<1x1x32x64xbf16>
    %37 = vector.shape_cast %36 : vector<1x1x32x64xbf16> to vector<32x64xbf16>
    %cst_37 = arith.constant dense<0.000000e+00> : vector<352x64xf32>
    %38 = tpu.matmul %35, %37, %cst_37 {dimension_numbers = #tpu.dot_dimension_numbers<[1], [0], [0], [1], [0, 0, 1, 1], [], []>} : vector<352x32xbf16>, vector<32x64xbf16>, vector<352x64xf32> -> vector<352x64xf32>
    %c0_38 = arith.constant 0 : index
    %c0_39 = arith.constant 0 : index
    %39 = vector.load %arg6[%c0_38, %c0_39] : memref<352x64xf32, #tpu.memory_space<vmem>>, vector<352x64xf32>
    %40 = arith.addf %39, %38 : vector<352x64xf32>
    %c0_40 = arith.constant 0 : index
    %c0_41 = arith.constant 0 : index
    %41 = vector.load %arg6[%c0_40, %c0_41] : memref<352x64xf32, #tpu.memory_space<vmem>>, vector<352x64xf32>
    tpu.vector_store %arg6[%c0_40, %c0_41], %40 {strides = array<i32>} : memref<352x64xf32, #tpu.memory_space<vmem>>, vector<352x64xf32>,
    %42 = vector.extract_strided_slice %27 {offsets = [64, 0], sizes = [352, 32], strides = [1, 1]} : vector<416x32xbf16> to vector<352x32xbf16>
    %c2_42 = arith.constant 2 : index
    %c1_43 = arith.constant 1 : index
    %c0_44 = arith.constant 0 : index
    %c0_45 = arith.constant 0 : index
    %43 = vector.load %arg3[%c2_42, %c1_43, %c0_44, %c0_45] : memref<3x3x32x64xbf16, #tpu.memory_space<vmem>>, vector<1x1x32x64xbf16>
    %44 = vector.shape_cast %43 : vector<1x1x32x64xbf16> to vector<32x64xbf16>
    %cst_46 = arith.constant dense<0.000000e+00> : vector<352x64xf32>
    %45 = tpu.matmul %42, %44, %cst_46 {dimension_numbers = #tpu.dot_dimension_numbers<[1], [0], [0], [1], [0, 0, 1, 1], [], []>} : vector<352x32xbf16>, vector<32x64xbf16>, vector<352x64xf32> -> vector<352x64xf32>
    %c0_47 = arith.constant 0 : index
    %c0_48 = arith.constant 0 : index
    %46 = vector.load %arg6[%c0_47, %c0_48] : memref<352x64xf32, #tpu.memory_space<vmem>>, vector<352x64xf32>
    %47 = arith.addf %46, %45 : vector<352x64xf32>
    %c0_49 = arith.constant 0 : index
    %c0_50 = arith.constant 0 : index
    %48 = vector.load %arg6[%c0_49, %c0_50] : memref<352x64xf32, #tpu.memory_space<vmem>>, vector<352x64xf32>
    tpu.vector_store %arg6[%c0_49, %c0_50], %47 {strides = array<i32>} : memref<352x64xf32, #tpu.memory_space<vmem>>, vector<352x64xf32>,
    %49 = vector.extract_strided_slice %5 {offsets = [2, 0], sizes = [416, 32], strides = [1, 1]} : vector<448x32xf32> to vector<416x32xf32>
    %50 = arith.truncf %49 : vector<416x32xf32> to vector<416x32xbf16>
    %51 = vector.extract_strided_slice %50 {offsets = [0, 0], sizes = [352, 32], strides = [1, 1]} : vector<416x32xbf16> to vector<352x32xbf16>
    %c0_51 = arith.constant 0 : index
    %c2_52 = arith.constant 2 : index
    %c0_53 = arith.constant 0 : index
    %c0_54 = arith.constant 0 : index
    %52 = vector.load %arg3[%c0_51, %c2_52, %c0_53, %c0_54] : memref<3x3x32x64xbf16, #tpu.memory_space<vmem>>, vector<1x1x32x64xbf16>
    %53 = vector.shape_cast %52 : vector<1x1x32x64xbf16> to vector<32x64xbf16>
    %cst_55 = arith.constant dense<0.000000e+00> : vector<352x64xf32>
    %54 = tpu.matmul %51, %53, %cst_55 {dimension_numbers = #tpu.dot_dimension_numbers<[1], [0], [0], [1], [0, 0, 1, 1], [], []>} : vector<352x32xbf16>, vector<32x64xbf16>, vector<352x64xf32> -> vector<352x64xf32>
    %c0_56 = arith.constant 0 : index
    %c0_57 = arith.constant 0 : index
    %55 = vector.load %arg6[%c0_56, %c0_57] : memref<352x64xf32, #tpu.memory_space<vmem>>, vector<352x64xf32>
    %56 = arith.addf %55, %54 : vector<352x64xf32>
    %c0_58 = arith.constant 0 : index
    %c0_59 = arith.constant 0 : index
    %57 = vector.load %arg6[%c0_58, %c0_59] : memref<352x64xf32, #tpu.memory_space<vmem>>, vector<352x64xf32>
    tpu.vector_store %arg6[%c0_58, %c0_59], %56 {strides = array<i32>} : memref<352x64xf32, #tpu.memory_space<vmem>>, vector<352x64xf32>,
    %58 = vector.extract_strided_slice %50 {offsets = [32, 0], sizes = [352, 32], strides = [1, 1]} : vector<416x32xbf16> to vector<352x32xbf16>
    %c1_60 = arith.constant 1 : index
    %c2_61 = arith.constant 2 : index
    %c0_62 = arith.constant 0 : index
    %c0_63 = arith.constant 0 : index
    %59 = vector.load %arg3[%c1_60, %c2_61, %c0_62, %c0_63] : memref<3x3x32x64xbf16, #tpu.memory_space<vmem>>, vector<1x1x32x64xbf16>
    %60 = vector.shape_cast %59 : vector<1x1x32x64xbf16> to vector<32x64xbf16>
    %cst_64 = arith.constant dense<0.000000e+00> : vector<352x64xf32>
    %61 = tpu.matmul %58, %60, %cst_64 {dimension_numbers = #tpu.dot_dimension_numbers<[1], [0], [0], [1], [0, 0, 1, 1], [], []>} : vector<352x32xbf16>, vector<32x64xbf16>, vector<352x64xf32> -> vector<352x64xf32>
    %c0_65 = arith.constant 0 : index
    %c0_66 = arith.constant 0 : index
    %62 = vector.load %arg6[%c0_65, %c0_66] : memref<352x64xf32, #tpu.memory_space<vmem>>, vector<352x64xf32>
    %63 = arith.addf %62, %61 : vector<352x64xf32>
    %c0_67 = arith.constant 0 : index
    %c0_68 = arith.constant 0 : index
    %64 = vector.load %arg6[%c0_67, %c0_68] : memref<352x64xf32, #tpu.memory_space<vmem>>, vector<352x64xf32>
    tpu.vector_store %arg6[%c0_67, %c0_68], %63 {strides = array<i32>} : memref<352x64xf32, #tpu.memory_space<vmem>>, vector<352x64xf32>,
    %65 = vector.extract_strided_slice %50 {offsets = [64, 0], sizes = [352, 32], strides = [1, 1]} : vector<416x32xbf16> to vector<352x32xbf16>
    %c2_69 = arith.constant 2 : index
    %c2_70 = arith.constant 2 : index
    %c0_71 = arith.constant 0 : index
    %c0_72 = arith.constant 0 : index
    %66 = vector.load %arg3[%c2_69, %c2_70, %c0_71, %c0_72] : memref<3x3x32x64xbf16, #tpu.memory_space<vmem>>, vector<1x1x32x64xbf16>
    %67 = vector.shape_cast %66 : vector<1x1x32x64xbf16> to vector<32x64xbf16>
    %cst_73 = arith.constant dense<0.000000e+00> : vector<352x64xf32>
    %68 = tpu.matmul %65, %67, %cst_73 {dimension_numbers = #tpu.dot_dimension_numbers<[1], [0], [0], [1], [0, 0, 1, 1], [], []>} : vector<352x32xbf16>, vector<32x64xbf16>, vector<352x64xf32> -> vector<352x64xf32>
    %c0_74 = arith.constant 0 : index
    %c0_75 = arith.constant 0 : index
    %69 = vector.load %arg6[%c0_74, %c0_75] : memref<352x64xf32, #tpu.memory_space<vmem>>, vector<352x64xf32>
    %70 = arith.addf %69, %68 : vector<352x64xf32>
    %c0_76 = arith.constant 0 : index
    %c0_77 = arith.constant 0 : index
    %71 = vector.load %arg6[%c0_76, %c0_77] : memref<352x64xf32, #tpu.memory_space<vmem>>, vector<352x64xf32>
    tpu.vector_store %arg6[%c0_76, %c0_77], %70 {strides = array<i32>} : memref<352x64xf32, #tpu.memory_space<vmem>>, vector<352x64xf32>,
    %c0_78 = arith.constant 0 : index
    %c0_79 = arith.constant 0 : index
    %72 = vector.load %arg6[%c0_78, %c0_79] : memref<352x64xf32, #tpu.memory_space<vmem>>, vector<352x64xf32>
    %c0_80 = arith.constant 0 : index
    %c0_81 = arith.constant 0 : index
    %73 = vector.load %arg4[%c0_80, %c0_81] : memref<1x64xf32, #tpu.memory_space<vmem>>, vector<1x64xf32>
    %74 = vector.broadcast %73 : vector<1x64xf32> to vector<352x64xf32>
    %75 = arith.addf %72, %74 : vector<352x64xf32>
    %cst_82 = arith.constant 0.000000e+00 : f32
    %76 = vector.broadcast %cst_82 : f32 to vector<352x64xf32>
    %77 = arith.maximumf %75, %76 : vector<352x64xf32>
    %78 = vector.shape_cast %77 : vector<352x64xf32> to vector<11x32x64xf32>
    %79 = vector.extract_strided_slice %78 {offsets = [0, 0, 0], sizes = [11, 19, 64], strides = [1, 1, 1]} : vector<11x32x64xf32> to vector<11x19x64xf32>
    %80 = arith.truncf %79 : vector<11x19x64xf32> to vector<11x19x64xbf16>
    %c0_83 = arith.constant 0 : index
    %c0_84 = arith.constant 0 : index
    %c0_85 = arith.constant 0 : index
    %c0_86 = arith.constant 0 : index
    %81 = vector.load %arg5[%c0_83, %c0_84, %c0_85, %c0_86] : memref<1x11x19x64xbf16, #tpu.memory_space<vmem>>, vector<1x11x19x64xbf16>
    %82 = vector.shape_cast %81 : vector<1x11x19x64xbf16> to vector<11x19x64xbf16>
    %83 = vector.shape_cast %80 : vector<11x19x64xbf16> to vector<1x11x19x64xbf16>
    tpu.vector_store %arg5[%c0_83, %c0_84, %c0_85, %c0_86], %83 {strides = array<i32>} : memref<1x11x19x64xbf16, #tpu.memory_space<vmem>>, vector<1x11x19x64xbf16>,
    return
  }
  func.func @transform_0(%arg0: i32, %arg1: i32) -> (i32, i32, i32, i32) {
    %c0_i32 = arith.constant 0 : i32
    %c0_i32_0 = arith.constant 0 : i32
    %c0_i32_1 = arith.constant 0 : i32
    %c0_i32_2 = arith.constant 0 : i32
    return %arg0, %c0_i32, %c0_i32_0, %c0_i32_1 : i32, i32, i32, i32
  }
  func.func @transform_1(%arg0: i32, %arg1: i32) -> (i32, i32, i32, i32) {
    %c0_i32 = arith.constant 0 : i32
    %c0_i32_0 = arith.constant 0 : i32
    %c0_i32_1 = arith.constant 0 : i32
    %c0_i32_2 = arith.constant 0 : i32
    %c0_i32_3 = arith.constant 0 : i32
    return %c0_i32, %c0_i32_0, %c0_i32_1, %c0_i32_2 : i32, i32, i32, i32
  }
  func.func @transform_2(%arg0: i32, %arg1: i32) -> (i32, i32) {
    %c0_i32 = arith.constant 0 : i32
    %c0_i32_0 = arith.constant 0 : i32
    %c0_i32_1 = arith.constant 0 : i32
    return %c0_i32, %c0_i32_0 : i32, i32
  }
  func.func @transform_3(%arg0: i32, %arg1: i32) -> (i32, i32, i32, i32) {
    %c0_i32 = arith.constant 0 : i32
    %c0_i32_0 = arith.constant 0 : i32
    %c0_i32_1 = arith.constant 0 : i32
    return %arg0, %arg1, %c0_i32, %c0_i32_0 : i32, i32, i32, i32
  }
}

</mosaic_0001>

<llo_original>
// kernel: tpu_custom_call.1
$region0: #{tpu_custom_call.1}
  #allocation0 [shape = 'u32[]', space=smem, size = 0x4, offset = 0x4, fixed_abs, tag = 'smem constant byte address 0x4 - core index']
  #allocation1 [shape = 'u32[144,128]{1,0:T(1,128)}', space=vmem, size = 0x12000, scoped, tag = 'internal scratch']
  #allocation2 [shape = 'f32[352,64]{1,0:T(8,128)}', space=vmem, size = 0x2c000, scoped, tag = 'scratch operand']
  %s0 = inlined_call_operand.hbm [shape: bf16[2,14,32,32], index: 0, kind: input, shape index: {}]
  %s1 = inlined_call_operand.hbm [shape: bf16[3,3,32,64], index: 1, kind: input, shape index: {}]
  %s2 = inlined_call_operand.vmem [shape: f32[1,64], index: 2, kind: input, shape index: {}]
  %s3 = inlined_call_operand.vmem [shape: bf16[2,11,19,64], index: 3, kind: output, shape index: {}]
  %s4 = sld [smem:[#allocation0]]
  $region53: #{tpu_custom_call.1} parent=0
    _
  %s6 = ssub.s32 1, %s4
  %s7 = scalar_select 0, %s6, %s4
  $region1: #{tpu_custom_call.1} parent=0
    #allocation3 [shape = 'u8[229376]{0}', space=vmem, size = 0x38000, scoped, tag = 'input window, operand 0']
    #allocation4 [shape = 's32[2]{0}', space=sflag, size = 0x8, scoped, tag = 'scoped memory for tpu_custom_call.1']
    #allocation5 [shape = 'u8[73728]{0}', space=vmem, size = 0x12000, scoped, tag = 'input window, operand 1, single buffered']
    #allocation6 [shape = 's32[1]{0}', space=sflag, size = 0x4, scoped, tag = 'scoped memory for tpu_custom_call.1']
    %8 = vsyncpa [#allocation4], 0
    %s9 = scalar_lea.sflag [#allocation4], 1
    %10 = vsyncpa %s9, 0
    %11 = vsyncpa [#allocation6], 0
    loop: start=0, step=1, limit=4
    $region2: #{tpu_custom_call.1} parent=1 // loop_pre_header
      _
    $region3: #{tpu_custom_call.1} parent=1 // loop_header
      %s13 = sphi 0, %s17
      %p14 = scmp.ge.s32.totalorder %s13, 4
      %s20 = sphi 0, %s32
      %s21 = sphi 0, %s28
      %s22 = sphi 0, %s20
      %s23 = sphi 0, %s21
      %s24 = sphi 0, %s22
      %s25 = sphi 0, %s23
      %s35 = sphi 0, %s37
      %s38 = sphi 0, %s35
      %s39 = sphi 0, %s38
      %s55 = sphi 0, %s39
      %s59 = sphi 0, %s59
      %s61 = sphi 0, %s59
      %s62 = sphi 0, %s61
      %s76 = sphi 0, %s62
      %s80 = sphi 0, %s80
      %s82 = sphi 0, %s80
      %s83 = sphi 0, %s82
      %s97 = sphi 0, %s83
      %s105 = sphi 0, %s107
      %s108 = sphi 0, %s105
      %s109 = sphi 0, %s108
      %s125 = sphi 0, %s109
    $region4: #{tpu_custom_call.1} parent=1 // loop_header_branch
      %16 = sbr.rel (%p14) target = $region8
    $region5: #{tpu_custom_call.1} parent=1 // loop_body
      %s18 = ssub.s32 %s13, 1
      %s19 = ssub.s32 %s13, 2
      %s26 = sadd.s32 1, %s21
      %p27 = scmp.ge.s32.totalorder %s26, 1
      %s28 = scalar_select %p27, 0, %s26
      %s29 = sadd.s32 1, %s20
      %s30 = scalar_select %p27, %s29, %s20
      %p31 = scmp.ge.s32.totalorder %s30, 2
      %s32 = scalar_select %p31, 0, %s30
      %s33 = ssub.s32 %s20, %s32
      %p34 = scmp.eq.s32.totalorder %s33, 0
      %s36 = sadd.s32 %s35, 1
      %s37 = scalar_select %p34, %s35, %s36
      %p40 = pneg %p34
      %p41 = scmp.eq.s32.totalorder %s13, 1
      %p42 = por %p40, %p41
      %p43 = scmp.ne.s32.totalorder %s35, %s38
      %p44 = scmp.eq.s32.totalorder %s13, 0
      %p45 = por %p43, %p44
      %p46 = scmp.ne.s32.totalorder %s35, %s38
      %p47 = scmp.eq.s32.totalorder %s18, 1
      %p48 = por %p46, %p47
      %p49 = scmp.ne.s32.totalorder %s38, %s39
      %p50 = scmp.eq.s32.totalorder %s18, 0
      %p51 = por %p49, %p50
      %p52 = scmp.ne.s32.totalorder %s38, %s39
      %p53 = scmp.eq.s32.totalorder %s19, 1
      %p54 = por %p52, %p53
      %p56 = scmp.ne.s32.totalorder %s39, %s55
      %p57 = scmp.eq.s32.totalorder %s19, 0
      %p58 = por %p56, %p57
      %s60 = sadd.s32 %s59, 1
      %p63 = scmp.eq.s32.totalorder %s13, 1
      %p64 = scmp.ne.s32.totalorder %s59, %s61
      %p65 = scmp.eq.s32.totalorder %s13, 0
      %p66 = por %p64, %p65
      %p67 = scmp.ne.s32.totalorder %s59, %s61
      %p68 = scmp.eq.s32.totalorder %s18, 1
      %p69 = por %p67, %p68
      %p70 = scmp.ne.s32.totalorder %s61, %s62
      %p71 = scmp.eq.s32.totalorder %s18, 0
      %p72 = por %p70, %p71
      %p73 = scmp.ne.s32.totalorder %s61, %s62
      %p74 = scmp.eq.s32.totalorder %s19, 1
      %p75 = por %p73, %p74
      %p77 = scmp.ne.s32.totalorder %s62, %s76
      %p78 = scmp.eq.s32.totalorder %s19, 0
      %p79 = por %p77, %p78
      %s81 = sadd.s32 %s80, 1
      %p84 = scmp.eq.s32.totalorder %s13, 1
      %p85 = scmp.ne.s32.totalorder %s80, %s82
      %p86 = scmp.eq.s32.totalorder %s13, 0
      %p87 = por %p85, %p86
      %p88 = scmp.ne.s32.totalorder %s80, %s82
      %p89 = scmp.eq.s32.totalorder %s18, 1
      %p90 = por %p88, %p89
      %p91 = scmp.ne.s32.totalorder %s82, %s83
      %p92 = scmp.eq.s32.totalorder %s18, 0
      %p93 = por %p91, %p92
      %p94 = scmp.ne.s32.totalorder %s82, %s83
      %p95 = scmp.eq.s32.totalorder %s19, 1
      %p96 = por %p94, %p95
      %p98 = scmp.ne.s32.totalorder %s83, %s97
      %p99 = scmp.eq.s32.totalorder %s19, 0
      %p100 = por %p98, %p99
      %s101 = ssub.s32 %s20, %s32
      %s102 = ssub.s32 %s21, %s28
      %s103 = sor.u32 %s101, %s102
      %p104 = scmp.eq.s32.totalorder %s103, 0
      %s106 = sadd.s32 %s105, 1
      %s107 = scalar_select %p104, %s105, %s106
      %p110 = pneg %p104
      %p111 = scmp.eq.s32.totalorder %s13, 1
      %p112 = por %p110, %p111
      %p113 = scmp.ne.s32.totalorder %s105, %s108
      %p114 = scmp.eq.s32.totalorder %s13, 0
      %p115 = por %p113, %p114
      %p116 = scmp.ne.s32.totalorder %s105, %s108
      %p117 = scmp.eq.s32.totalorder %s18, 1
      %p118 = por %p116, %p117
      %p119 = scmp.ne.s32.totalorder %s108, %s109
      %p120 = scmp.eq.s32.totalorder %s18, 0
      %p121 = por %p119, %p120
      %p122 = scmp.ne.s32.totalorder %s108, %s109
      %p123 = scmp.eq.s32.totalorder %s19, 1
      %p124 = por %p122, %p123
      %p126 = scmp.ne.s32.totalorder %s109, %s125
      %p127 = scmp.eq.s32.totalorder %s19, 0
      %p128 = por %p126, %p127
      %p129 = scmp.le.s32.totalorder 1, %s13
      %p130 = scmp.lt.s32.totalorder %s13, 3
      %p131 = pnand %p129, %p130
      %p132 = pneg %p131
      // Predicated region
      $region9: #{tpu_custom_call.1} parent=5 // pred_check
        _
      $region10: #{tpu_custom_call.1} parent=5 // pred_check_branch
        %134 = sbr.rel (%p131) target = $region12
      $region11: #{tpu_custom_call.1} parent=5 // pred_region
        %s135 = ssub.s32 %s13, 1
        // Predicated region
        $region13: #{tpu_custom_call.1} parent=11 // pred_check
          %p136 = pneg %p72
        $region14: #{tpu_custom_call.1} parent=11 // pred_check_branch
          %138 = sbr.rel (%p136) target = $region16
        $region15: #{tpu_custom_call.1} parent=11 // pred_region
          %s140 = ssub.s32 2304, 2304
          %141 = vsyncadd [#allocation6], %s140
          %s142 = sshll.u32 [#allocation5], 4
          %s143 = int_to_ptr.vmem [resolvable:$true] %s142
          %148 = dma.hbm_to_vmem [thread:$0]  %s1, 2304, %s143, [#allocation6], 64, 64, 4
        $region16: #{tpu_custom_call.1} parent=11 // pred_fallthru
          _
        // Predicated region
        $region17: #{tpu_custom_call.1} parent=11 // pred_check
          %p149 = pneg %p93
        $region18: #{tpu_custom_call.1} parent=11 // pred_check_branch
          %151 = sbr.rel (%p149) target = $region20
        $region19: #{tpu_custom_call.1} parent=11 // pred_region
          _
        $region20: #{tpu_custom_call.1} parent=11 // pred_fallthru
          _
      $region12: #{tpu_custom_call.1} parent=5 // pred_fallthru
        _
      %p152 = scmp.lt.s32.totalorder %s13, 2
      // Predicated region
      $region21: #{tpu_custom_call.1} parent=5 // pred_check
        %p153 = pneg %p152
      $region22: #{tpu_custom_call.1} parent=5 // pred_check_branch
        %155 = sbr.rel (%p153) target = $region24
      $region23: #{tpu_custom_call.1} parent=5 // pred_region
        // Predicated region
        $region25: #{tpu_custom_call.1} parent=23 // pred_check
          %p156 = pneg %p45
        $region26: #{tpu_custom_call.1} parent=23 // pred_check_branch
          %158 = sbr.rel (%p156) target = $region28
        $region27: #{tpu_custom_call.1} parent=23 // pred_region
          %s159 = sand.u32 %s35, 1
          %s160 = scalar_lea.sflag [#allocation4], %s159
          %s161 = sand.u32 %s35, 1
          %s162 = smul.addr %s161, 224
          %s163 = scalar_lea.vmem [#allocation3], %s162
          %s165 = ssub.s32 3584, 3584
          %166 = vsyncadd %s160, %s165
          %s167 = smul.addr %s20, 56
          %s168 = smul.addr %s167, 64
          %s169 = scalar_lea.hbm %s0, %s168
          %s170 = sshll.u32 %s163, 4
          %s171 = int_to_ptr.vmem [resolvable:$true] %s170
          %176 = dma.hbm_to_vmem [thread:$0]  %s169, 3584, %s171, %s160, 64, 64, 4
        $region28: #{tpu_custom_call.1} parent=23 // pred_fallthru
          _
      $region24: #{tpu_custom_call.1} parent=5 // pred_fallthru
        _
      %p177 = scmp.le.s32.totalorder 1, %s13
      %p178 = scmp.lt.s32.totalorder %s13, 3
      %p179 = pnand %p177, %p178
      %p180 = pneg %p179
      // Predicated region
      $region29: #{tpu_custom_call.1} parent=5 // pred_check
        _
      $region30: #{tpu_custom_call.1} parent=5 // pred_check_branch
        %182 = sbr.rel (%p179) target = $region32
      $region31: #{tpu_custom_call.1} parent=5 // pred_region
        %s183 = ssub.s32 %s13, 1
        %s184 = sand.u32 %s38, 1
        %s185 = scalar_lea.sflag [#allocation4], %s184
        %s186 = sand.u32 %s38, 1
        %s187 = smul.addr %s186, 224
        %s188 = scalar_lea.vmem [#allocation3], %s187
        // Predicated region
        $region33: #{tpu_custom_call.1} parent=31 // pred_check
          %p189 = pneg %p51
        $region34: #{tpu_custom_call.1} parent=31 // pred_check_branch
          %191 = sbr.rel (%p189) target = $region36
        $region35: #{tpu_custom_call.1} parent=31 // pred_region
          %192 = dma.done %s185, 3584
        $region36: #{tpu_custom_call.1} parent=31 // pred_fallthru
          _
        // Predicated region
        $region37: #{tpu_custom_call.1} parent=31 // pred_check
          %p193 = pneg %p72
        $region38: #{tpu_custom_call.1} parent=31 // pred_check_branch
          %195 = sbr.rel (%p193) target = $region40
        $region39: #{tpu_custom_call.1} parent=31 // pred_region
          %196 = dma.done [#allocation6], 2304
        $region40: #{tpu_custom_call.1} parent=31 // pred_fallthru
          _
        %s197 = sand.u32 %s38, 1
        %s198 = scalar_lea.sflag [#allocation4], %s197
        %s199 = sand.u32 %s38, 1
        %s200 = smul.addr %s199, 224
        %s201 = scalar_lea.vmem [#allocation3], %s200
        %p202 = pneg %p51
        %p203 = pneg %p48
        %p204 = pneg %p72
        %p205 = pneg %p69
        %p206 = pneg %p93
        %p207 = pneg %p90
        %p208 = pneg %p121
        %p209 = pneg %p118
        %s210 = smul.u32 11, %s23
        %p211 = scmp.lt.s32.totalorder %s22, 1
        %s212 = scalar_select %p211, %s22, 1
        %p213 = scmp.lt.s32.totalorder %s210, 10
        %s214 = scalar_select %p213, %s210, 10
        %s215 = smul.addr %s214, 3
        %s216 = smul.addr %s212, 33
        %s217 = sadd.s32 %s215, %s216
        %s218 = smul.addr %s217, 4
        %s219 = scalar_lea.vmem %s3, %s218
        %s220 = smul.u32 11, %s23
        %p221 = scmp.lt.s32.totalorder %s22, 1
        %s222 = scalar_select %p221, %s22, 1
        %p223 = scmp.lt.s32.totalorder %s220, 10
        %s224 = scalar_select %p223, %s220, 10
        %s225 = smul.addr %s224, 3
        %s226 = smul.addr %s222, 33
        %s227 = sadd.s32 %s225, %s226
        %s228 = smul.addr %s227, 4
        %s229 = scalar_lea.vmem %s3, %s228
        %s230 = smul.u32 11, %s23
        %s232 = smul.u32 %s23, 11
        %s233 = smul.u32 %s232, 4
        %s234 = smul.addr %s233, 4
        %s235 = scalar_lea.vmem %s188, %s234 [#allocation3]
        %v236 = vld [vmem:[%s235] sm:$0xf]
        %v237 = vld [vmem:[%s235 + $0x4] sm:$0xf]
        %v238 = vld [vmem:[%s235 + $0x8] sm:$0xf]
        %v239 = vld [vmem:[%s235 + $0xc] sm:$0xf]
        %v240 = vld [vmem:[%s235 + $0x10] sm:$0xf]
        %v241 = vld [vmem:[%s235 + $0x14] sm:$0xf]
        %v242 = vld [vmem:[%s235 + $0x18] sm:$0xf]
        %v243 = vld [vmem:[%s235 + $0x1c] sm:$0xf]
        %v244 = vld [vmem:[%s235 + $0x20] sm:$0xf]
        %v245 = vld [vmem:[%s235 + $0x24] sm:$0xf]
        %v246 = vld [vmem:[%s235 + $0x28] sm:$0xf]
        %v247 = vld [vmem:[%s235 + $0x2c] sm:$0xf]
        %v248 = vld [vmem:[%s235 + $0x30] sm:$0xf]
        %v249 = vld [vmem:[%s235 + $0x34] sm:$0xf]
        %v250 = vld [vmem:[%s235 + $0x38] sm:$0xf]
        %v251 = vld [vmem:[%s235 + $0x3c] sm:$0xf]
        %v252 = vld [vmem:[%s235 + $0x40] sm:$0xf]
        %v253 = vld [vmem:[%s235 + $0x44] sm:$0xf]
        %v254 = vld [vmem:[%s235 + $0x48] sm:$0xf]
        %v255 = vld [vmem:[%s235 + $0x4c] sm:$0xf]
        %v256 = vld [vmem:[%s235 + $0x50] sm:$0xf]
        %v257 = vld [vmem:[%s235 + $0x54] sm:$0xf]
        %v258 = vld [vmem:[%s235 + $0x58] sm:$0xf]
        %v259 = vld [vmem:[%s235 + $0x5c] sm:$0xf]
        %v260 = vld [vmem:[%s235 + $0x60] sm:$0xf]
        %v261 = vld [vmem:[%s235 + $0x64] sm:$0xf]
        %v262 = vld [vmem:[%s235 + $0x68] sm:$0xf]
        %v263 = vld [vmem:[%s235 + $0x6c] sm:$0xf]
        %v264 = vld [vmem:[%s235 + $0x70] sm:$0xf]
        %v265 = vld [vmem:[%s235 + $0x74] sm:$0xf]
        %v266 = vld [vmem:[%s235 + $0x78] sm:$0xf]
        %v267 = vld [vmem:[%s235 + $0x7c] sm:$0xf]
        %v268 = vld [vmem:[%s235 + $0x80] sm:$0xf]
        %v269 = vld [vmem:[%s235 + $0x84] sm:$0xf]
        %v270 = vld [vmem:[%s235 + $0x88] sm:$0xf]
        %v271 = vld [vmem:[%s235 + $0x8c] sm:$0xf]
        %v272 = vld [vmem:[%s235 + $0x90] sm:$0xf]
        %v273 = vld [vmem:[%s235 + $0x94] sm:$0xf]
        %v274 = vld [vmem:[%s235 + $0x98] sm:$0xf]
        %v275 = vld [vmem:[%s235 + $0x9c] sm:$0xf]
        %v276 = vld [vmem:[%s235 + $0xa0] sm:$0xf]
        %v277 = vld [vmem:[%s235 + $0xa4] sm:$0xf]
        %v278 = vld [vmem:[%s235 + $0xa8] sm:$0xf]
        %v279 = vld [vmem:[%s235 + $0xac] sm:$0xf]
        %v280 = vld [vmem:[%s235 + $0xb0] sm:$0xf]
        %v281 = vld [vmem:[%s235 + $0xb4] sm:$0xf]
        %v282 = vld [vmem:[%s235 + $0xb8] sm:$0xf]
        %v283 = vld [vmem:[%s235 + $0xbc] sm:$0xf]
        %v284 = vld [vmem:[%s235 + $0xc0] sm:$0xf]
        %v285 = vld [vmem:[%s235 + $0xc4] sm:$0xf]
        %v286 = vld [vmem:[%s235 + $0xc8] sm:$0xf]
        %v287 = vld [vmem:[%s235 + $0xcc] sm:$0xf]
        %v288 = vld [vmem:[%s235 + $0xd0] sm:$0xf]
        %v289 = vunpack.c.l.bf16 %v236
        %v290 = vunpack.c.l.bf16 %v237
        %v291 = vunpack.c.l.bf16 %v238
        %v292 = vunpack.c.l.bf16 %v239
        %v293 = vunpack.c.l.bf16 %v240
        %v294 = vunpack.c.l.bf16 %v241
        %v295 = vunpack.c.l.bf16 %v242
        %v296 = vunpack.c.l.bf16 %v243
        %v297 = vunpack.c.l.bf16 %v244
        %v298 = vunpack.c.l.bf16 %v245
        %v299 = vunpack.c.l.bf16 %v246
        %v300 = vunpack.c.l.bf16 %v247
        %v301 = vunpack.c.l.bf16 %v248
        %v302 = vunpack.c.l.bf16 %v249
        %v303 = vunpack.c.l.bf16 %v250
        %v304 = vunpack.c.l.bf16 %v251
        %v305 = vunpack.c.l.bf16 %v252
        %v306 = vunpack.c.l.bf16 %v253
        %v307 = vunpack.c.l.bf16 %v254
        %v308 = vunpack.c.l.bf16 %v255
        %v309 = vunpack.c.l.bf16 %v256
        %v310 = vunpack.c.l.bf16 %v257
        %v311 = vunpack.c.l.bf16 %v258
        %v312 = vunpack.c.l.bf16 %v259
        %v313 = vunpack.c.l.bf16 %v260
        %v314 = vunpack.c.l.bf16 %v261
        %v315 = vunpack.c.l.bf16 %v262
        %v316 = vunpack.c.l.bf16 %v263
        %v317 = vunpack.c.l.bf16 %v264
        %v318 = vunpack.c.l.bf16 %v265
        %v319 = vunpack.c.l.bf16 %v266
        %v320 = vunpack.c.l.bf16 %v267
        %v321 = vunpack.c.l.bf16 %v268
        %v322 = vunpack.c.l.bf16 %v269
        %v323 = vunpack.c.l.bf16 %v270
        %v324 = vunpack.c.l.bf16 %v271
        %v325 = vunpack.c.l.bf16 %v272
        %v326 = vunpack.c.l.bf16 %v273
        %v327 = vunpack.c.l.bf16 %v274
        %v328 = vunpack.c.l.bf16 %v275
        %v329 = vunpack.c.l.bf16 %v276
        %v330 = vunpack.c.l.bf16 %v277
        %v331 = vunpack.c.l.bf16 %v278
        %v332 = vunpack.c.l.bf16 %v279
        %v333 = vunpack.c.l.bf16 %v280
        %v334 = vunpack.c.l.bf16 %v281
        %v335 = vunpack.c.l.bf16 %v282
        %v336 = vunpack.c.l.bf16 %v283
        %v337 = vunpack.c.l.bf16 %v284
        %v338 = vunpack.c.l.bf16 %v285
        %v339 = vunpack.c.l.bf16 %v286
        %v340 = vunpack.c.l.bf16 %v287
        %v341 = vunpack.c.l.bf16 %v288
        %v342 = vld [vmem:[#allocation5] sm:$0xf]
        %v343 = vld [vmem:[#allocation5 + $0x4] sm:$0xf]
        %v344 = vld [vmem:[#allocation5 + $0x8] sm:$0xf]
        %v345 = vld [vmem:[#allocation5 + $0xc] sm:$0xf]
        %v390 = vunpack.c.l.b16 %v236
        %v391 = vunpack.c.l.b16 %v237
        %v392 = vunpack.c.l.b16 %v238
        %v393 = vunpack.c.l.b16 %v239
        %v394 = vunpack.c.l.b16 %v240
        %v395 = vunpack.c.l.b16 %v241
        %v396 = vunpack.c.l.b16 %v242
        %v397 = vunpack.c.l.b16 %v243
        %v398 = vunpack.c.l.b16 %v244
        %v399 = vunpack.c.l.b16 %v245
        %v400 = vunpack.c.l.b16 %v246
        %v401 = vunpack.c.l.b16 %v247
        %v402 = vunpack.c.l.b16 %v248
        %v403 = vunpack.c.l.b16 %v249
        %v404 = vunpack.c.l.b16 %v250
        %v405 = vunpack.c.l.b16 %v251
        %v406 = vunpack.c.l.b16 %v252
        %v407 = vunpack.c.l.b16 %v253
        %v408 = vunpack.c.l.b16 %v254
        %v409 = vunpack.c.l.b16 %v255
        %v410 = vunpack.c.l.b16 %v256
        %v411 = vunpack.c.l.b16 %v257
        %v412 = vunpack.c.l.b16 %v258
        %v413 = vunpack.c.l.b16 %v259
        %v414 = vunpack.c.l.b16 %v260
        %v415 = vunpack.c.l.b16 %v261
        %v416 = vunpack.c.l.b16 %v262
        %v417 = vunpack.c.l.b16 %v263
        %v418 = vunpack.c.l.b16 %v264
        %v419 = vunpack.c.l.b16 %v265
        %v420 = vunpack.c.l.b16 %v266
        %v421 = vunpack.c.l.b16 %v267
        %v422 = vunpack.c.l.b16 %v268
        %v423 = vunpack.c.l.b16 %v269
        %v424 = vunpack.c.l.b16 %v270
        %v425 = vunpack.c.l.b16 %v271
        %v426 = vunpack.c.l.b16 %v272
        %v427 = vunpack.c.l.b16 %v273
        %v428 = vunpack.c.l.b16 %v274
        %v429 = vunpack.c.l.b16 %v275
        %v430 = vunpack.c.l.b16 %v276
        %v431 = vunpack.c.l.b16 %v277
        %v432 = vunpack.c.l.b16 %v278
        %v433 = vunpack.c.l.b16 %v279
        %v434 = vpack.c.b16 %v391, %v390
        %v435 = vpack.c.b16 %v393, %v392
        %v436 = vpack.c.b16 %v395, %v394
        %v437 = vpack.c.b16 %v397, %v396
        %v438 = vpack.c.b16 %v399, %v398
        %v439 = vpack.c.b16 %v401, %v400
        %v440 = vpack.c.b16 %v403, %v402
        %v441 = vpack.c.b16 %v405, %v404
        %v442 = vpack.c.b16 %v407, %v406
        %v443 = vpack.c.b16 %v409, %v408
        %v444 = vpack.c.b16 %v411, %v410
        %v445 = vpack.c.b16 %v413, %v412
        %v446 = vpack.c.b16 %v415, %v414
        %v447 = vpack.c.b16 %v417, %v416
        %v448 = vpack.c.b16 %v419, %v418
        %v449 = vpack.c.b16 %v421, %v420
        %v450 = vpack.c.b16 %v423, %v422
        %v451 = vpack.c.b16 %v425, %v424
        %v452 = vpack.c.b16 %v427, %v426
        %v453 = vpack.c.b16 %v429, %v428
        %v454 = vpack.c.b16 %v431, %v430
        %v455 = vpack.c.b16 %v433, %v432
        %v460 = vunpack.c.l.b16 %v342
        %v461 = vunpack.c.l.b16 %v343
        %v462 = vunpack.c.l.b16 %v344
        %v463 = vunpack.c.l.b16 %v345
        %v464 = vpack.c.b16 %v461, %v460
        %v465 = vpack.c.b16 %v463, %v462
        %vm468 = vcmask 261120
        %v470 = vsel %vm468, %v434, 0
        %v473 = vsel %vm468, %v435, 0
        %v476 = vsel %vm468, %v436, 0
        %v479 = vsel %vm468, %v437, 0
        %v482 = vsel %vm468, %v438, 0
        %v485 = vsel %vm468, %v439, 0
        %v488 = vsel %vm468, %v440, 0
        %v491 = vsel %vm468, %v441, 0
        %v494 = vsel %vm468, %v442, 0
        %v497 = vsel %vm468, %v443, 0
        %v500 = vsel %vm468, %v444, 0
        %v503 = vsel %vm468, %v445, 0
        %v506 = vsel %vm468, %v446, 0
        %v509 = vsel %vm468, %v447, 0
        %v512 = vsel %vm468, %v448, 0
        %v515 = vsel %vm468, %v449, 0
        %v518 = vsel %vm468, %v450, 0
        %v521 = vsel %vm468, %v451, 0
        %v524 = vsel %vm468, %v452, 0
        %v527 = vsel %vm468, %v453, 0
        %v530 = vsel %vm468, %v454, 0
        %v533 = vsel %vm468, %v455, 0
        %535 = vmatprep.subr.bf16.mxu0 0
        %536 = vmatpush1.bf16.msra.mxu0 %v464
        %537 = vmatprep.subr.bf16.mxu0 0
        %538 = vmatpush1.bf16.msra.mxu0 %v465
        %539 = vmatprep.subr.bf16.mxu0 0
        %540 = vmatpush1.bf16.msra.mxu0 0
        %541 = vmatprep.subr.bf16.mxu0 0
        %542 = vmatpush1.bf16.msra.mxu0 0
        %543 = vmatprep.subr.bf16.mxu0 0
        %544 = vmatpush1.bf16.msra.mxu0 0
        %545 = vmatprep.subr.bf16.mxu0 0
        %546 = vmatpush1.bf16.msra.mxu0 0
        %547 = vmatprep.subr.bf16.mxu0 0
        %548 = vmatpush1.bf16.msra.mxu0 0
        %549 = vmatprep.subr.bf16.mxu0 0
        %550 = vmatpush1.bf16.msra.mxu0 0
        %551 = vmatprep.subr.bf16.mxu0 0
        %552 = vmatpush1.bf16.msra.mxu0 0
        %553 = vmatprep.subr.bf16.mxu0 0
        %554 = vmatpush1.bf16.msra.mxu0 0
        %555 = vmatprep.subr.bf16.mxu0 0
        %556 = vmatpush1.bf16.msra.mxu0 0
        %557 = vmatprep.subr.bf16.mxu0 0
        %558 = vmatpush1.bf16.msra.mxu0 0
        %559 = vmatprep.subr.bf16.mxu0 0
        %560 = vmatpush1.bf16.msra.mxu0 0
        %561 = vmatprep.subr.bf16.mxu0 0
        %562 = vmatpush1.bf16.msra.mxu0 0
        %563 = vmatprep.subr.bf16.mxu0 0
        %564 = vmatpush1.bf16.msra.mxu0 0
        %565 = vmatprep.subr.bf16.mxu0 0
        %566 = vmatpush1.bf16.msra.mxu0 0
        %567 = vmatprep.mubr.bf16.mxu0 0
        %568 = vmatmul.mubr.bf16.gmra.mrb[0].mxu0 %v470
        %v569 = vpop.f32.mrb[0].mxu0
        %v570 = vadd.f32 0.0, %v569
        %v571 = vpop.f32.mrb[0].mxu0
        %v572 = vpop.f32.mrb[0].mxu0
        %v573 = vadd.f32 0.0, %v572
        %v574 = vpop.f32.mrb[0].mxu0
        %575 = vmatprep.mubr.bf16.mxu0 0
        %576 = vmatmul.mubr.bf16.gmra.mrb[0].mxu0 %v473
        %v577 = vpop.f32.mrb[0].mxu0
        %v578 = vadd.f32 0.0, %v577
        %v579 = vpop.f32.mrb[0].mxu0
        %v580 = vpop.f32.mrb[0].mxu0
        %v581 = vadd.f32 0.0, %v580
        %v582 = vpop.f32.mrb[0].mxu0
        %583 = vmatprep.mubr.bf16.mxu0 0
        %584 = vmatmul.mubr.bf16.gmra.mrb[0].mxu0 %v476
        %v585 = vpop.f32.mrb[0].mxu0
        %v586 = vadd.f32 0.0, %v585
        %v587 = vpop.f32.mrb[0].mxu0
        %v588 = vpop.f32.mrb[0].mxu0
        %v589 = vadd.f32 0.0, %v588
        %v590 = vpop.f32.mrb[0].mxu0
        %591 = vmatprep.mubr.bf16.mxu0 0
        %592 = vmatmul.mubr.bf16.gmra.mrb[0].mxu0 %v479
        %v593 = vpop.f32.mrb[0].mxu0
        %v594 = vadd.f32 0.0, %v593
        %v595 = vpop.f32.mrb[0].mxu0
        %v596 = vpop.f32.mrb[0].mxu0
        %v597 = vadd.f32 0.0, %v596
        %v598 = vpop.f32.mrb[0].mxu0
        %599 = vmatprep.mubr.bf16.mxu0 0
        %600 = vmatmul.mubr.bf16.gmra.mrb[0].mxu0 %v482
        %v601 = vpop.f32.mrb[0].mxu0
        %v602 = vadd.f32 0.0, %v601
        %v603 = vpop.f32.mrb[0].mxu0
        %v604 = vpop.f32.mrb[0].mxu0
        %v605 = vadd.f32 0.0, %v604
        %v606 = vpop.f32.mrb[0].mxu0
        %607 = vmatprep.mubr.bf16.mxu0 0
        %608 = vmatmul.mubr.bf16.gmra.mrb[0].mxu0 %v485
        %v609 = vpop.f32.mrb[0].mxu0
        %v610 = vadd.f32 0.0, %v609
        %v611 = vpop.f32.mrb[0].mxu0
        %v612 = vpop.f32.mrb[0].mxu0
        %v613 = vadd.f32 0.0, %v612
        %v614 = vpop.f32.mrb[0].mxu0
        %615 = vmatprep.mubr.bf16.mxu0 0
        %616 = vmatmul.mubr.bf16.gmra.mrb[0].mxu0 %v488
        %v617 = vpop.f32.mrb[0].mxu0
        %v618 = vadd.f32 0.0, %v617
        %v619 = vpop.f32.mrb[0].mxu0
        %v620 = vpop.f32.mrb[0].mxu0
        %v621 = vadd.f32 0.0, %v620
        %v622 = vpop.f32.mrb[0].mxu0
        %623 = vmatprep.mubr.bf16.mxu0 0
        %624 = vmatmul.mubr.bf16.gmra.mrb[0].mxu0 %v491
        %v625 = vpop.f32.mrb[0].mxu0
        %v626 = vadd.f32 0.0, %v625
        %v627 = vpop.f32.mrb[0].mxu0
        %v628 = vpop.f32.mrb[0].mxu0
        %v629 = vadd.f32 0.0, %v628
        %v630 = vpop.f32.mrb[0].mxu0
        %631 = vmatprep.mubr.bf16.mxu0 0
        %632 = vmatmul.mubr.bf16.gmra.mrb[0].mxu0 %v494
        %v633 = vpop.f32.mrb[0].mxu0
        %v634 = vadd.f32 0.0, %v633
        %v635 = vpop.f32.mrb[0].mxu0
        %v636 = vpop.f32.mrb[0].mxu0
        %v637 = vadd.f32 0.0, %v636
        %v638 = vpop.f32.mrb[0].mxu0
        %639 = vmatprep.mubr.bf16.mxu0 0
        %640 = vmatmul.mubr.bf16.gmra.mrb[0].mxu0 %v497
        %v641 = vpop.f32.mrb[0].mxu0
        %v642 = vadd.f32 0.0, %v641
        %v643 = vpop.f32.mrb[0].mxu0
        %v644 = vpop.f32.mrb[0].mxu0
        %v645 = vadd.f32 0.0, %v644
        %v646 = vpop.f32.mrb[0].mxu0
        %647 = vmatprep.mubr.bf16.mxu0 0
        %648 = vmatmul.mubr.bf16.gmra.mrb[0].mxu0 %v500
        %v649 = vpop.f32.mrb[0].mxu0
        %v650 = vadd.f32 0.0, %v649
        %v651 = vpop.f32.mrb[0].mxu0
        %v652 = vpop.f32.mrb[0].mxu0
        %v653 = vadd.f32 0.0, %v652
        %v654 = vpop.f32.mrb[0].mxu0
        %655 = vmatprep.mubr.bf16.mxu0 0
        %656 = vmatmul.mubr.bf16.gmra.mrb[0].mxu0 %v503
        %v657 = vpop.f32.mrb[0].mxu0
        %v658 = vadd.f32 0.0, %v657
        %v659 = vpop.f32.mrb[0].mxu0
        %v660 = vpop.f32.mrb[0].mxu0
        %v661 = vadd.f32 0.0, %v660
        %v662 = vpop.f32.mrb[0].mxu0
        %663 = vmatprep.mubr.bf16.mxu0 0
        %664 = vmatmul.mubr.bf16.gmra.mrb[0].mxu0 %v506
        %v665 = vpop.f32.mrb[0].mxu0
        %v666 = vadd.f32 0.0, %v665
        %v667 = vpop.f32.mrb[0].mxu0
        %v668 = vpop.f32.mrb[0].mxu0
        %v669 = vadd.f32 0.0, %v668
        %v670 = vpop.f32.mrb[0].mxu0
        %671 = vmatprep.mubr.bf16.mxu0 0
        %672 = vmatmul.mubr.bf16.gmra.mrb[0].mxu0 %v509
        %v673 = vpop.f32.mrb[0].mxu0
        %v674 = vadd.f32 0.0, %v673
        %v675 = vpop.f32.mrb[0].mxu0
        %v676 = vpop.f32.mrb[0].mxu0
        %v677 = vadd.f32 0.0, %v676
        %v678 = vpop.f32.mrb[0].mxu0
        %679 = vmatprep.mubr.bf16.mxu0 0
        %680 = vmatmul.mubr.bf16.gmra.mrb[0].mxu0 %v512
        %v681 = vpop.f32.mrb[0].mxu0
        %v682 = vadd.f32 0.0, %v681
        %v683 = vpop.f32.mrb[0].mxu0
        %v684 = vpop.f32.mrb[0].mxu0
        %v685 = vadd.f32 0.0, %v684
        %v686 = vpop.f32.mrb[0].mxu0
        %687 = vmatprep.mubr.bf16.mxu0 0
        %688 = vmatmul.mubr.bf16.gmra.mrb[0].mxu0 %v515
        %v689 = vpop.f32.mrb[0].mxu0
        %v690 = vadd.f32 0.0, %v689
        %v691 = vpop.f32.mrb[0].mxu0
        %v692 = vpop.f32.mrb[0].mxu0
        %v693 = vadd.f32 0.0, %v692
        %v694 = vpop.f32.mrb[0].mxu0
        %695 = vmatprep.mubr.bf16.mxu0 0
        %696 = vmatmul.mubr.bf16.gmra.mrb[0].mxu0 %v518
        %v697 = vpop.f32.mrb[0].mxu0
        %v698 = vadd.f32 0.0, %v697
        %v699 = vpop.f32.mrb[0].mxu0
        %v700 = vpop.f32.mrb[0].mxu0
        %v701 = vadd.f32 0.0, %v700
        %v702 = vpop.f32.mrb[0].mxu0
        %703 = vmatprep.mubr.bf16.mxu0 0
        %704 = vmatmul.mubr.bf16.gmra.mrb[0].mxu0 %v521
        %v705 = vpop.f32.mrb[0].mxu0
        %v706 = vadd.f32 0.0, %v705
        %v707 = vpop.f32.mrb[0].mxu0
        %v708 = vpop.f32.mrb[0].mxu0
        %v709 = vadd.f32 0.0, %v708
        %v710 = vpop.f32.mrb[0].mxu0
        %711 = vmatprep.mubr.bf16.mxu0 0
        %712 = vmatmul.mubr.bf16.gmra.mrb[0].mxu0 %v524
        %v713 = vpop.f32.mrb[0].mxu0
        %v714 = vadd.f32 0.0, %v713
        %v715 = vpop.f32.mrb[0].mxu0
        %v716 = vpop.f32.mrb[0].mxu0
        %v717 = vadd.f32 0.0, %v716
        %v718 = vpop.f32.mrb[0].mxu0
        %719 = vmatprep.mubr.bf16.mxu0 0
        %720 = vmatmul.mubr.bf16.gmra.mrb[0].mxu0 %v527
        %v721 = vpop.f32.mrb[0].mxu0
        %v722 = vadd.f32 0.0, %v721
        %v723 = vpop.f32.mrb[0].mxu0
        %v724 = vpop.f32.mrb[0].mxu0
        %v725 = vadd.f32 0.0, %v724
        %v726 = vpop.f32.mrb[0].mxu0
        %727 = vmatprep.mubr.bf16.mxu0 0
        %728 = vmatmul.mubr.bf16.gmra.mrb[0].mxu0 %v530
        %v729 = vpop.f32.mrb[0].mxu0
        %v730 = vadd.f32 0.0, %v729
        %v731 = vpop.f32.mrb[0].mxu0
        %v732 = vpop.f32.mrb[0].mxu0
        %v733 = vadd.f32 0.0, %v732
        %v734 = vpop.f32.mrb[0].mxu0
        %735 = vmatprep.mubr.bf16.mxu0 0
        %736 = vmatmul.mubr.bf16.gmra.mrb[0].mxu0 %v533
        %v737 = vpop.f32.mrb[0].mxu0
        %v738 = vadd.f32 0.0, %v737
        %v739 = vpop.f32.mrb[0].mxu0
        %v740 = vpop.f32.mrb[0].mxu0
        %v741 = vadd.f32 0.0, %v740
        %v742 = vpop.f32.mrb[0].mxu0
        %743 = vdwg.mxu0
        %vm744 = vcmask 523264
        %745 = vst.msk [vmem:[#allocation2] sm:$0xff] %vm744, %v570
        %746 = vst.msk [vmem:[#allocation2 + $0x8] sm:$0xff] %vm744, %v573
        %747 = vst.msk [vmem:[#allocation2 + $0x10] sm:$0xff] %vm744, %v578
        %748 = vst.msk [vmem:[#allocation2 + $0x18] sm:$0xff] %vm744, %v581
        %749 = vst.msk [vmem:[#allocation2 + $0x20] sm:$0xff] %vm744, %v586
        %750 = vst.msk [vmem:[#allocation2 + $0x28] sm:$0xff] %vm744, %v589
        %751 = vst.msk [vmem:[#allocation2 + $0x30] sm:$0xff] %vm744, %v594
        %752 = vst.msk [vmem:[#allocation2 + $0x38] sm:$0xff] %vm744, %v597
        %753 = vst.msk [vmem:[#allocation2 + $0x40] sm:$0xff] %vm744, %v602
        %754 = vst.msk [vmem:[#allocation2 + $0x48] sm:$0xff] %vm744, %v605
        %755 = vst.msk [vmem:[#allocation2 + $0x50] sm:$0xff] %vm744, %v610
        %756 = vst.msk [vmem:[#allocation2 + $0x58] sm:$0xff] %vm744, %v613
        %757 = vst.msk [vmem:[#allocation2 + $0x60] sm:$0xff] %vm744, %v618
        %758 = vst.msk [vmem:[#allocation2 + $0x68] sm:$0xff] %vm744, %v621
        %759 = vst.msk [vmem:[#allocation2 + $0x70] sm:$0xff] %vm744, %v626
        %760 = vst.msk [vmem:[#allocation2 + $0x78] sm:$0xff] %vm744, %v629
        %761 = vst.msk [vmem:[#allocation2 + $0x80] sm:$0xff] %vm744, %v634
        %762 = vst.msk [vmem:[#allocation2 + $0x88] sm:$0xff] %vm744, %v637
        %763 = vst.msk [vmem:[#allocation2 + $0x90] sm:$0xff] %vm744, %v642
        %764 = vst.msk [vmem:[#allocation2 + $0x98] sm:$0xff] %vm744, %v645
        %765 = vst.msk [vmem:[#allocation2 + $0xa0] sm:$0xff] %vm744, %v650
        %766 = vst.msk [vmem:[#allocation2 + $0xa8] sm:$0xff] %vm744, %v653
        %767 = vst.msk [vmem:[#allocation2 + $0xb0] sm:$0xff] %vm744, %v658
        %768 = vst.msk [vmem:[#allocation2 + $0xb8] sm:$0xff] %vm744, %v661
        %769 = vst.msk [vmem:[#allocation2 + $0xc0] sm:$0xff] %vm744, %v666
        %770 = vst.msk [vmem:[#allocation2 + $0xc8] sm:$0xff] %vm744, %v669
        %771 = vst.msk [vmem:[#allocation2 + $0xd0] sm:$0xff] %vm744, %v674
        %772 = vst.msk [vmem:[#allocation2 + $0xd8] sm:$0xff] %vm744, %v677
        %773 = vst.msk [vmem:[#allocation2 + $0xe0] sm:$0xff] %vm744, %v682
        %774 = vst.msk [vmem:[#allocation2 + $0xe8] sm:$0xff] %vm744, %v685
        %775 = vst.msk [vmem:[#allocation2 + $0xf0] sm:$0xff] %vm744, %v690
        %776 = vst.msk [vmem:[#allocation2 + $0xf8] sm:$0xff] %vm744, %v693
        %777 = vst.msk [vmem:[#allocation2 + $0x100] sm:$0xff] %vm744, %v698
        %778 = vst.msk [vmem:[#allocation2 + $0x108] sm:$0xff] %vm744, %v701
        %779 = vst.msk [vmem:[#allocation2 + $0x110] sm:$0xff] %vm744, %v706
        %780 = vst.msk [vmem:[#allocation2 + $0x118] sm:$0xff] %vm744, %v709
        %781 = vst.msk [vmem:[#allocation2 + $0x120] sm:$0xff] %vm744, %v714
        %782 = vst.msk [vmem:[#allocation2 + $0x128] sm:$0xff] %vm744, %v717
        %783 = vst.msk [vmem:[#allocation2 + $0x130] sm:$0xff] %vm744, %v722
        %784 = vst.msk [vmem:[#allocation2 + $0x138] sm:$0xff] %vm744, %v725
        %785 = vst.msk [vmem:[#allocation2 + $0x140] sm:$0xff] %vm744, %v730
        %786 = vst.msk [vmem:[#allocation2 + $0x148] sm:$0xff] %vm744, %v733
        %787 = vst.msk [vmem:[#allocation2 + $0x150] sm:$0xff] %vm744, %v738
        %788 = vst.msk [vmem:[#allocation2 + $0x158] sm:$0xff] %vm744, %v741
        %s789 = scalar_lea.vmem [#allocation5], 48
        %v790 = vld [vmem:[%s789] sm:$0xf]
        %v791 = vld [vmem:[%s789 + $0x4] sm:$0xf]
        %v792 = vld [vmem:[%s789 + $0x8] sm:$0xf]
        %v793 = vld [vmem:[%s789 + $0xc] sm:$0xf]
        %v798 = vunpack.c.l.b16 %v280
        %v799 = vunpack.c.l.b16 %v281
        %v800 = vunpack.c.l.b16 %v282
        %v801 = vunpack.c.l.b16 %v283
        %v802 = vpack.c.b16 %v799, %v798
        %v803 = vpack.c.b16 %v801, %v800
        %v808 = vunpack.c.l.b16 %v790
        %v809 = vunpack.c.l.b16 %v791
        %v810 = vunpack.c.l.b16 %v792
        %v811 = vunpack.c.l.b16 %v793
        %v812 = vpack.c.b16 %v809, %v808
        %v813 = vpack.c.b16 %v811, %v810
        %v817 = vsel %vm468, %v802, 0
        %v820 = vsel %vm468, %v803, 0
        %822 = vmatprep.subr.bf16.mxu0 0
        %823 = vmatpush1.bf16.msra.mxu0 %v812
        %824 = vmatprep.subr.bf16.mxu0 0
        %825 = vmatpush1.bf16.msra.mxu0 %v813
        %826 = vmatprep.subr.bf16.mxu0 0
        %827 = vmatpush1.bf16.msra.mxu0 0
        %828 = vmatprep.subr.bf16.mxu0 0
        %829 = vmatpush1.bf16.msra.mxu0 0
        %830 = vmatprep.subr.bf16.mxu0 0
        %831 = vmatpush1.bf16.msra.mxu0 0
        %832 = vmatprep.subr.bf16.mxu0 0
        %833 = vmatpush1.bf16.msra.mxu0 0
        %834 = vmatprep.subr.bf16.mxu0 0
        %835 = vmatpush1.bf16.msra.mxu0 0
        %836 = vmatprep.subr.bf16.mxu0 0
        %837 = vmatpush1.bf16.msra.mxu0 0
        %838 = vmatprep.subr.bf16.mxu0 0
        %839 = vmatpush1.bf16.msra.mxu0 0
        %840 = vmatprep.subr.bf16.mxu0 0
        %841 = vmatpush1.bf16.msra.mxu0 0
        %842 = vmatprep.subr.bf16.mxu0 0
        %843 = vmatpush1.bf16.msra.mxu0 0
        %844 = vmatprep.subr.bf16.mxu0 0
        %845 = vmatpush1.bf16.msra.mxu0 0
        %846 = vmatprep.subr.bf16.mxu0 0
        %847 = vmatpush1.bf16.msra.mxu0 0
        %848 = vmatprep.subr.bf16.mxu0 0
        %849 = vmatpush1.bf16.msra.mxu0 0
        %850 = vmatprep.subr.bf16.mxu0 0
        %851 = vmatpush1.bf16.msra.mxu0 0
        %852 = vmatprep.subr.bf16.mxu0 0
        %853 = vmatpush1.bf16.msra.mxu0 0
        %854 = vmatprep.mubr.bf16.mxu0 0
        %855 = vmatmul.mubr.bf16.gmra.mrb[0].mxu0 %v476
        %v856 = vpop.f32.mrb[0].mxu0
        %v857 = vadd.f32 0.0, %v856
        %v858 = vpop.f32.mrb[0].mxu0
        %v859 = vpop.f32.mrb[0].mxu0
        %v860 = vadd.f32 0.0, %v859
        %v861 = vpop.f32.mrb[0].mxu0
        %862 = vmatprep.mubr.bf16.mxu0 0
        %863 = vmatmul.mubr.bf16.gmra.mrb[0].mxu0 %v479
        %v864 = vpop.f32.mrb[0].mxu0
        %v865 = vadd.f32 0.0, %v864
        %v866 = vpop.f32.mrb[0].mxu0
        %v867 = vpop.f32.mrb[0].mxu0
        %v868 = vadd.f32 0.0, %v867
        %v869 = vpop.f32.mrb[0].mxu0
        %870 = vmatprep.mubr.bf16.mxu0 0
        %871 = vmatmul.mubr.bf16.gmra.mrb[0].mxu0 %v482
        %v872 = vpop.f32.mrb[0].mxu0
        %v873 = vadd.f32 0.0, %v872
        %v874 = vpop.f32.mrb[0].mxu0
        %v875 = vpop.f32.mrb[0].mxu0
        %v876 = vadd.f32 0.0, %v875
        %v877 = vpop.f32.mrb[0].mxu0
        %878 = vmatprep.mubr.bf16.mxu0 0
        %879 = vmatmul.mubr.bf16.gmra.mrb[0].mxu0 %v485
        %v880 = vpop.f32.mrb[0].mxu0
        %v881 = vadd.f32 0.0, %v880
        %v882 = vpop.f32.mrb[0].mxu0
        %v883 = vpop.f32.mrb[0].mxu0
        %v884 = vadd.f32 0.0, %v883
        %v885 = vpop.f32.mrb[0].mxu0
        %886 = vmatprep.mubr.bf16.mxu0 0
        %887 = vmatmul.mubr.bf16.gmra.mrb[0].mxu0 %v488
        %v888 = vpop.f32.mrb[0].mxu0
        %v889 = vadd.f32 0.0, %v888
        %v890 = vpop.f32.mrb[0].mxu0
        %v891 = vpop.f32.mrb[0].mxu0
        %v892 = vadd.f32 0.0, %v891
        %v893 = vpop.f32.mrb[0].mxu0
        %894 = vmatprep.mubr.bf16.mxu0 0
        %895 = vmatmul.mubr.bf16.gmra.mrb[0].mxu0 %v491
        %v896 = vpop.f32.mrb[0].mxu0
        %v897 = vadd.f32 0.0, %v896
        %v898 = vpop.f32.mrb[0].mxu0
        %v899 = vpop.f32.mrb[0].mxu0
        %v900 = vadd.f32 0.0, %v899
        %v901 = vpop.f32.mrb[0].mxu0
        %902 = vmatprep.mubr.bf16.mxu0 0
        %903 = vmatmul.mubr.bf16.gmra.mrb[0].mxu0 %v494
        %v904 = vpop.f32.mrb[0].mxu0
        %v905 = vadd.f32 0.0, %v904
        %v906 = vpop.f32.mrb[0].mxu0
        %v907 = vpop.f32.mrb[0].mxu0
        %v908 = vadd.f32 0.0, %v907
        %v909 = vpop.f32.mrb[0].mxu0
        %910 = vmatprep.mubr.bf16.mxu0 0
        %911 = vmatmul.mubr.bf16.gmra.mrb[0].mxu0 %v497
        %v912 = vpop.f32.mrb[0].mxu0
        %v913 = vadd.f32 0.0, %v912
        %v914 = vpop.f32.mrb[0].mxu0
        %v915 = vpop.f32.mrb[0].mxu0
        %v916 = vadd.f32 0.0, %v915
        %v917 = vpop.f32.mrb[0].mxu0
        %918 = vmatprep.mubr.bf16.mxu0 0
        %919 = vmatmul.mubr.bf16.gmra.mrb[0].mxu0 %v500
        %v920 = vpop.f32.mrb[0].mxu0
        %v921 = vadd.f32 0.0, %v920
        %v922 = vpop.f32.mrb[0].mxu0
        %v923 = vpop.f32.mrb[0].mxu0
        %v924 = vadd.f32 0.0, %v923
        %v925 = vpop.f32.mrb[0].mxu0
        %926 = vmatprep.mubr.bf16.mxu0 0
        %927 = vmatmul.mubr.bf16.gmra.mrb[0].mxu0 %v503
        %v928 = vpop.f32.mrb[0].mxu0
        %v929 = vadd.f32 0.0, %v928
        %v930 = vpop.f32.mrb[0].mxu0
        %v931 = vpop.f32.mrb[0].mxu0
        %v932 = vadd.f32 0.0, %v931
        %v933 = vpop.f32.mrb[0].mxu0
        %934 = vmatprep.mubr.bf16.mxu0 0
        %935 = vmatmul.mubr.bf16.gmra.mrb[0].mxu0 %v506
        %v936 = vpop.f32.mrb[0].mxu0
        %v937 = vadd.f32 0.0, %v936
        %v938 = vpop.f32.mrb[0].mxu0
        %v939 = vpop.f32.mrb[0].mxu0
        %v940 = vadd.f32 0.0, %v939
        %v941 = vpop.f32.mrb[0].mxu0
        %942 = vmatprep.mubr.bf16.mxu0 0
        %943 = vmatmul.mubr.bf16.gmra.mrb[0].mxu0 %v509
        %v944 = vpop.f32.mrb[0].mxu0
        %v945 = vadd.f32 0.0, %v944
        %v946 = vpop.f32.mrb[0].mxu0
        %v947 = vpop.f32.mrb[0].mxu0
        %v948 = vadd.f32 0.0, %v947
        %v949 = vpop.f32.mrb[0].mxu0
        %950 = vmatprep.mubr.bf16.mxu0 0
        %951 = vmatmul.mubr.bf16.gmra.mrb[0].mxu0 %v512
        %v952 = vpop.f32.mrb[0].mxu0
        %v953 = vadd.f32 0.0, %v952
        %v954 = vpop.f32.mrb[0].mxu0
        %v955 = vpop.f32.mrb[0].mxu0
        %v956 = vadd.f32 0.0, %v955
        %v957 = vpop.f32.mrb[0].mxu0
        %958 = vmatprep.mubr.bf16.mxu0 0
        %959 = vmatmul.mubr.bf16.gmra.mrb[0].mxu0 %v515
        %v960 = vpop.f32.mrb[0].mxu0
        %v961 = vadd.f32 0.0, %v960
        %v962 = vpop.f32.mrb[0].mxu0
        %v963 = vpop.f32.mrb[0].mxu0
        %v964 = vadd.f32 0.0, %v963
        %v965 = vpop.f32.mrb[0].mxu0
        %966 = vmatprep.mubr.bf16.mxu0 0
        %967 = vmatmul.mubr.bf16.gmra.mrb[0].mxu0 %v518
        %v968 = vpop.f32.mrb[0].mxu0
        %v969 = vadd.f32 0.0, %v968
        %v970 = vpop.f32.mrb[0].mxu0
        %v971 = vpop.f32.mrb[0].mxu0
        %v972 = vadd.f32 0.0, %v971
        %v973 = vpop.f32.mrb[0].mxu0
        %974 = vmatprep.mubr.bf16.mxu0 0
        %975 = vmatmul.mubr.bf16.gmra.mrb[0].mxu0 %v521
        %v976 = vpop.f32.mrb[0].mxu0
        %v977 = vadd.f32 0.0, %v976
        %v978 = vpop.f32.mrb[0].mxu0
        %v979 = vpop.f32.mrb[0].mxu0
        %v980 = vadd.f32 0.0, %v979
        %v981 = vpop.f32.mrb[0].mxu0
        %982 = vmatprep.mubr.bf16.mxu0 0
        %983 = vmatmul.mubr.bf16.gmra.mrb[0].mxu0 %v524
        %v984 = vpop.f32.mrb[0].mxu0
        %v985 = vadd.f32 0.0, %v984
        %v986 = vpop.f32.mrb[0].mxu0
        %v987 = vpop.f32.mrb[0].mxu0
        %v988 = vadd.f32 0.0, %v987
        %v989 = vpop.f32.mrb[0].mxu0
        %990 = vmatprep.mubr.bf16.mxu0 0
        %991 = vmatmul.mubr.bf16.gmra.mrb[0].mxu0 %v527
        %v992 = vpop.f32.mrb[0].mxu0
        %v993 = vadd.f32 0.0, %v992
        %v994 = vpop.f32.mrb[0].mxu0
        %v995 = vpop.f32.mrb[0].mxu0
        %v996 = vadd.f32 0.0, %v995
        %v997 = vpop.f32.mrb[0].mxu0
        %998 = vmatprep.mubr.bf16.mxu0 0
        %999 = vmatmul.mubr.bf16.gmra.mrb[0].mxu0 %v530
        %v1000 = vpop.f32.mrb[0].mxu0
        %v1001 = vadd.f32 0.0, %v1000
        %v1002 = vpop.f32.mrb[0].mxu0
        %v1003 = vpop.f32.mrb[0].mxu0
        %v1004 = vadd.f32 0.0, %v1003
        %v1005 = vpop.f32.mrb[0].mxu0
        %1006 = vmatprep.mubr.bf16.mxu0 0
        %1007 = vmatmul.mubr.bf16.gmra.mrb[0].mxu0 %v533
        %v1008 = vpop.f32.mrb[0].mxu0
        %v1009 = vadd.f32 0.0, %v1008
        %v1010 = vpop.f32.mrb[0].mxu0
        %v1011 = vpop.f32.mrb[0].mxu0
        %v1012 = vadd.f32 0.0, %v1011
        %v1013 = vpop.f32.mrb[0].mxu0
        %1014 = vmatprep.mubr.bf16.mxu0 0
        %1015 = vmatmul.mubr.bf16.gmra.mrb[0].mxu0 %v817
        %v1016 = vpop.f32.mrb[0].mxu0
        %v1017 = vadd.f32 0.0, %v1016
        %v1018 = vpop.f32.mrb[0].mxu0
        %v1019 = vpop.f32.mrb[0].mxu0
        %v1020 = vadd.f32 0.0, %v1019
        %v1021 = vpop.f32.mrb[0].mxu0
        %1022 = vmatprep.mubr.bf16.mxu0 0
        %1023 = vmatmul.mubr.bf16.gmra.mrb[0].mxu0 %v820
        %v1024 = vpop.f32.mrb[0].mxu0
        %v1025 = vadd.f32 0.0, %v1024
        %v1026 = vpop.f32.mrb[0].mxu0
        %v1027 = vpop.f32.mrb[0].mxu0
        %v1028 = vadd.f32 0.0, %v1027
        %v1029 = vpop.f32.mrb[0].mxu0
        %1030 = vdwg.mxu0
        %v1031 = vld [vmem:[#allocation2] sm:$0xff]
        %v1032 = vld [vmem:[#allocation2 + $0x8] sm:$0xff]
        %v1033 = vld [vmem:[#allocation2 + $0x10] sm:$0xff]
        %v1034 = vld [vmem:[#allocation2 + $0x18] sm:$0xff]
        %v1035 = vld [vmem:[#allocation2 + $0x20] sm:$0xff]
        %v1036 = vld [vmem:[#allocation2 + $0x28] sm:$0xff]
        %v1037 = vld [vmem:[#allocation2 + $0x30] sm:$0xff]
        %v1038 = vld [vmem:[#allocation2 + $0x38] sm:$0xff]
        %v1039 = vld [vmem:[#allocation2 + $0x40] sm:$0xff]
        %v1040 = vld [vmem:[#allocation2 + $0x48] sm:$0xff]
        %v1041 = vld [vmem:[#allocation2 + $0x50] sm:$0xff]
        %v1042 = vld [vmem:[#allocation2 + $0x58] sm:$0xff]
        %v1043 = vld [vmem:[#allocation2 + $0x60] sm:$0xff]
        %v1044 = vld [vmem:[#allocation2 + $0x68] sm:$0xff]
        %v1045 = vld [vmem:[#allocation2 + $0x70] sm:$0xff]
        %v1046 = vld [vmem:[#allocation2 + $0x78] sm:$0xff]
        %v1047 = vld [vmem:[#allocation2 + $0x80] sm:$0xff]
        %v1048 = vld [vmem:[#allocation2 + $0x88] sm:$0xff]
        %v1049 = vld [vmem:[#allocation2 + $0x90] sm:$0xff]
        %v1050 = vld [vmem:[#allocation2 + $0x98] sm:$0xff]
        %v1051 = vld [vmem:[#allocation2 + $0xa0] sm:$0xff]
        %v1052 = vld [vmem:[#allocation2 + $0xa8] sm:$0xff]
        %v1053 = vld [vmem:[#allocation2 + $0xb0] sm:$0xff]
        %v1054 = vld [vmem:[#allocation2 + $0xb8] sm:$0xff]
        %v1055 = vld [vmem:[#allocation2 + $0xc0] sm:$0xff]
        %v1056 = vld [vmem:[#allocation2 + $0xc8] sm:$0xff]
        %v1057 = vld [vmem:[#allocation2 + $0xd0] sm:$0xff]
        %v1058 = vld [vmem:[#allocation2 + $0xd8] sm:$0xff]
        %v1059 = vld [vmem:[#allocation2 + $0xe0] sm:$0xff]
        %v1060 = vld [vmem:[#allocation2 + $0xe8] sm:$0xff]
        %v1061 = vld [vmem:[#allocation2 + $0xf0] sm:$0xff]
        %v1062 = vld [vmem:[#allocation2 + $0xf8] sm:$0xff]
        %v1063 = vld [vmem:[#allocation2 + $0x100] sm:$0xff]
        %v1064 = vld [vmem:[#allocation2 + $0x108] sm:$0xff]
        %v1065 = vld [vmem:[#allocation2 + $0x110] sm:$0xff]
        %v1066 = vld [vmem:[#allocation2 + $0x118] sm:$0xff]
        %v1067 = vld [vmem:[#allocation2 + $0x120] sm:$0xff]
        %v1068 = vld [vmem:[#allocation2 + $0x128] sm:$0xff]
        %v1069 = vld [vmem:[#allocation2 + $0x130] sm:$0xff]
        %v1070 = vld [vmem:[#allocation2 + $0x138] sm:$0xff]
        %v1071 = vld [vmem:[#allocation2 + $0x140] sm:$0xff]
        %v1072 = vld [vmem:[#allocation2 + $0x148] sm:$0xff]
        %v1073 = vld [vmem:[#allocation2 + $0x150] sm:$0xff]
        %v1074 = vld [vmem:[#allocation2 + $0x158] sm:$0xff]
        %v1075 = vadd.f32 %v1031, %v857
        %v1076 = vadd.f32 %v1032, %v860
        %v1077 = vadd.f32 %v1033, %v865
        %v1078 = vadd.f32 %v1034, %v868
        %v1079 = vadd.f32 %v1035, %v873
        %v1080 = vadd.f32 %v1036, %v876
        %v1081 = vadd.f32 %v1037, %v881
        %v1082 = vadd.f32 %v1038, %v884
        %v1083 = vadd.f32 %v1039, %v889
        %v1084 = vadd.f32 %v1040, %v892
        %v1085 = vadd.f32 %v1041, %v897
        %v1086 = vadd.f32 %v1042, %v900
        %v1087 = vadd.f32 %v1043, %v905
        %v1088 = vadd.f32 %v1044, %v908
        %v1089 = vadd.f32 %v1045, %v913
        %v1090 = vadd.f32 %v1046, %v916
        %v1091 = vadd.f32 %v1047, %v921
        %v1092 = vadd.f32 %v1048, %v924
        %v1093 = vadd.f32 %v1049, %v929
        %v1094 = vadd.f32 %v1050, %v932
        %v1095 = vadd.f32 %v1051, %v937
        %v1096 = vadd.f32 %v1052, %v940
        %v1097 = vadd.f32 %v1053, %v945
        %v1098 = vadd.f32 %v1054, %v948
        %v1099 = vadd.f32 %v1055, %v953
        %v1100 = vadd.f32 %v1056, %v956
        %v1101 = vadd.f32 %v1057, %v961
        %v1102 = vadd.f32 %v1058, %v964
        %v1103 = vadd.f32 %v1059, %v969
        %v1104 = vadd.f32 %v1060, %v972
        %v1105 = vadd.f32 %v1061, %v977
        %v1106 = vadd.f32 %v1062, %v980
        %v1107 = vadd.f32 %v1063, %v985
        %v1108 = vadd.f32 %v1064, %v988
        %v1109 = vadd.f32 %v1065, %v993
        %v1110 = vadd.f32 %v1066, %v996
        %v1111 = vadd.f32 %v1067, %v1001
        %v1112 = vadd.f32 %v1068, %v1004
        %v1113 = vadd.f32 %v1069, %v1009
        %v1114 = vadd.f32 %v1070, %v1012
        %v1115 = vadd.f32 %v1071, %v1017
        %v1116 = vadd.f32 %v1072, %v1020
        %v1117 = vadd.f32 %v1073, %v1025
        %v1118 = vadd.f32 %v1074, %v1028
        %1119 = vst.msk [vmem:[#allocation2] sm:$0xff] %vm744, %v1075
        %1120 = vst.msk [vmem:[#allocation2 + $0x8] sm:$0xff] %vm744, %v1076
        %1121 = vst.msk [vmem:[#allocation2 + $0x10] sm:$0xff] %vm744, %v1077
        %1122 = vst.msk [vmem:[#allocation2 + $0x18] sm:$0xff] %vm744, %v1078
        %1123 = vst.msk [vmem:[#allocation2 + $0x20] sm:$0xff] %vm744, %v1079
        %1124 = vst.msk [vmem:[#allocation2 + $0x28] sm:$0xff] %vm744, %v1080
        %1125 = vst.msk [vmem:[#allocation2 + $0x30] sm:$0xff] %vm744, %v1081
        %1126 = vst.msk [vmem:[#allocation2 + $0x38] sm:$0xff] %vm744, %v1082
        %1127 = vst.msk [vmem:[#allocation2 + $0x40] sm:$0xff] %vm744, %v1083
        %1128 = vst.msk [vmem:[#allocation2 + $0x48] sm:$0xff] %vm744, %v1084
        %1129 = vst.msk [vmem:[#allocation2 + $0x50] sm:$0xff] %vm744, %v1085
        %1130 = vst.msk [vmem:[#allocation2 + $0x58] sm:$0xff] %vm744, %v1086
        %1131 = vst.msk [vmem:[#allocation2 + $0x60] sm:$0xff] %vm744, %v1087
        %1132 = vst.msk [vmem:[#allocation2 + $0x68] sm:$0xff] %vm744, %v1088
        %1133 = vst.msk [vmem:[#allocation2 + $0x70] sm:$0xff] %vm744, %v1089
        %1134 = vst.msk [vmem:[#allocation2 + $0x78] sm:$0xff] %vm744, %v1090
        %1135 = vst.msk [vmem:[#allocation2 + $0x80] sm:$0xff] %vm744, %v1091
        %1136 = vst.msk [vmem:[#allocation2 + $0x88] sm:$0xff] %vm744, %v1092
        %1137 = vst.msk [vmem:[#allocation2 + $0x90] sm:$0xff] %vm744, %v1093
        %1138 = vst.msk [vmem:[#allocation2 + $0x98] sm:$0xff] %vm744, %v1094
        %1139 = vst.msk [vmem:[#allocation2 + $0xa0] sm:$0xff] %vm744, %v1095
        %1140 = vst.msk [vmem:[#allocation2 + $0xa8] sm:$0xff] %vm744, %v1096
        %1141 = vst.msk [vmem:[#allocation2 + $0xb0] sm:$0xff] %vm744, %v1097
        %1142 = vst.msk [vmem:[#allocation2 + $0xb8] sm:$0xff] %vm744, %v1098
        %1143 = vst.msk [vmem:[#allocation2 + $0xc0] sm:$0xff] %vm744, %v1099
        %1144 = vst.msk [vmem:[#allocation2 + $0xc8] sm:$0xff] %vm744, %v1100
        %1145 = vst.msk [vmem:[#allocation2 + $0xd0] sm:$0xff] %vm744, %v1101
        %1146 = vst.msk [vmem:[#allocation2 + $0xd8] sm:$0xff] %vm744, %v1102
        %1147 = vst.msk [vmem:[#allocation2 + $0xe0] sm:$0xff] %vm744, %v1103
        %1148 = vst.msk [vmem:[#allocation2 + $0xe8] sm:$0xff] %vm744, %v1104
        %1149 = vst.msk [vmem:[#allocation2 + $0xf0] sm:$0xff] %vm744, %v1105
        %1150 = vst.msk [vmem:[#allocation2 + $0xf8] sm:$0xff] %vm744, %v1106
        %1151 = vst.msk [vmem:[#allocation2 + $0x100] sm:$0xff] %vm744, %v1107
        %1152 = vst.msk [vmem:[#allocation2 + $0x108] sm:$0xff] %vm744, %v1108
        %1153 = vst.msk [vmem:[#allocation2 + $0x110] sm:$0xff] %vm744, %v1109
        %1154 = vst.msk [vmem:[#allocation2 + $0x118] sm:$0xff] %vm744, %v1110
        %1155 = vst.msk [vmem:[#allocation2 + $0x120] sm:$0xff] %vm744, %v1111
        %1156 = vst.msk [vmem:[#allocation2 + $0x128] sm:$0xff] %vm744, %v1112
        %1157 = vst.msk [vmem:[#allocation2 + $0x130] sm:$0xff] %vm744, %v1113
        %1158 = vst.msk [vmem:[#allocation2 + $0x138] sm:$0xff] %vm744, %v1114
        %1159 = vst.msk [vmem:[#allocation2 + $0x140] sm:$0xff] %vm744, %v1115
        %1160 = vst.msk [vmem:[#allocation2 + $0x148] sm:$0xff] %vm744, %v1116
        %1161 = vst.msk [vmem:[#allocation2 + $0x150] sm:$0xff] %vm744, %v1117
        %1162 = vst.msk [vmem:[#allocation2 + $0x158] sm:$0xff] %vm744, %v1118
        %s1163 = scalar_lea.vmem [#allocation5], 96
        %v1164 = vld [vmem:[%s1163] sm:$0xf]
        %v1165 = vld [vmem:[%s1163 + $0x4] sm:$0xf]
        %v1166 = vld [vmem:[%s1163 + $0x8] sm:$0xf]
        %v1167 = vld [vmem:[%s1163 + $0xc] sm:$0xf]
        %v1172 = vunpack.c.l.b16 %v284
        %v1173 = vunpack.c.l.b16 %v285
        %v1174 = vunpack.c.l.b16 %v286
        %v1175 = vunpack.c.l.b16 %v287
        %v1176 = vpack.c.b16 %v1173, %v1172
        %v1177 = vpack.c.b16 %v1175, %v1174
        %v1182 = vunpack.c.l.b16 %v1164
        %v1183 = vunpack.c.l.b16 %v1165
        %v1184 = vunpack.c.l.b16 %v1166
        %v1185 = vunpack.c.l.b16 %v1167
        %v1186 = vpack.c.b16 %v1183, %v1182
        %v1187 = vpack.c.b16 %v1185, %v1184
        %v1191 = vsel %vm468, %v1176, 0
        %v1194 = vsel %vm468, %v1177, 0
        %1196 = vmatprep.subr.bf16.mxu0 0
        %1197 = vmatpush1.bf16.msra.mxu0 %v1186
        %1198 = vmatprep.subr.bf16.mxu0 0
        %1199 = vmatpush1.bf16.msra.mxu0 %v1187
        %1200 = vmatprep.subr.bf16.mxu0 0
        %1201 = vmatpush1.bf16.msra.mxu0 0
        %1202 = vmatprep.subr.bf16.mxu0 0
        %1203 = vmatpush1.bf16.msra.mxu0 0
        %1204 = vmatprep.subr.bf16.mxu0 0
        %1205 = vmatpush1.bf16.msra.mxu0 0
        %1206 = vmatprep.subr.bf16.mxu0 0
        %1207 = vmatpush1.bf16.msra.mxu0 0
        %1208 = vmatprep.subr.bf16.mxu0 0
        %1209 = vmatpush1.bf16.msra.mxu0 0
        %1210 = vmatprep.subr.bf16.mxu0 0
        %1211 = vmatpush1.bf16.msra.mxu0 0
        %1212 = vmatprep.subr.bf16.mxu0 0
        %1213 = vmatpush1.bf16.msra.mxu0 0
        %1214 = vmatprep.subr.bf16.mxu0 0
        %1215 = vmatpush1.bf16.msra.mxu0 0
        %1216 = vmatprep.subr.bf16.mxu0 0
        %1217 = vmatpush1.bf16.msra.mxu0 0
        %1218 = vmatprep.subr.bf16.mxu0 0
        %1219 = vmatpush1.bf16.msra.mxu0 0
        %1220 = vmatprep.subr.bf16.mxu0 0
        %1221 = vmatpush1.bf16.msra.mxu0 0
        %1222 = vmatprep.subr.bf16.mxu0 0
        %1223 = vmatpush1.bf16.msra.mxu0 0
        %1224 = vmatprep.subr.bf16.mxu0 0
        %1225 = vmatpush1.bf16.msra.mxu0 0
        %1226 = vmatprep.subr.bf16.mxu0 0
        %1227 = vmatpush1.bf16.msra.mxu0 0
        %1228 = vmatprep.mubr.bf16.mxu0 0
        %1229 = vmatmul.mubr.bf16.gmra.mrb[0].mxu0 %v482
        %v1230 = vpop.f32.mrb[0].mxu0
        %v1231 = vadd.f32 0.0, %v1230
        %v1232 = vpop.f32.mrb[0].mxu0
        %v1233 = vpop.f32.mrb[0].mxu0
        %v1234 = vadd.f32 0.0, %v1233
        %v1235 = vpop.f32.mrb[0].mxu0
        %1236 = vmatprep.mubr.bf16.mxu0 0
        %1237 = vmatmul.mubr.bf16.gmra.mrb[0].mxu0 %v485
        %v1238 = vpop.f32.mrb[0].mxu0
        %v1239 = vadd.f32 0.0, %v1238
        %v1240 = vpop.f32.mrb[0].mxu0
        %v1241 = vpop.f32.mrb[0].mxu0
        %v1242 = vadd.f32 0.0, %v1241
        %v1243 = vpop.f32.mrb[0].mxu0
        %1244 = vmatprep.mubr.bf16.mxu0 0
        %1245 = vmatmul.mubr.bf16.gmra.mrb[0].mxu0 %v488
        %v1246 = vpop.f32.mrb[0].mxu0
        %v1247 = vadd.f32 0.0, %v1246
        %v1248 = vpop.f32.mrb[0].mxu0
        %v1249 = vpop.f32.mrb[0].mxu0
        %v1250 = vadd.f32 0.0, %v1249
        %v1251 = vpop.f32.mrb[0].mxu0
        %1252 = vmatprep.mubr.bf16.mxu0 0
        %1253 = vmatmul.mubr.bf16.gmra.mrb[0].mxu0 %v491
        %v1254 = vpop.f32.mrb[0].mxu0
        %v1255 = vadd.f32 0.0, %v1254
        %v1256 = vpop.f32.mrb[0].mxu0
        %v1257 = vpop.f32.mrb[0].mxu0
        %v1258 = vadd.f32 0.0, %v1257
        %v1259 = vpop.f32.mrb[0].mxu0
        %1260 = vmatprep.mubr.bf16.mxu0 0
        %1261 = vmatmul.mubr.bf16.gmra.mrb[0].mxu0 %v494
        %v1262 = vpop.f32.mrb[0].mxu0
        %v1263 = vadd.f32 0.0, %v1262
        %v1264 = vpop.f32.mrb[0].mxu0
        %v1265 = vpop.f32.mrb[0].mxu0
        %v1266 = vadd.f32 0.0, %v1265
        %v1267 = vpop.f32.mrb[0].mxu0
        %1268 = vmatprep.mubr.bf16.mxu0 0
        %1269 = vmatmul.mubr.bf16.gmra.mrb[0].mxu0 %v497
        %v1270 = vpop.f32.mrb[0].mxu0
        %v1271 = vadd.f32 0.0, %v1270
        %v1272 = vpop.f32.mrb[0].mxu0
        %v1273 = vpop.f32.mrb[0].mxu0
        %v1274 = vadd.f32 0.0, %v1273
        %v1275 = vpop.f32.mrb[0].mxu0
        %1276 = vmatprep.mubr.bf16.mxu0 0
        %1277 = vmatmul.mubr.bf16.gmra.mrb[0].mxu0 %v500
        %v1278 = vpop.f32.mrb[0].mxu0
        %v1279 = vadd.f32 0.0, %v1278
        %v1280 = vpop.f32.mrb[0].mxu0
        %v1281 = vpop.f32.mrb[0].mxu0
        %v1282 = vadd.f32 0.0, %v1281
        %v1283 = vpop.f32.mrb[0].mxu0
        %1284 = vmatprep.mubr.bf16.mxu0 0
        %1285 = vmatmul.mubr.bf16.gmra.mrb[0].mxu0 %v503
        %v1286 = vpop.f32.mrb[0].mxu0
        %v1287 = vadd.f32 0.0, %v1286
        %v1288 = vpop.f32.mrb[0].mxu0
        %v1289 = vpop.f32.mrb[0].mxu0
        %v1290 = vadd.f32 0.0, %v1289
        %v1291 = vpop.f32.mrb[0].mxu0
        %1292 = vmatprep.mubr.bf16.mxu0 0
        %1293 = vmatmul.mubr.bf16.gmra.mrb[0].mxu0 %v506
        %v1294 = vpop.f32.mrb[0].mxu0
        %v1295 = vadd.f32 0.0, %v1294
        %v1296 = vpop.f32.mrb[0].mxu0
        %v1297 = vpop.f32.mrb[0].mxu0
        %v1298 = vadd.f32 0.0, %v1297
        %v1299 = vpop.f32.mrb[0].mxu0
        %1300 = vmatprep.mubr.bf16.mxu0 0
        %1301 = vmatmul.mubr.bf16.gmra.mrb[0].mxu0 %v509
        %v1302 = vpop.f32.mrb[0].mxu0
        %v1303 = vadd.f32 0.0, %v1302
        %v1304 = vpop.f32.mrb[0].mxu0
        %v1305 = vpop.f32.mrb[0].mxu0
        %v1306 = vadd.f32 0.0, %v1305
        %v1307 = vpop.f32.mrb[0].mxu0
        %1308 = vmatprep.mubr.bf16.mxu0 0
        %1309 = vmatmul.mubr.bf16.gmra.mrb[0].mxu0 %v512
        %v1310 = vpop.f32.mrb[0].mxu0
        %v1311 = vadd.f32 0.0, %v1310
        %v1312 = vpop.f32.mrb[0].mxu0
        %v1313 = vpop.f32.mrb[0].mxu0
        %v1314 = vadd.f32 0.0, %v1313
        %v1315 = vpop.f32.mrb[0].mxu0
        %1316 = vmatprep.mubr.bf16.mxu0 0
        %1317 = vmatmul.mubr.bf16.gmra.mrb[0].mxu0 %v515
        %v1318 = vpop.f32.mrb[0].mxu0
        %v1319 = vadd.f32 0.0, %v1318
        %v1320 = vpop.f32.mrb[0].mxu0
        %v1321 = vpop.f32.mrb[0].mxu0
        %v1322 = vadd.f32 0.0, %v1321
        %v1323 = vpop.f32.mrb[0].mxu0
        %1324 = vmatprep.mubr.bf16.mxu0 0
        %1325 = vmatmul.mubr.bf16.gmra.mrb[0].mxu0 %v518
        %v1326 = vpop.f32.mrb[0].mxu0
        %v1327 = vadd.f32 0.0, %v1326
        %v1328 = vpop.f32.mrb[0].mxu0
        %v1329 = vpop.f32.mrb[0].mxu0
        %v1330 = vadd.f32 0.0, %v1329
        %v1331 = vpop.f32.mrb[0].mxu0
        %1332 = vmatprep.mubr.bf16.mxu0 0
        %1333 = vmatmul.mubr.bf16.gmra.mrb[0].mxu0 %v521
        %v1334 = vpop.f32.mrb[0].mxu0
        %v1335 = vadd.f32 0.0, %v1334
        %v1336 = vpop.f32.mrb[0].mxu0
        %v1337 = vpop.f32.mrb[0].mxu0
        %v1338 = vadd.f32 0.0, %v1337
        %v1339 = vpop.f32.mrb[0].mxu0
        %1340 = vmatprep.mubr.bf16.mxu0 0
        %1341 = vmatmul.mubr.bf16.gmra.mrb[0].mxu0 %v524
        %v1342 = vpop.f32.mrb[0].mxu0
        %v1343 = vadd.f32 0.0, %v1342
        %v1344 = vpop.f32.mrb[0].mxu0
        %v1345 = vpop.f32.mrb[0].mxu0
        %v1346 = vadd.f32 0.0, %v1345
        %v1347 = vpop.f32.mrb[0].mxu0
        %1348 = vmatprep.mubr.bf16.mxu0 0
        %1349 = vmatmul.mubr.bf16.gmra.mrb[0].mxu0 %v527
        %v1350 = vpop.f32.mrb[0].mxu0
        %v1351 = vadd.f32 0.0, %v1350
        %v1352 = vpop.f32.mrb[0].mxu0
        %v1353 = vpop.f32.mrb[0].mxu0
        %v1354 = vadd.f32 0.0, %v1353
        %v1355 = vpop.f32.mrb[0].mxu0
        %1356 = vmatprep.mubr.bf16.mxu0 0
        %1357 = vmatmul.mubr.bf16.gmra.mrb[0].mxu0 %v530
        %v1358 = vpop.f32.mrb[0].mxu0
        %v1359 = vadd.f32 0.0, %v1358
        %v1360 = vpop.f32.mrb[0].mxu0
        %v1361 = vpop.f32.mrb[0].mxu0
        %v1362 = vadd.f32 0.0, %v1361
        %v1363 = vpop.f32.mrb[0].mxu0
        %1364 = vmatprep.mubr.bf16.mxu0 0
        %1365 = vmatmul.mubr.bf16.gmra.mrb[0].mxu0 %v533
        %v1366 = vpop.f32.mrb[0].mxu0
        %v1367 = vadd.f32 0.0, %v1366
        %v1368 = vpop.f32.mrb[0].mxu0
        %v1369 = vpop.f32.mrb[0].mxu0
        %v1370 = vadd.f32 0.0, %v1369
        %v1371 = vpop.f32.mrb[0].mxu0
        %1372 = vmatprep.mubr.bf16.mxu0 0
        %1373 = vmatmul.mubr.bf16.gmra.mrb[0].mxu0 %v817
        %v1374 = vpop.f32.mrb[0].mxu0
        %v1375 = vadd.f32 0.0, %v1374
        %v1376 = vpop.f32.mrb[0].mxu0
        %v1377 = vpop.f32.mrb[0].mxu0
        %v1378 = vadd.f32 0.0, %v1377
        %v1379 = vpop.f32.mrb[0].mxu0
        %1380 = vmatprep.mubr.bf16.mxu0 0
        %1381 = vmatmul.mubr.bf16.gmra.mrb[0].mxu0 %v820
        %v1382 = vpop.f32.mrb[0].mxu0
        %v1383 = vadd.f32 0.0, %v1382
        %v1384 = vpop.f32.mrb[0].mxu0
        %v1385 = vpop.f32.mrb[0].mxu0
        %v1386 = vadd.f32 0.0, %v1385
        %v1387 = vpop.f32.mrb[0].mxu0
        %1388 = vmatprep.mubr.bf16.mxu0 0
        %1389 = vmatmul.mubr.bf16.gmra.mrb[0].mxu0 %v1191
        %v1390 = vpop.f32.mrb[0].mxu0
        %v1391 = vadd.f32 0.0, %v1390
        %v1392 = vpop.f32.mrb[0].mxu0
        %v1393 = vpop.f32.mrb[0].mxu0
        %v1394 = vadd.f32 0.0, %v1393
        %v1395 = vpop.f32.mrb[0].mxu0
        %1396 = vmatprep.mubr.bf16.mxu0 0
        %1397 = vmatmul.mubr.bf16.gmra.mrb[0].mxu0 %v1194
        %v1398 = vpop.f32.mrb[0].mxu0
        %v1399 = vadd.f32 0.0, %v1398
        %v1400 = vpop.f32.mrb[0].mxu0
        %v1401 = vpop.f32.mrb[0].mxu0
        %v1402 = vadd.f32 0.0, %v1401
        %v1403 = vpop.f32.mrb[0].mxu0
        %1404 = vdwg.mxu0
        %v1405 = vld [vmem:[#allocation2] sm:$0xff]
        %v1406 = vld [vmem:[#allocation2 + $0x8] sm:$0xff]
        %v1407 = vld [vmem:[#allocation2 + $0x10] sm:$0xff]
        %v1408 = vld [vmem:[#allocation2 + $0x18] sm:$0xff]
        %v1409 = vld [vmem:[#allocation2 + $0x20] sm:$0xff]
        %v1410 = vld [vmem:[#allocation2 + $0x28] sm:$0xff]
        %v1411 = vld [vmem:[#allocation2 + $0x30] sm:$0xff]
        %v1412 = vld [vmem:[#allocation2 + $0x38] sm:$0xff]
        %v1413 = vld [vmem:[#allocation2 + $0x40] sm:$0xff]
        %v1414 = vld [vmem:[#allocation2 + $0x48] sm:$0xff]
        %v1415 = vld [vmem:[#allocation2 + $0x50] sm:$0xff]
        %v1416 = vld [vmem:[#allocation2 + $0x58] sm:$0xff]
        %v1417 = vld [vmem:[#allocation2 + $0x60] sm:$0xff]
        %v1418 = vld [vmem:[#allocation2 + $0x68] sm:$0xff]
        %v1419 = vld [vmem:[#allocation2 + $0x70] sm:$0xff]
        %v1420 = vld [vmem:[#allocation2 + $0x78] sm:$0xff]
        %v1421 = vld [vmem:[#allocation2 + $0x80] sm:$0xff]
        %v1422 = vld [vmem:[#allocation2 + $0x88] sm:$0xff]
        %v1423 = vld [vmem:[#allocation2 + $0x90] sm:$0xff]
        %v1424 = vld [vmem:[#allocation2 + $0x98] sm:$0xff]
        %v1425 = vld [vmem:[#allocation2 + $0xa0] sm:$0xff]
        %v1426 = vld [vmem:[#allocation2 + $0xa8] sm:$0xff]
        %v1427 = vld [vmem:[#allocation2 + $0xb0] sm:$0xff]
        %v1428 = vld [vmem:[#allocation2 + $0xb8] sm:$0xff]
        %v1429 = vld [vmem:[#allocation2 + $0xc0] sm:$0xff]
        %v1430 = vld [vmem:[#allocation2 + $0xc8] sm:$0xff]
        %v1431 = vld [vmem:[#allocation2 + $0xd0] sm:$0xff]
        %v1432 = vld [vmem:[#allocation2 + $0xd8] sm:$0xff]
        %v1433 = vld [vmem:[#allocation2 + $0xe0] sm:$0xff]
        %v1434 = vld [vmem:[#allocation2 + $0xe8] sm:$0xff]
        %v1435 = vld [vmem:[#allocation2 + $0xf0] sm:$0xff]
        %v1436 = vld [vmem:[#allocation2 + $0xf8] sm:$0xff]
        %v1437 = vld [vmem:[#allocation2 + $0x100] sm:$0xff]
        %v1438 = vld [vmem:[#allocation2 + $0x108] sm:$0xff]
        %v1439 = vld [vmem:[#allocation2 + $0x110] sm:$0xff]
        %v1440 = vld [vmem:[#allocation2 + $0x118] sm:$0xff]
        %v1441 = vld [vmem:[#allocation2 + $0x120] sm:$0xff]
        %v1442 = vld [vmem:[#allocation2 + $0x128] sm:$0xff]
        %v1443 = vld [vmem:[#allocation2 + $0x130] sm:$0xff]
        %v1444 = vld [vmem:[#allocation2 + $0x138] sm:$0xff]
        %v1445 = vld [vmem:[#allocation2 + $0x140] sm:$0xff]
        %v1446 = vld [vmem:[#allocation2 + $0x148] sm:$0xff]
        %v1447 = vld [vmem:[#allocation2 + $0x150] sm:$0xff]
        %v1448 = vld [vmem:[#allocation2 + $0x158] sm:$0xff]
        %v1449 = vadd.f32 %v1405, %v1231
        %v1450 = vadd.f32 %v1406, %v1234
        %v1451 = vadd.f32 %v1407, %v1239
        %v1452 = vadd.f32 %v1408, %v1242
        %v1453 = vadd.f32 %v1409, %v1247
        %v1454 = vadd.f32 %v1410, %v1250
        %v1455 = vadd.f32 %v1411, %v1255
        %v1456 = vadd.f32 %v1412, %v1258
        %v1457 = vadd.f32 %v1413, %v1263
        %v1458 = vadd.f32 %v1414, %v1266
        %v1459 = vadd.f32 %v1415, %v1271
        %v1460 = vadd.f32 %v1416, %v1274
        %v1461 = vadd.f32 %v1417, %v1279
        %v1462 = vadd.f32 %v1418, %v1282
        %v1463 = vadd.f32 %v1419, %v1287
        %v1464 = vadd.f32 %v1420, %v1290
        %v1465 = vadd.f32 %v1421, %v1295
        %v1466 = vadd.f32 %v1422, %v1298
        %v1467 = vadd.f32 %v1423, %v1303
        %v1468 = vadd.f32 %v1424, %v1306
        %v1469 = vadd.f32 %v1425, %v1311
        %v1470 = vadd.f32 %v1426, %v1314
        %v1471 = vadd.f32 %v1427, %v1319
        %v1472 = vadd.f32 %v1428, %v1322
        %v1473 = vadd.f32 %v1429, %v1327
        %v1474 = vadd.f32 %v1430, %v1330
        %v1475 = vadd.f32 %v1431, %v1335
        %v1476 = vadd.f32 %v1432, %v1338
        %v1477 = vadd.f32 %v1433, %v1343
        %v1478 = vadd.f32 %v1434, %v1346
        %v1479 = vadd.f32 %v1435, %v1351
        %v1480 = vadd.f32 %v1436, %v1354
        %v1481 = vadd.f32 %v1437, %v1359
        %v1482 = vadd.f32 %v1438, %v1362
        %v1483 = vadd.f32 %v1439, %v1367
        %v1484 = vadd.f32 %v1440, %v1370
        %v1485 = vadd.f32 %v1441, %v1375
        %v1486 = vadd.f32 %v1442, %v1378
        %v1487 = vadd.f32 %v1443, %v1383
        %v1488 = vadd.f32 %v1444, %v1386
        %v1489 = vadd.f32 %v1445, %v1391
        %v1490 = vadd.f32 %v1446, %v1394
        %v1491 = vadd.f32 %v1447, %v1399
        %v1492 = vadd.f32 %v1448, %v1402
        %1493 = vst.msk [vmem:[#allocation2] sm:$0xff] %vm744, %v1449
        %1494 = vst.msk [vmem:[#allocation2 + $0x8] sm:$0xff] %vm744, %v1450
        %1495 = vst.msk [vmem:[#allocation2 + $0x10] sm:$0xff] %vm744, %v1451
        %1496 = vst.msk [vmem:[#allocation2 + $0x18] sm:$0xff] %vm744, %v1452
        %1497 = vst.msk [vmem:[#allocation2 + $0x20] sm:$0xff] %vm744, %v1453
        %1498 = vst.msk [vmem:[#allocation2 + $0x28] sm:$0xff] %vm744, %v1454
        %1499 = vst.msk [vmem:[#allocation2 + $0x30] sm:$0xff] %vm744, %v1455
        %1500 = vst.msk [vmem:[#allocation2 + $0x38] sm:$0xff] %vm744, %v1456
        %1501 = vst.msk [vmem:[#allocation2 + $0x40] sm:$0xff] %vm744, %v1457
        %1502 = vst.msk [vmem:[#allocation2 + $0x48] sm:$0xff] %vm744, %v1458
        %1503 = vst.msk [vmem:[#allocation2 + $0x50] sm:$0xff] %vm744, %v1459
        %1504 = vst.msk [vmem:[#allocation2 + $0x58] sm:$0xff] %vm744, %v1460
        %1505 = vst.msk [vmem:[#allocation2 + $0x60] sm:$0xff] %vm744, %v1461
        %1506 = vst.msk [vmem:[#allocation2 + $0x68] sm:$0xff] %vm744, %v1462
        %1507 = vst.msk [vmem:[#allocation2 + $0x70] sm:$0xff] %vm744, %v1463
        %1508 = vst.msk [vmem:[#allocation2 + $0x78] sm:$0xff] %vm744, %v1464
        %1509 = vst.msk [vmem:[#allocation2 + $0x80] sm:$0xff] %vm744, %v1465
        %1510 = vst.msk [vmem:[#allocation2 + $0x88] sm:$0xff] %vm744, %v1466
        %1511 = vst.msk [vmem:[#allocation2 + $0x90] sm:$0xff] %vm744, %v1467
        %1512 = vst.msk [vmem:[#allocation2 + $0x98] sm:$0xff] %vm744, %v1468
        %1513 = vst.msk [vmem:[#allocation2 + $0xa0] sm:$0xff] %vm744, %v1469
        %1514 = vst.msk [vmem:[#allocation2 + $0xa8] sm:$0xff] %vm744, %v1470
        %1515 = vst.msk [vmem:[#allocation2 + $0xb0] sm:$0xff] %vm744, %v1471
        %1516 = vst.msk [vmem:[#allocation2 + $0xb8] sm:$0xff] %vm744, %v1472
        %1517 = vst.msk [vmem:[#allocation2 + $0xc0] sm:$0xff] %vm744, %v1473
        %1518 = vst.msk [vmem:[#allocation2 + $0xc8] sm:$0xff] %vm744, %v1474
        %1519 = vst.msk [vmem:[#allocation2 + $0xd0] sm:$0xff] %vm744, %v1475
        %1520 = vst.msk [vmem:[#allocation2 + $0xd8] sm:$0xff] %vm744, %v1476
        %1521 = vst.msk [vmem:[#allocation2 + $0xe0] sm:$0xff] %vm744, %v1477
        %1522 = vst.msk [vmem:[#allocation2 + $0xe8] sm:$0xff] %vm744, %v1478
        %1523 = vst.msk [vmem:[#allocation2 + $0xf0] sm:$0xff] %vm744, %v1479
        %1524 = vst.msk [vmem:[#allocation2 + $0xf8] sm:$0xff] %vm744, %v1480
        %1525 = vst.msk [vmem:[#allocation2 + $0x100] sm:$0xff] %vm744, %v1481
        %1526 = vst.msk [vmem:[#allocation2 + $0x108] sm:$0xff] %vm744, %v1482
        %1527 = vst.msk [vmem:[#allocation2 + $0x110] sm:$0xff] %vm744, %v1483
        %1528 = vst.msk [vmem:[#allocation2 + $0x118] sm:$0xff] %vm744, %v1484
        %1529 = vst.msk [vmem:[#allocation2 + $0x120] sm:$0xff] %vm744, %v1485
        %1530 = vst.msk [vmem:[#allocation2 + $0x128] sm:$0xff] %vm744, %v1486
        %1531 = vst.msk [vmem:[#allocation2 + $0x130] sm:$0xff] %vm744, %v1487
        %1532 = vst.msk [vmem:[#allocation2 + $0x138] sm:$0xff] %vm744, %v1488
        %1533 = vst.msk [vmem:[#allocation2 + $0x140] sm:$0xff] %vm744, %v1489
        %1534 = vst.msk [vmem:[#allocation2 + $0x148] sm:$0xff] %vm744, %v1490
        %1535 = vst.msk [vmem:[#allocation2 + $0x150] sm:$0xff] %vm744, %v1491
        %1536 = vst.msk [vmem:[#allocation2 + $0x158] sm:$0xff] %vm744, %v1492
        %v1537 = vpack.c.bf16 %v290, %v289
        %v1538 = vpack.c.bf16 %v292, %v291
        %v1539 = vpack.c.bf16 %v294, %v293
        %v1540 = vpack.c.bf16 %v296, %v295
        %v1541 = vpack.c.bf16 %v298, %v297
        %v1542 = vpack.c.bf16 %v300, %v299
        %v1543 = vpack.c.bf16 %v302, %v301
        %v1544 = vpack.c.bf16 %v304, %v303
        %v1545 = vpack.c.bf16 %v306, %v305
        %v1546 = vpack.c.bf16 %v308, %v307
        %v1547 = vpack.c.bf16 %v310, %v309
        %v1548 = vpack.c.bf16 %v312, %v311
        %v1549 = vpack.c.bf16 %v314, %v313
        %v1550 = vpack.c.bf16 %v316, %v315
        %v1551 = vpack.c.bf16 %v318, %v317
        %v1552 = vpack.c.bf16 %v320, %v319
        %v1553 = vpack.c.bf16 %v322, %v321
        %v1554 = vpack.c.bf16 %v324, %v323
        %v1555 = vpack.c.bf16 %v326, %v325
        %v1556 = vpack.c.bf16 %v328, %v327
        %v1557 = vpack.c.bf16 %v330, %v329
        %v1558 = vpack.c.bf16 %v332, %v331
        %v1559 = vpack.c.bf16 %v334, %v333
        %v1560 = vpack.c.bf16 %v336, %v335
        %v1561 = vpack.c.bf16 %v338, %v337
        %v1562 = vpack.c.bf16 %v340, %v339
        %v1563 = vpack.c.bf16 %v341, %v341
        %s1564 = scalar_lea.vmem [#allocation5], 16
        %v1565 = vld [vmem:[%s1564] sm:$0xf]
        %v1566 = vld [vmem:[%s1564 + $0x4] sm:$0xf]
        %v1567 = vld [vmem:[%s1564 + $0x8] sm:$0xf]
        %v1568 = vld [vmem:[%s1564 + $0xc] sm:$0xf]
        %vm1569 = vsmask.f32 7424
        %v1571 = vshrl.u32 %v1537, 16
        %v1573 = vshll.u32 %v1537, 16
        %v1575 = vrot.slane %v1573, 1
        %v1576 = vor.u32 %v1571, %v1575
        %v1578 = vshll.u32 %v1538, 16
        %v1580 = vrot.slane %v1578, 1
        %v1581 = vsel %vm1569, %v1576, %v1580
        %v1582 = vshrl.u32 %v1538, 16
        %v1584 = vor.u32 %v1582, %v1580
        %v1586 = vshll.u32 %v1539, 16
        %v1588 = vrot.slane %v1586, 1
        %v1589 = vsel %vm1569, %v1584, %v1588
        %v1590 = vshrl.u32 %v1539, 16
        %v1592 = vor.u32 %v1590, %v1588
        %v1594 = vshll.u32 %v1540, 16
        %v1596 = vrot.slane %v1594, 1
        %v1597 = vsel %vm1569, %v1592, %v1596
        %v1598 = vshrl.u32 %v1540, 16
        %v1600 = vor.u32 %v1598, %v1596
        %v1602 = vshll.u32 %v1541, 16
        %v1604 = vrot.slane %v1602, 1
        %v1605 = vsel %vm1569, %v1600, %v1604
        %v1606 = vshrl.u32 %v1541, 16
        %v1608 = vor.u32 %v1606, %v1604
        %v1610 = vshll.u32 %v1542, 16
        %v1612 = vrot.slane %v1610, 1
        %v1613 = vsel %vm1569, %v1608, %v1612
        %v1614 = vshrl.u32 %v1542, 16
        %v1616 = vor.u32 %v1614, %v1612
        %v1618 = vshll.u32 %v1543, 16
        %v1620 = vrot.slane %v1618, 1
        %v1621 = vsel %vm1569, %v1616, %v1620
        %v1622 = vshrl.u32 %v1543, 16
        %v1624 = vor.u32 %v1622, %v1620
        %v1626 = vshll.u32 %v1544, 16
        %v1628 = vrot.slane %v1626, 1
        %v1629 = vsel %vm1569, %v1624, %v1628
        %v1630 = vshrl.u32 %v1544, 16
        %v1632 = vor.u32 %v1630, %v1628
        %v1634 = vshll.u32 %v1545, 16
        %v1636 = vrot.slane %v1634, 1
        %v1637 = vsel %vm1569, %v1632, %v1636
        %v1638 = vshrl.u32 %v1545, 16
        %v1640 = vor.u32 %v1638, %v1636
        %v1642 = vshll.u32 %v1546, 16
        %v1644 = vrot.slane %v1642, 1
        %v1645 = vsel %vm1569, %v1640, %v1644
        %v1646 = vshrl.u32 %v1546, 16
        %v1648 = vor.u32 %v1646, %v1644
        %v1650 = vshll.u32 %v1547, 16
        %v1652 = vrot.slane %v1650, 1
        %v1653 = vsel %vm1569, %v1648, %v1652
        %v1654 = vshrl.u32 %v1547, 16
        %v1656 = vor.u32 %v1654, %v1652
        %v1658 = vshll.u32 %v1548, 16
        %v1660 = vrot.slane %v1658, 1
        %v1661 = vsel %vm1569, %v1656, %v1660
        %v1662 = vshrl.u32 %v1548, 16
        %v1664 = vor.u32 %v1662, %v1660
        %v1666 = vshll.u32 %v1549, 16
        %v1668 = vrot.slane %v1666, 1
        %v1669 = vsel %vm1569, %v1664, %v1668
        %v1670 = vshrl.u32 %v1549, 16
        %v1672 = vor.u32 %v1670, %v1668
        %v1674 = vshll.u32 %v1550, 16
        %v1676 = vrot.slane %v1674, 1
        %v1677 = vsel %vm1569, %v1672, %v1676
        %v1678 = vshrl.u32 %v1550, 16
        %v1680 = vor.u32 %v1678, %v1676
        %v1682 = vshll.u32 %v1551, 16
        %v1684 = vrot.slane %v1682, 1
        %v1685 = vsel %vm1569, %v1680, %v1684
        %v1686 = vshrl.u32 %v1551, 16
        %v1688 = vor.u32 %v1686, %v1684
        %v1690 = vshll.u32 %v1552, 16
        %v1692 = vrot.slane %v1690, 1
        %v1693 = vsel %vm1569, %v1688, %v1692
        %v1694 = vshrl.u32 %v1552, 16
        %v1696 = vor.u32 %v1694, %v1692
        %v1698 = vshll.u32 %v1553, 16
        %v1700 = vrot.slane %v1698, 1
        %v1701 = vsel %vm1569, %v1696, %v1700
        %v1702 = vshrl.u32 %v1553, 16
        %v1704 = vor.u32 %v1702, %v1700
        %v1706 = vshll.u32 %v1554, 16
        %v1708 = vrot.slane %v1706, 1
        %v1709 = vsel %vm1569, %v1704, %v1708
        %v1710 = vshrl.u32 %v1554, 16
        %v1712 = vor.u32 %v1710, %v1708
        %v1714 = vshll.u32 %v1555, 16
        %v1716 = vrot.slane %v1714, 1
        %v1717 = vsel %vm1569, %v1712, %v1716
        %v1718 = vshrl.u32 %v1555, 16
        %v1720 = vor.u32 %v1718, %v1716
        %v1722 = vshll.u32 %v1556, 16
        %v1724 = vrot.slane %v1722, 1
        %v1725 = vsel %vm1569, %v1720, %v1724
        %v1726 = vshrl.u32 %v1556, 16
        %v1728 = vor.u32 %v1726, %v1724
        %v1730 = vshll.u32 %v1557, 16
        %v1732 = vrot.slane %v1730, 1
        %v1733 = vsel %vm1569, %v1728, %v1732
        %v1734 = vshrl.u32 %v1557, 16
        %v1736 = vor.u32 %v1734, %v1732
        %v1738 = vshll.u32 %v1558, 16
        %v1740 = vrot.slane %v1738, 1
        %v1741 = vsel %vm1569, %v1736, %v1740
        %v1742 = vshrl.u32 %v1558, 16
        %v1744 = vor.u32 %v1742, %v1740
        %v1746 = vshll.u32 %v1559, 16
        %v1748 = vrot.slane %v1746, 1
        %v1749 = vsel %vm1569, %v1744, %v1748
        %v1754 = vunpack.c.l.b16 %v1565
        %v1755 = vunpack.c.l.b16 %v1566
        %v1756 = vunpack.c.l.b16 %v1567
        %v1757 = vunpack.c.l.b16 %v1568
        %v1758 = vpack.c.b16 %v1755, %v1754
        %v1759 = vpack.c.b16 %v1757, %v1756
        %v1763 = vsel %vm468, %v1581, 0
        %v1766 = vsel %vm468, %v1589, 0
        %v1769 = vsel %vm468, %v1597, 0
        %v1772 = vsel %vm468, %v1605, 0
        %v1775 = vsel %vm468, %v1613, 0
        %v1778 = vsel %vm468, %v1621, 0
        %v1781 = vsel %vm468, %v1629, 0
        %v1784 = vsel %vm468, %v1637, 0
        %v1787 = vsel %vm468, %v1645, 0
        %v1790 = vsel %vm468, %v1653, 0
        %v1793 = vsel %vm468, %v1661, 0
        %v1796 = vsel %vm468, %v1669, 0
        %v1799 = vsel %vm468, %v1677, 0
        %v1802 = vsel %vm468, %v1685, 0
        %v1805 = vsel %vm468, %v1693, 0
        %v1808 = vsel %vm468, %v1701, 0
        %v1811 = vsel %vm468, %v1709, 0
        %v1814 = vsel %vm468, %v1717, 0
        %v1817 = vsel %vm468, %v1725, 0
        %v1820 = vsel %vm468, %v1733, 0
        %v1823 = vsel %vm468, %v1741, 0
        %v1826 = vsel %vm468, %v1749, 0
        %1828 = vmatprep.subr.bf16.mxu0 0
        %1829 = vmatpush1.bf16.msra.mxu0 %v1758
        %1830 = vmatprep.subr.bf16.mxu0 0
        %1831 = vmatpush1.bf16.msra.mxu0 %v1759
        %1832 = vmatprep.subr.bf16.mxu0 0
        %1833 = vmatpush1.bf16.msra.mxu0 0
        %1834 = vmatprep.subr.bf16.mxu0 0
        %1835 = vmatpush1.bf16.msra.mxu0 0
        %1836 = vmatprep.subr.bf16.mxu0 0
        %1837 = vmatpush1.bf16.msra.mxu0 0
        %1838 = vmatprep.subr.bf16.mxu0 0
        %1839 = vmatpush1.bf16.msra.mxu0 0
        %1840 = vmatprep.subr.bf16.mxu0 0
        %1841 = vmatpush1.bf16.msra.mxu0 0
        %1842 = vmatprep.subr.bf16.mxu0 0
        %1843 = vmatpush1.bf16.msra.mxu0 0
        %1844 = vmatprep.subr.bf16.mxu0 0
        %1845 = vmatpush1.bf16.msra.mxu0 0
        %1846 = vmatprep.subr.bf16.mxu0 0
        %1847 = vmatpush1.bf16.msra.mxu0 0
        %1848 = vmatprep.subr.bf16.mxu0 0
        %1849 = vmatpush1.bf16.msra.mxu0 0
        %1850 = vmatprep.subr.bf16.mxu0 0
        %1851 = vmatpush1.bf16.msra.mxu0 0
        %1852 = vmatprep.subr.bf16.mxu0 0
        %1853 = vmatpush1.bf16.msra.mxu0 0
        %1854 = vmatprep.subr.bf16.mxu0 0
        %1855 = vmatpush1.bf16.msra.mxu0 0
        %1856 = vmatprep.subr.bf16.mxu0 0
        %1857 = vmatpush1.bf16.msra.mxu0 0
        %1858 = vmatprep.subr.bf16.mxu0 0
        %1859 = vmatpush1.bf16.msra.mxu0 0
        %1860 = vmatprep.mubr.bf16.mxu0 0
        %1861 = vmatmul.mubr.bf16.gmra.mrb[0].mxu0 %v1763
        %v1862 = vpop.f32.mrb[0].mxu0
        %v1863 = vadd.f32 0.0, %v1862
        %v1864 = vpop.f32.mrb[0].mxu0
        %v1865 = vpop.f32.mrb[0].mxu0
        %v1866 = vadd.f32 0.0, %v1865
        %v1867 = vpop.f32.mrb[0].mxu0
        %1868 = vmatprep.mubr.bf16.mxu0 0
        %1869 = vmatmul.mubr.bf16.gmra.mrb[0].mxu0 %v1766
        %v1870 = vpop.f32.mrb[0].mxu0
        %v1871 = vadd.f32 0.0, %v1870
        %v1872 = vpop.f32.mrb[0].mxu0
        %v1873 = vpop.f32.mrb[0].mxu0
        %v1874 = vadd.f32 0.0, %v1873
        %v1875 = vpop.f32.mrb[0].mxu0
        %1876 = vmatprep.mubr.bf16.mxu0 0
        %1877 = vmatmul.mubr.bf16.gmra.mrb[0].mxu0 %v1769
        %v1878 = vpop.f32.mrb[0].mxu0
        %v1879 = vadd.f32 0.0, %v1878
        %v1880 = vpop.f32.mrb[0].mxu0
        %v1881 = vpop.f32.mrb[0].mxu0
        %v1882 = vadd.f32 0.0, %v1881
        %v1883 = vpop.f32.mrb[0].mxu0
        %1884 = vmatprep.mubr.bf16.mxu0 0
        %1885 = vmatmul.mubr.bf16.gmra.mrb[0].mxu0 %v1772
        %v1886 = vpop.f32.mrb[0].mxu0
        %v1887 = vadd.f32 0.0, %v1886
        %v1888 = vpop.f32.mrb[0].mxu0
        %v1889 = vpop.f32.mrb[0].mxu0
        %v1890 = vadd.f32 0.0, %v1889
        %v1891 = vpop.f32.mrb[0].mxu0
        %1892 = vmatprep.mubr.bf16.mxu0 0
        %1893 = vmatmul.mubr.bf16.gmra.mrb[0].mxu0 %v1775
        %v1894 = vpop.f32.mrb[0].mxu0
        %v1895 = vadd.f32 0.0, %v1894
        %v1896 = vpop.f32.mrb[0].mxu0
        %v1897 = vpop.f32.mrb[0].mxu0
        %v1898 = vadd.f32 0.0, %v1897
        %v1899 = vpop.f32.mrb[0].mxu0
        %1900 = vmatprep.mubr.bf16.mxu0 0
        %1901 = vmatmul.mubr.bf16.gmra.mrb[0].mxu0 %v1778
        %v1902 = vpop.f32.mrb[0].mxu0
        %v1903 = vadd.f32 0.0, %v1902
        %v1904 = vpop.f32.mrb[0].mxu0
        %v1905 = vpop.f32.mrb[0].mxu0
        %v1906 = vadd.f32 0.0, %v1905
        %v1907 = vpop.f32.mrb[0].mxu0
        %1908 = vmatprep.mubr.bf16.mxu0 0
        %1909 = vmatmul.mubr.bf16.gmra.mrb[0].mxu0 %v1781
        %v1910 = vpop.f32.mrb[0].mxu0
        %v1911 = vadd.f32 0.0, %v1910
        %v1912 = vpop.f32.mrb[0].mxu0
        %v1913 = vpop.f32.mrb[0].mxu0
        %v1914 = vadd.f32 0.0, %v1913
        %v1915 = vpop.f32.mrb[0].mxu0
        %1916 = vmatprep.mubr.bf16.mxu0 0
        %1917 = vmatmul.mubr.bf16.gmra.mrb[0].mxu0 %v1784
        %v1918 = vpop.f32.mrb[0].mxu0
        %v1919 = vadd.f32 0.0, %v1918
        %v1920 = vpop.f32.mrb[0].mxu0
        %v1921 = vpop.f32.mrb[0].mxu0
        %v1922 = vadd.f32 0.0, %v1921
        %v1923 = vpop.f32.mrb[0].mxu0
        %1924 = vmatprep.mubr.bf16.mxu0 0
        %1925 = vmatmul.mubr.bf16.gmra.mrb[0].mxu0 %v1787
        %v1926 = vpop.f32.mrb[0].mxu0
        %v1927 = vadd.f32 0.0, %v1926
        %v1928 = vpop.f32.mrb[0].mxu0
        %v1929 = vpop.f32.mrb[0].mxu0
        %v1930 = vadd.f32 0.0, %v1929
        %v1931 = vpop.f32.mrb[0].mxu0
        %1932 = vmatprep.mubr.bf16.mxu0 0
        %1933 = vmatmul.mubr.bf16.gmra.mrb[0].mxu0 %v1790
        %v1934 = vpop.f32.mrb[0].mxu0
        %v1935 = vadd.f32 0.0, %v1934
        %v1936 = vpop.f32.mrb[0].mxu0
        %v1937 = vpop.f32.mrb[0].mxu0
        %v1938 = vadd.f32 0.0, %v1937
        %v1939 = vpop.f32.mrb[0].mxu0
        %1940 = vmatprep.mubr.bf16.mxu0 0
        %1941 = vmatmul.mubr.bf16.gmra.mrb[0].mxu0 %v1793
        %v1942 = vpop.f32.mrb[0].mxu0
        %v1943 = vadd.f32 0.0, %v1942
        %v1944 = vpop.f32.mrb[0].mxu0
        %v1945 = vpop.f32.mrb[0].mxu0
        %v1946 = vadd.f32 0.0, %v1945
        %v1947 = vpop.f32.mrb[0].mxu0
        %1948 = vmatprep.mubr.bf16.mxu0 0
        %1949 = vmatmul.mubr.bf16.gmra.mrb[0].mxu0 %v1796
        %v1950 = vpop.f32.mrb[0].mxu0
        %v1951 = vadd.f32 0.0, %v1950
        %v1952 = vpop.f32.mrb[0].mxu0
        %v1953 = vpop.f32.mrb[0].mxu0
        %v1954 = vadd.f32 0.0, %v1953
        %v1955 = vpop.f32.mrb[0].mxu0
        %1956 = vmatprep.mubr.bf16.mxu0 0
        %1957 = vmatmul.mubr.bf16.gmra.mrb[0].mxu0 %v1799
        %v1958 = vpop.f32.mrb[0].mxu0
        %v1959 = vadd.f32 0.0, %v1958
        %v1960 = vpop.f32.mrb[0].mxu0
        %v1961 = vpop.f32.mrb[0].mxu0
        %v1962 = vadd.f32 0.0, %v1961
        %v1963 = vpop.f32.mrb[0].mxu0
        %1964 = vmatprep.mubr.bf16.mxu0 0
        %1965 = vmatmul.mubr.bf16.gmra.mrb[0].mxu0 %v1802
        %v1966 = vpop.f32.mrb[0].mxu0
        %v1967 = vadd.f32 0.0, %v1966
        %v1968 = vpop.f32.mrb[0].mxu0
        %v1969 = vpop.f32.mrb[0].mxu0
        %v1970 = vadd.f32 0.0, %v1969
        %v1971 = vpop.f32.mrb[0].mxu0
        %1972 = vmatprep.mubr.bf16.mxu0 0
        %1973 = vmatmul.mubr.bf16.gmra.mrb[0].mxu0 %v1805
        %v1974 = vpop.f32.mrb[0].mxu0
        %v1975 = vadd.f32 0.0, %v1974
        %v1976 = vpop.f32.mrb[0].mxu0
        %v1977 = vpop.f32.mrb[0].mxu0
        %v1978 = vadd.f32 0.0, %v1977
        %v1979 = vpop.f32.mrb[0].mxu0
        %1980 = vmatprep.mubr.bf16.mxu0 0
        %1981 = vmatmul.mubr.bf16.gmra.mrb[0].mxu0 %v1808
        %v1982 = vpop.f32.mrb[0].mxu0
        %v1983 = vadd.f32 0.0, %v1982
        %v1984 = vpop.f32.mrb[0].mxu0
        %v1985 = vpop.f32.mrb[0].mxu0
        %v1986 = vadd.f32 0.0, %v1985
        %v1987 = vpop.f32.mrb[0].mxu0
        %1988 = vmatprep.mubr.bf16.mxu0 0
        %1989 = vmatmul.mubr.bf16.gmra.mrb[0].mxu0 %v1811
        %v1990 = vpop.f32.mrb[0].mxu0
        %v1991 = vadd.f32 0.0, %v1990
        %v1992 = vpop.f32.mrb[0].mxu0
        %v1993 = vpop.f32.mrb[0].mxu0
        %v1994 = vadd.f32 0.0, %v1993
        %v1995 = vpop.f32.mrb[0].mxu0
        %1996 = vmatprep.mubr.bf16.mxu0 0
        %1997 = vmatmul.mubr.bf16.gmra.mrb[0].mxu0 %v1814
        %v1998 = vpop.f32.mrb[0].mxu0
        %v1999 = vadd.f32 0.0, %v1998
        %v2000 = vpop.f32.mrb[0].mxu0
        %v2001 = vpop.f32.mrb[0].mxu0
        %v2002 = vadd.f32 0.0, %v2001
        %v2003 = vpop.f32.mrb[0].mxu0
        %2004 = vmatprep.mubr.bf16.mxu0 0
        %2005 = vmatmul.mubr.bf16.gmra.mrb[0].mxu0 %v1817
        %v2006 = vpop.f32.mrb[0].mxu0
        %v2007 = vadd.f32 0.0, %v2006
        %v2008 = vpop.f32.mrb[0].mxu0
        %v2009 = vpop.f32.mrb[0].mxu0
        %v2010 = vadd.f32 0.0, %v2009
        %v2011 = vpop.f32.mrb[0].mxu0
        %2012 = vmatprep.mubr.bf16.mxu0 0
        %2013 = vmatmul.mubr.bf16.gmra.mrb[0].mxu0 %v1820
        %v2014 = vpop.f32.mrb[0].mxu0
        %v2015 = vadd.f32 0.0, %v2014
        %v2016 = vpop.f32.mrb[0].mxu0
        %v2017 = vpop.f32.mrb[0].mxu0
        %v2018 = vadd.f32 0.0, %v2017
        %v2019 = vpop.f32.mrb[0].mxu0
        %2020 = vmatprep.mubr.bf16.mxu0 0
        %2021 = vmatmul.mubr.bf16.gmra.mrb[0].mxu0 %v1823
        %v2022 = vpop.f32.mrb[0].mxu0
        %v2023 = vadd.f32 0.0, %v2022
        %v2024 = vpop.f32.mrb[0].mxu0
        %v2025 = vpop.f32.mrb[0].mxu0
        %v2026 = vadd.f32 0.0, %v2025
        %v2027 = vpop.f32.mrb[0].mxu0
        %2028 = vmatprep.mubr.bf16.mxu0 0
        %2029 = vmatmul.mubr.bf16.gmra.mrb[0].mxu0 %v1826
        %v2030 = vpop.f32.mrb[0].mxu0
        %v2031 = vadd.f32 0.0, %v2030
        %v2032 = vpop.f32.mrb[0].mxu0
        %v2033 = vpop.f32.mrb[0].mxu0
        %v2034 = vadd.f32 0.0, %v2033
        %v2035 = vpop.f32.mrb[0].mxu0
        %2036 = vdwg.mxu0
        %v2037 = vld [vmem:[#allocation2] sm:$0xff]
        %v2038 = vld [vmem:[#allocation2 + $0x8] sm:$0xff]
        %v2039 = vld [vmem:[#allocation2 + $0x10] sm:$0xff]
        %v2040 = vld [vmem:[#allocation2 + $0x18] sm:$0xff]
        %v2041 = vld [vmem:[#allocation2 + $0x20] sm:$0xff]
        %v2042 = vld [vmem:[#allocation2 + $0x28] sm:$0xff]
        %v2043 = vld [vmem:[#allocation2 + $0x30] sm:$0xff]
        %v2044 = vld [vmem:[#allocation2 + $0x38] sm:$0xff]
        %v2045 = vld [vmem:[#allocation2 + $0x40] sm:$0xff]
        %v2046 = vld [vmem:[#allocation2 + $0x48] sm:$0xff]
        %v2047 = vld [vmem:[#allocation2 + $0x50] sm:$0xff]
        %v2048 = vld [vmem:[#allocation2 + $0x58] sm:$0xff]
        %v2049 = vld [vmem:[#allocation2 + $0x60] sm:$0xff]
        %v2050 = vld [vmem:[#allocation2 + $0x68] sm:$0xff]
        %v2051 = vld [vmem:[#allocation2 + $0x70] sm:$0xff]
        %v2052 = vld [vmem:[#allocation2 + $0x78] sm:$0xff]
        %v2053 = vld [vmem:[#allocation2 + $0x80] sm:$0xff]
        %v2054 = vld [vmem:[#allocation2 + $0x88] sm:$0xff]
        %v2055 = vld [vmem:[#allocation2 + $0x90] sm:$0xff]
        %v2056 = vld [vmem:[#allocation2 + $0x98] sm:$0xff]
        %v2057 = vld [vmem:[#allocation2 + $0xa0] sm:$0xff]
        %v2058 = vld [vmem:[#allocation2 + $0xa8] sm:$0xff]
        %v2059 = vld [vmem:[#allocation2 + $0xb0] sm:$0xff]
        %v2060 = vld [vmem:[#allocation2 + $0xb8] sm:$0xff]
        %v2061 = vld [vmem:[#allocation2 + $0xc0] sm:$0xff]
        %v2062 = vld [vmem:[#allocation2 + $0xc8] sm:$0xff]
        %v2063 = vld [vmem:[#allocation2 + $0xd0] sm:$0xff]
        %v2064 = vld [vmem:[#allocation2 + $0xd8] sm:$0xff]
        %v2065 = vld [vmem:[#allocation2 + $0xe0] sm:$0xff]
        %v2066 = vld [vmem:[#allocation2 + $0xe8] sm:$0xff]
        %v2067 = vld [vmem:[#allocation2 + $0xf0] sm:$0xff]
        %v2068 = vld [vmem:[#allocation2 + $0xf8] sm:$0xff]
        %v2069 = vld [vmem:[#allocation2 + $0x100] sm:$0xff]
        %v2070 = vld [vmem:[#allocation2 + $0x108] sm:$0xff]
        %v2071 = vld [vmem:[#allocation2 + $0x110] sm:$0xff]
        %v2072 = vld [vmem:[#allocation2 + $0x118] sm:$0xff]
        %v2073 = vld [vmem:[#allocation2 + $0x120] sm:$0xff]
        %v2074 = vld [vmem:[#allocation2 + $0x128] sm:$0xff]
        %v2075 = vld [vmem:[#allocation2 + $0x130] sm:$0xff]
        %v2076 = vld [vmem:[#allocation2 + $0x138] sm:$0xff]
        %v2077 = vld [vmem:[#allocation2 + $0x140] sm:$0xff]
        %v2078 = vld [vmem:[#allocation2 + $0x148] sm:$0xff]
        %v2079 = vld [vmem:[#allocation2 + $0x150] sm:$0xff]
        %v2080 = vld [vmem:[#allocation2 + $0x158] sm:$0xff]
        %v2081 = vadd.f32 %v2037, %v1863
        %v2082 = vadd.f32 %v2038, %v1866
        %v2083 = vadd.f32 %v2039, %v1871
        %v2084 = vadd.f32 %v2040, %v1874
        %v2085 = vadd.f32 %v2041, %v1879
        %v2086 = vadd.f32 %v2042, %v1882
        %v2087 = vadd.f32 %v2043, %v1887
        %v2088 = vadd.f32 %v2044, %v1890
        %v2089 = vadd.f32 %v2045, %v1895
        %v2090 = vadd.f32 %v2046, %v1898
        %v2091 = vadd.f32 %v2047, %v1903
        %v2092 = vadd.f32 %v2048, %v1906
        %v2093 = vadd.f32 %v2049, %v1911
        %v2094 = vadd.f32 %v2050, %v1914
        %v2095 = vadd.f32 %v2051, %v1919
        %v2096 = vadd.f32 %v2052, %v1922
        %v2097 = vadd.f32 %v2053, %v1927
        %v2098 = vadd.f32 %v2054, %v1930
        %v2099 = vadd.f32 %v2055, %v1935
        %v2100 = vadd.f32 %v2056, %v1938
        %v2101 = vadd.f32 %v2057, %v1943
        %v2102 = vadd.f32 %v2058, %v1946
        %v2103 = vadd.f32 %v2059, %v1951
        %v2104 = vadd.f32 %v2060, %v1954
        %v2105 = vadd.f32 %v2061, %v1959
        %v2106 = vadd.f32 %v2062, %v1962
        %v2107 = vadd.f32 %v2063, %v1967
        %v2108 = vadd.f32 %v2064, %v1970
        %v2109 = vadd.f32 %v2065, %v1975
        %v2110 = vadd.f32 %v2066, %v1978
        %v2111 = vadd.f32 %v2067, %v1983
        %v2112 = vadd.f32 %v2068, %v1986
        %v2113 = vadd.f32 %v2069, %v1991
        %v2114 = vadd.f32 %v2070, %v1994
        %v2115 = vadd.f32 %v2071, %v1999
        %v2116 = vadd.f32 %v2072, %v2002
        %v2117 = vadd.f32 %v2073, %v2007
        %v2118 = vadd.f32 %v2074, %v2010
        %v2119 = vadd.f32 %v2075, %v2015
        %v2120 = vadd.f32 %v2076, %v2018
        %v2121 = vadd.f32 %v2077, %v2023
        %v2122 = vadd.f32 %v2078, %v2026
        %v2123 = vadd.f32 %v2079, %v2031
        %v2124 = vadd.f32 %v2080, %v2034
        %2125 = vst.msk [vmem:[#allocation2] sm:$0xff] %vm744, %v2081
        %2126 = vst.msk [vmem:[#allocation2 + $0x8] sm:$0xff] %vm744, %v2082
        %2127 = vst.msk [vmem:[#allocation2 + $0x10] sm:$0xff] %vm744, %v2083
        %2128 = vst.msk [vmem:[#allocation2 + $0x18] sm:$0xff] %vm744, %v2084
        %2129 = vst.msk [vmem:[#allocation2 + $0x20] sm:$0xff] %vm744, %v2085
        %2130 = vst.msk [vmem:[#allocation2 + $0x28] sm:$0xff] %vm744, %v2086
        %2131 = vst.msk [vmem:[#allocation2 + $0x30] sm:$0xff] %vm744, %v2087
        %2132 = vst.msk [vmem:[#allocation2 + $0x38] sm:$0xff] %vm744, %v2088
        %2133 = vst.msk [vmem:[#allocation2 + $0x40] sm:$0xff] %vm744, %v2089
        %2134 = vst.msk [vmem:[#allocation2 + $0x48] sm:$0xff] %vm744, %v2090
        %2135 = vst.msk [vmem:[#allocation2 + $0x50] sm:$0xff] %vm744, %v2091
        %2136 = vst.msk [vmem:[#allocation2 + $0x58] sm:$0xff] %vm744, %v2092
        %2137 = vst.msk [vmem:[#allocation2 + $0x60] sm:$0xff] %vm744, %v2093
        %2138 = vst.msk [vmem:[#allocation2 + $0x68] sm:$0xff] %vm744, %v2094
        %2139 = vst.msk [vmem:[#allocation2 + $0x70] sm:$0xff] %vm744, %v2095
        %2140 = vst.msk [vmem:[#allocation2 + $0x78] sm:$0xff] %vm744, %v2096
        %2141 = vst.msk [vmem:[#allocation2 + $0x80] sm:$0xff] %vm744, %v2097
        %2142 = vst.msk [vmem:[#allocation2 + $0x88] sm:$0xff] %vm744, %v2098
        %2143 = vst.msk [vmem:[#allocation2 + $0x90] sm:$0xff] %vm744, %v2099
        %2144 = vst.msk [vmem:[#allocation2 + $0x98] sm:$0xff] %vm744, %v2100
        %2145 = vst.msk [vmem:[#allocation2 + $0xa0] sm:$0xff] %vm744, %v2101
        %2146 = vst.msk [vmem:[#allocation2 + $0xa8] sm:$0xff] %vm744, %v2102
        %2147 = vst.msk [vmem:[#allocation2 + $0xb0] sm:$0xff] %vm744, %v2103
        %2148 = vst.msk [vmem:[#allocation2 + $0xb8] sm:$0xff] %vm744, %v2104
        %2149 = vst.msk [vmem:[#allocation2 + $0xc0] sm:$0xff] %vm744, %v2105
        %2150 = vst.msk [vmem:[#allocation2 + $0xc8] sm:$0xff] %vm744, %v2106
        %2151 = vst.msk [vmem:[#allocation2 + $0xd0] sm:$0xff] %vm744, %v2107
        %2152 = vst.msk [vmem:[#allocation2 + $0xd8] sm:$0xff] %vm744, %v2108
        %2153 = vst.msk [vmem:[#allocation2 + $0xe0] sm:$0xff] %vm744, %v2109
        %2154 = vst.msk [vmem:[#allocation2 + $0xe8] sm:$0xff] %vm744, %v2110
        %2155 = vst.msk [vmem:[#allocation2 + $0xf0] sm:$0xff] %vm744, %v2111
        %2156 = vst.msk [vmem:[#allocation2 + $0xf8] sm:$0xff] %vm744, %v2112
        %2157 = vst.msk [vmem:[#allocation2 + $0x100] sm:$0xff] %vm744, %v2113
        %2158 = vst.msk [vmem:[#allocation2 + $0x108] sm:$0xff] %vm744, %v2114
        %2159 = vst.msk [vmem:[#allocation2 + $0x110] sm:$0xff] %vm744, %v2115
        %2160 = vst.msk [vmem:[#allocation2 + $0x118] sm:$0xff] %vm744, %v2116
        %2161 = vst.msk [vmem:[#allocation2 + $0x120] sm:$0xff] %vm744, %v2117
        %2162 = vst.msk [vmem:[#allocation2 + $0x128] sm:$0xff] %vm744, %v2118
        %2163 = vst.msk [vmem:[#allocation2 + $0x130] sm:$0xff] %vm744, %v2119
        %2164 = vst.msk [vmem:[#allocation2 + $0x138] sm:$0xff] %vm744, %v2120
        %2165 = vst.msk [vmem:[#allocation2 + $0x140] sm:$0xff] %vm744, %v2121
        %2166 = vst.msk [vmem:[#allocation2 + $0x148] sm:$0xff] %vm744, %v2122
        %2167 = vst.msk [vmem:[#allocation2 + $0x150] sm:$0xff] %vm744, %v2123
        %2168 = vst.msk [vmem:[#allocation2 + $0x158] sm:$0xff] %vm744, %v2124
        %s2169 = scalar_lea.vmem [#allocation5], 64
        %v2170 = vld [vmem:[%s2169] sm:$0xf]
        %v2171 = vld [vmem:[%s2169 + $0x4] sm:$0xf]
        %v2172 = vld [vmem:[%s2169 + $0x8] sm:$0xf]
        %v2173 = vld [vmem:[%s2169 + $0xc] sm:$0xf]
        %v2174 = vshrl.u32 %v1559, 16
        %v2176 = vor.u32 %v2174, %v1748
        %v2178 = vshll.u32 %v1560, 16
        %v2180 = vrot.slane %v2178, 1
        %v2181 = vsel %vm1569, %v2176, %v2180
        %v2182 = vshrl.u32 %v1560, 16
        %v2184 = vor.u32 %v2182, %v2180
        %v2186 = vshll.u32 %v1561, 16
        %v2188 = vrot.slane %v2186, 1
        %v2189 = vsel %vm1569, %v2184, %v2188
        %v2194 = vunpack.c.l.b16 %v2170
        %v2195 = vunpack.c.l.b16 %v2171
        %v2196 = vunpack.c.l.b16 %v2172
        %v2197 = vunpack.c.l.b16 %v2173
        %v2198 = vpack.c.b16 %v2195, %v2194
        %v2199 = vpack.c.b16 %v2197, %v2196
        %v2203 = vsel %vm468, %v2181, 0
        %v2206 = vsel %vm468, %v2189, 0
        %2208 = vmatprep.subr.bf16.mxu0 0
        %2209 = vmatpush1.bf16.msra.mxu0 %v2198
        %2210 = vmatprep.subr.bf16.mxu0 0
        %2211 = vmatpush1.bf16.msra.mxu0 %v2199
        %2212 = vmatprep.subr.bf16.mxu0 0
        %2213 = vmatpush1.bf16.msra.mxu0 0
        %2214 = vmatprep.subr.bf16.mxu0 0
        %2215 = vmatpush1.bf16.msra.mxu0 0
        %2216 = vmatprep.subr.bf16.mxu0 0
        %2217 = vmatpush1.bf16.msra.mxu0 0
        %2218 = vmatprep.subr.bf16.mxu0 0
        %2219 = vmatpush1.bf16.msra.mxu0 0
        %2220 = vmatprep.subr.bf16.mxu0 0
        %2221 = vmatpush1.bf16.msra.mxu0 0
        %2222 = vmatprep.subr.bf16.mxu0 0
        %2223 = vmatpush1.bf16.msra.mxu0 0
        %2224 = vmatprep.subr.bf16.mxu0 0
        %2225 = vmatpush1.bf16.msra.mxu0 0
        %2226 = vmatprep.subr.bf16.mxu0 0
        %2227 = vmatpush1.bf16.msra.mxu0 0
        %2228 = vmatprep.subr.bf16.mxu0 0
        %2229 = vmatpush1.bf16.msra.mxu0 0
        %2230 = vmatprep.subr.bf16.mxu0 0
        %2231 = vmatpush1.bf16.msra.mxu0 0
        %2232 = vmatprep.subr.bf16.mxu0 0
        %2233 = vmatpush1.bf16.msra.mxu0 0
        %2234 = vmatprep.subr.bf16.mxu0 0
        %2235 = vmatpush1.bf16.msra.mxu0 0
        %2236 = vmatprep.subr.bf16.mxu0 0
        %2237 = vmatpush1.bf16.msra.mxu0 0
        %2238 = vmatprep.subr.bf16.mxu0 0
        %2239 = vmatpush1.bf16.msra.mxu0 0
        %2240 = vmatprep.mubr.bf16.mxu0 0
        %2241 = vmatmul.mubr.bf16.gmra.mrb[0].mxu0 %v1769
        %v2242 = vpop.f32.mrb[0].mxu0
        %v2243 = vadd.f32 0.0, %v2242
        %v2244 = vpop.f32.mrb[0].mxu0
        %v2245 = vpop.f32.mrb[0].mxu0
        %v2246 = vadd.f32 0.0, %v2245
        %v2247 = vpop.f32.mrb[0].mxu0
        %2248 = vmatprep.mubr.bf16.mxu0 0
        %2249 = vmatmul.mubr.bf16.gmra.mrb[0].mxu0 %v1772
        %v2250 = vpop.f32.mrb[0].mxu0
        %v2251 = vadd.f32 0.0, %v2250
        %v2252 = vpop.f32.mrb[0].mxu0
        %v2253 = vpop.f32.mrb[0].mxu0
        %v2254 = vadd.f32 0.0, %v2253
        %v2255 = vpop.f32.mrb[0].mxu0
        %2256 = vmatprep.mubr.bf16.mxu0 0
        %2257 = vmatmul.mubr.bf16.gmra.mrb[0].mxu0 %v1775
        %v2258 = vpop.f32.mrb[0].mxu0
        %v2259 = vadd.f32 0.0, %v2258
        %v2260 = vpop.f32.mrb[0].mxu0
        %v2261 = vpop.f32.mrb[0].mxu0
        %v2262 = vadd.f32 0.0, %v2261
        %v2263 = vpop.f32.mrb[0].mxu0
        %2264 = vmatprep.mubr.bf16.mxu0 0
        %2265 = vmatmul.mubr.bf16.gmra.mrb[0].mxu0 %v1778
        %v2266 = vpop.f32.mrb[0].mxu0
        %v2267 = vadd.f32 0.0, %v2266
        %v2268 = vpop.f32.mrb[0].mxu0
        %v2269 = vpop.f32.mrb[0].mxu0
        %v2270 = vadd.f32 0.0, %v2269
        %v2271 = vpop.f32.mrb[0].mxu0
        %2272 = vmatprep.mubr.bf16.mxu0 0
        %2273 = vmatmul.mubr.bf16.gmra.mrb[0].mxu0 %v1781
        %v2274 = vpop.f32.mrb[0].mxu0
        %v2275 = vadd.f32 0.0, %v2274
        %v2276 = vpop.f32.mrb[0].mxu0
        %v2277 = vpop.f32.mrb[0].mxu0
        %v2278 = vadd.f32 0.0, %v2277
        %v2279 = vpop.f32.mrb[0].mxu0
        %2280 = vmatprep.mubr.bf16.mxu0 0
        %2281 = vmatmul.mubr.bf16.gmra.mrb[0].mxu0 %v1784
        %v2282 = vpop.f32.mrb[0].mxu0
        %v2283 = vadd.f32 0.0, %v2282
        %v2284 = vpop.f32.mrb[0].mxu0
        %v2285 = vpop.f32.mrb[0].mxu0
        %v2286 = vadd.f32 0.0, %v2285
        %v2287 = vpop.f32.mrb[0].mxu0
        %2288 = vmatprep.mubr.bf16.mxu0 0
        %2289 = vmatmul.mubr.bf16.gmra.mrb[0].mxu0 %v1787
        %v2290 = vpop.f32.mrb[0].mxu0
        %v2291 = vadd.f32 0.0, %v2290
        %v2292 = vpop.f32.mrb[0].mxu0
        %v2293 = vpop.f32.mrb[0].mxu0
        %v2294 = vadd.f32 0.0, %v2293
        %v2295 = vpop.f32.mrb[0].mxu0
        %2296 = vmatprep.mubr.bf16.mxu0 0
        %2297 = vmatmul.mubr.bf16.gmra.mrb[0].mxu0 %v1790
        %v2298 = vpop.f32.mrb[0].mxu0
        %v2299 = vadd.f32 0.0, %v2298
        %v2300 = vpop.f32.mrb[0].mxu0
        %v2301 = vpop.f32.mrb[0].mxu0
        %v2302 = vadd.f32 0.0, %v2301
        %v2303 = vpop.f32.mrb[0].mxu0
        %2304 = vmatprep.mubr.bf16.mxu0 0
        %2305 = vmatmul.mubr.bf16.gmra.mrb[0].mxu0 %v1793
        %v2306 = vpop.f32.mrb[0].mxu0
        %v2307 = vadd.f32 0.0, %v2306
        %v2308 = vpop.f32.mrb[0].mxu0
        %v2309 = vpop.f32.mrb[0].mxu0
        %v2310 = vadd.f32 0.0, %v2309
        %v2311 = vpop.f32.mrb[0].mxu0
        %2312 = vmatprep.mubr.bf16.mxu0 0
        %2313 = vmatmul.mubr.bf16.gmra.mrb[0].mxu0 %v1796
        %v2314 = vpop.f32.mrb[0].mxu0
        %v2315 = vadd.f32 0.0, %v2314
        %v2316 = vpop.f32.mrb[0].mxu0
        %v2317 = vpop.f32.mrb[0].mxu0
        %v2318 = vadd.f32 0.0, %v2317
        %v2319 = vpop.f32.mrb[0].mxu0
        %2320 = vmatprep.mubr.bf16.mxu0 0
        %2321 = vmatmul.mubr.bf16.gmra.mrb[0].mxu0 %v1799
        %v2322 = vpop.f32.mrb[0].mxu0
        %v2323 = vadd.f32 0.0, %v2322
        %v2324 = vpop.f32.mrb[0].mxu0
        %v2325 = vpop.f32.mrb[0].mxu0
        %v2326 = vadd.f32 0.0, %v2325
        %v2327 = vpop.f32.mrb[0].mxu0
        %2328 = vmatprep.mubr.bf16.mxu0 0
        %2329 = vmatmul.mubr.bf16.gmra.mrb[0].mxu0 %v1802
        %v2330 = vpop.f32.mrb[0].mxu0
        %v2331 = vadd.f32 0.0, %v2330
        %v2332 = vpop.f32.mrb[0].mxu0
        %v2333 = vpop.f32.mrb[0].mxu0
        %v2334 = vadd.f32 0.0, %v2333
        %v2335 = vpop.f32.mrb[0].mxu0
        %2336 = vmatprep.mubr.bf16.mxu0 0
        %2337 = vmatmul.mubr.bf16.gmra.mrb[0].mxu0 %v1805
        %v2338 = vpop.f32.mrb[0].mxu0
        %v2339 = vadd.f32 0.0, %v2338
        %v2340 = vpop.f32.mrb[0].mxu0
        %v2341 = vpop.f32.mrb[0].mxu0
        %v2342 = vadd.f32 0.0, %v2341
        %v2343 = vpop.f32.mrb[0].mxu0
        %2344 = vmatprep.mubr.bf16.mxu0 0
        %2345 = vmatmul.mubr.bf16.gmra.mrb[0].mxu0 %v1808
        %v2346 = vpop.f32.mrb[0].mxu0
        %v2347 = vadd.f32 0.0, %v2346
        %v2348 = vpop.f32.mrb[0].mxu0
        %v2349 = vpop.f32.mrb[0].mxu0
        %v2350 = vadd.f32 0.0, %v2349
        %v2351 = vpop.f32.mrb[0].mxu0
        %2352 = vmatprep.mubr.bf16.mxu0 0
        %2353 = vmatmul.mubr.bf16.gmra.mrb[0].mxu0 %v1811
        %v2354 = vpop.f32.mrb[0].mxu0
        %v2355 = vadd.f32 0.0, %v2354
        %v2356 = vpop.f32.mrb[0].mxu0
        %v2357 = vpop.f32.mrb[0].mxu0
        %v2358 = vadd.f32 0.0, %v2357
        %v2359 = vpop.f32.mrb[0].mxu0
        %2360 = vmatprep.mubr.bf16.mxu0 0
        %2361 = vmatmul.mubr.bf16.gmra.mrb[0].mxu0 %v1814
        %v2362 = vpop.f32.mrb[0].mxu0
        %v2363 = vadd.f32 0.0, %v2362
        %v2364 = vpop.f32.mrb[0].mxu0
        %v2365 = vpop.f32.mrb[0].mxu0
        %v2366 = vadd.f32 0.0, %v2365
        %v2367 = vpop.f32.mrb[0].mxu0
        %2368 = vmatprep.mubr.bf16.mxu0 0
        %2369 = vmatmul.mubr.bf16.gmra.mrb[0].mxu0 %v1817
        %v2370 = vpop.f32.mrb[0].mxu0
        %v2371 = vadd.f32 0.0, %v2370
        %v2372 = vpop.f32.mrb[0].mxu0
        %v2373 = vpop.f32.mrb[0].mxu0
        %v2374 = vadd.f32 0.0, %v2373
        %v2375 = vpop.f32.mrb[0].mxu0
        %2376 = vmatprep.mubr.bf16.mxu0 0
        %2377 = vmatmul.mubr.bf16.gmra.mrb[0].mxu0 %v1820
        %v2378 = vpop.f32.mrb[0].mxu0
        %v2379 = vadd.f32 0.0, %v2378
        %v2380 = vpop.f32.mrb[0].mxu0
        %v2381 = vpop.f32.mrb[0].mxu0
        %v2382 = vadd.f32 0.0, %v2381
        %v2383 = vpop.f32.mrb[0].mxu0
        %2384 = vmatprep.mubr.bf16.mxu0 0
        %2385 = vmatmul.mubr.bf16.gmra.mrb[0].mxu0 %v1823
        %v2386 = vpop.f32.mrb[0].mxu0
        %v2387 = vadd.f32 0.0, %v2386
        %v2388 = vpop.f32.mrb[0].mxu0
        %v2389 = vpop.f32.mrb[0].mxu0
        %v2390 = vadd.f32 0.0, %v2389
        %v2391 = vpop.f32.mrb[0].mxu0
        %2392 = vmatprep.mubr.bf16.mxu0 0
        %2393 = vmatmul.mubr.bf16.gmra.mrb[0].mxu0 %v1826
        %v2394 = vpop.f32.mrb[0].mxu0
        %v2395 = vadd.f32 0.0, %v2394
        %v2396 = vpop.f32.mrb[0].mxu0
        %v2397 = vpop.f32.mrb[0].mxu0
        %v2398 = vadd.f32 0.0, %v2397
        %v2399 = vpop.f32.mrb[0].mxu0
        %2400 = vmatprep.mubr.bf16.mxu0 0
        %2401 = vmatmul.mubr.bf16.gmra.mrb[0].mxu0 %v2203
        %v2402 = vpop.f32.mrb[0].mxu0
        %v2403 = vadd.f32 0.0, %v2402
        %v2404 = vpop.f32.mrb[0].mxu0
        %v2405 = vpop.f32.mrb[0].mxu0
        %v2406 = vadd.f32 0.0, %v2405
        %v2407 = vpop.f32.mrb[0].mxu0
        %2408 = vmatprep.mubr.bf16.mxu0 0
        %2409 = vmatmul.mubr.bf16.gmra.mrb[0].mxu0 %v2206
        %v2410 = vpop.f32.mrb[0].mxu0
        %v2411 = vadd.f32 0.0, %v2410
        %v2412 = vpop.f32.mrb[0].mxu0
        %v2413 = vpop.f32.mrb[0].mxu0
        %v2414 = vadd.f32 0.0, %v2413
        %v2415 = vpop.f32.mrb[0].mxu0
        %2416 = vdwg.mxu0
        %v2417 = vld [vmem:[#allocation2] sm:$0xff]
        %v2418 = vld [vmem:[#allocation2 + $0x8] sm:$0xff]
        %v2419 = vld [vmem:[#allocation2 + $0x10] sm:$0xff]
        %v2420 = vld [vmem:[#allocation2 + $0x18] sm:$0xff]
        %v2421 = vld [vmem:[#allocation2 + $0x20] sm:$0xff]
        %v2422 = vld [vmem:[#allocation2 + $0x28] sm:$0xff]
        %v2423 = vld [vmem:[#allocation2 + $0x30] sm:$0xff]
        %v2424 = vld [vmem:[#allocation2 + $0x38] sm:$0xff]
        %v2425 = vld [vmem:[#allocation2 + $0x40] sm:$0xff]
        %v2426 = vld [vmem:[#allocation2 + $0x48] sm:$0xff]
        %v2427 = vld [vmem:[#allocation2 + $0x50] sm:$0xff]
        %v2428 = vld [vmem:[#allocation2 + $0x58] sm:$0xff]
        %v2429 = vld [vmem:[#allocation2 + $0x60] sm:$0xff]
        %v2430 = vld [vmem:[#allocation2 + $0x68] sm:$0xff]
        %v2431 = vld [vmem:[#allocation2 + $0x70] sm:$0xff]
        %v2432 = vld [vmem:[#allocation2 + $0x78] sm:$0xff]
        %v2433 = vld [vmem:[#allocation2 + $0x80] sm:$0xff]
        %v2434 = vld [vmem:[#allocation2 + $0x88] sm:$0xff]
        %v2435 = vld [vmem:[#allocation2 + $0x90] sm:$0xff]
        %v2436 = vld [vmem:[#allocation2 + $0x98] sm:$0xff]
        %v2437 = vld [vmem:[#allocation2 + $0xa0] sm:$0xff]
        %v2438 = vld [vmem:[#allocation2 + $0xa8] sm:$0xff]
        %v2439 = vld [vmem:[#allocation2 + $0xb0] sm:$0xff]
        %v2440 = vld [vmem:[#allocation2 + $0xb8] sm:$0xff]
        %v2441 = vld [vmem:[#allocation2 + $0xc0] sm:$0xff]
        %v2442 = vld [vmem:[#allocation2 + $0xc8] sm:$0xff]
        %v2443 = vld [vmem:[#allocation2 + $0xd0] sm:$0xff]
        %v2444 = vld [vmem:[#allocation2 + $0xd8] sm:$0xff]
        %v2445 = vld [vmem:[#allocation2 + $0xe0] sm:$0xff]
        %v2446 = vld [vmem:[#allocation2 + $0xe8] sm:$0xff]
        %v2447 = vld [vmem:[#allocation2 + $0xf0] sm:$0xff]
        %v2448 = vld [vmem:[#allocation2 + $0xf8] sm:$0xff]
        %v2449 = vld [vmem:[#allocation2 + $0x100] sm:$0xff]
        %v2450 = vld [vmem:[#allocation2 + $0x108] sm:$0xff]
        %v2451 = vld [vmem:[#allocation2 + $0x110] sm:$0xff]
        %v2452 = vld [vmem:[#allocation2 + $0x118] sm:$0xff]
        %v2453 = vld [vmem:[#allocation2 + $0x120] sm:$0xff]
        %v2454 = vld [vmem:[#allocation2 + $0x128] sm:$0xff]
        %v2455 = vld [vmem:[#allocation2 + $0x130] sm:$0xff]
        %v2456 = vld [vmem:[#allocation2 + $0x138] sm:$0xff]
        %v2457 = vld [vmem:[#allocation2 + $0x140] sm:$0xff]
        %v2458 = vld [vmem:[#allocation2 + $0x148] sm:$0xff]
        %v2459 = vld [vmem:[#allocation2 + $0x150] sm:$0xff]
        %v2460 = vld [vmem:[#allocation2 + $0x158] sm:$0xff]
        %v2461 = vadd.f32 %v2417, %v2243
        %v2462 = vadd.f32 %v2418, %v2246
        %v2463 = vadd.f32 %v2419, %v2251
        %v2464 = vadd.f32 %v2420, %v2254
        %v2465 = vadd.f32 %v2421, %v2259
        %v2466 = vadd.f32 %v2422, %v2262
        %v2467 = vadd.f32 %v2423, %v2267
        %v2468 = vadd.f32 %v2424, %v2270
        %v2469 = vadd.f32 %v2425, %v2275
        %v2470 = vadd.f32 %v2426, %v2278
        %v2471 = vadd.f32 %v2427, %v2283
        %v2472 = vadd.f32 %v2428, %v2286
        %v2473 = vadd.f32 %v2429, %v2291
        %v2474 = vadd.f32 %v2430, %v2294
        %v2475 = vadd.f32 %v2431, %v2299
        %v2476 = vadd.f32 %v2432, %v2302
        %v2477 = vadd.f32 %v2433, %v2307
        %v2478 = vadd.f32 %v2434, %v2310
        %v2479 = vadd.f32 %v2435, %v2315
        %v2480 = vadd.f32 %v2436, %v2318
        %v2481 = vadd.f32 %v2437, %v2323
        %v2482 = vadd.f32 %v2438, %v2326
        %v2483 = vadd.f32 %v2439, %v2331
        %v2484 = vadd.f32 %v2440, %v2334
        %v2485 = vadd.f32 %v2441, %v2339
        %v2486 = vadd.f32 %v2442, %v2342
        %v2487 = vadd.f32 %v2443, %v2347
        %v2488 = vadd.f32 %v2444, %v2350
        %v2489 = vadd.f32 %v2445, %v2355
        %v2490 = vadd.f32 %v2446, %v2358
        %v2491 = vadd.f32 %v2447, %v2363
        %v2492 = vadd.f32 %v2448, %v2366
        %v2493 = vadd.f32 %v2449, %v2371
        %v2494 = vadd.f32 %v2450, %v2374
        %v2495 = vadd.f32 %v2451, %v2379
        %v2496 = vadd.f32 %v2452, %v2382
        %v2497 = vadd.f32 %v2453, %v2387
        %v2498 = vadd.f32 %v2454, %v2390
        %v2499 = vadd.f32 %v2455, %v2395
        %v2500 = vadd.f32 %v2456, %v2398
        %v2501 = vadd.f32 %v2457, %v2403
        %v2502 = vadd.f32 %v2458, %v2406
        %v2503 = vadd.f32 %v2459, %v2411
        %v2504 = vadd.f32 %v2460, %v2414
        %2505 = vst.msk [vmem:[#allocation2] sm:$0xff] %vm744, %v2461
        %2506 = vst.msk [vmem:[#allocation2 + $0x8] sm:$0xff] %vm744, %v2462
        %2507 = vst.msk [vmem:[#allocation2 + $0x10] sm:$0xff] %vm744, %v2463
        %2508 = vst.msk [vmem:[#allocation2 + $0x18] sm:$0xff] %vm744, %v2464
        %2509 = vst.msk [vmem:[#allocation2 + $0x20] sm:$0xff] %vm744, %v2465
        %2510 = vst.msk [vmem:[#allocation2 + $0x28] sm:$0xff] %vm744, %v2466
        %2511 = vst.msk [vmem:[#allocation2 + $0x30] sm:$0xff] %vm744, %v2467
        %2512 = vst.msk [vmem:[#allocation2 + $0x38] sm:$0xff] %vm744, %v2468
        %2513 = vst.msk [vmem:[#allocation2 + $0x40] sm:$0xff] %vm744, %v2469
        %2514 = vst.msk [vmem:[#allocation2 + $0x48] sm:$0xff] %vm744, %v2470
        %2515 = vst.msk [vmem:[#allocation2 + $0x50] sm:$0xff] %vm744, %v2471
        %2516 = vst.msk [vmem:[#allocation2 + $0x58] sm:$0xff] %vm744, %v2472
        %2517 = vst.msk [vmem:[#allocation2 + $0x60] sm:$0xff] %vm744, %v2473
        %2518 = vst.msk [vmem:[#allocation2 + $0x68] sm:$0xff] %vm744, %v2474
        %2519 = vst.msk [vmem:[#allocation2 + $0x70] sm:$0xff] %vm744, %v2475
        %2520 = vst.msk [vmem:[#allocation2 + $0x78] sm:$0xff] %vm744, %v2476
        %2521 = vst.msk [vmem:[#allocation2 + $0x80] sm:$0xff] %vm744, %v2477
        %2522 = vst.msk [vmem:[#allocation2 + $0x88] sm:$0xff] %vm744, %v2478
        %2523 = vst.msk [vmem:[#allocation2 + $0x90] sm:$0xff] %vm744, %v2479
        %2524 = vst.msk [vmem:[#allocation2 + $0x98] sm:$0xff] %vm744, %v2480
        %2525 = vst.msk [vmem:[#allocation2 + $0xa0] sm:$0xff] %vm744, %v2481
        %2526 = vst.msk [vmem:[#allocation2 + $0xa8] sm:$0xff] %vm744, %v2482
        %2527 = vst.msk [vmem:[#allocation2 + $0xb0] sm:$0xff] %vm744, %v2483
        %2528 = vst.msk [vmem:[#allocation2 + $0xb8] sm:$0xff] %vm744, %v2484
        %2529 = vst.msk [vmem:[#allocation2 + $0xc0] sm:$0xff] %vm744, %v2485
        %2530 = vst.msk [vmem:[#allocation2 + $0xc8] sm:$0xff] %vm744, %v2486
        %2531 = vst.msk [vmem:[#allocation2 + $0xd0] sm:$0xff] %vm744, %v2487
        %2532 = vst.msk [vmem:[#allocation2 + $0xd8] sm:$0xff] %vm744, %v2488
        %2533 = vst.msk [vmem:[#allocation2 + $0xe0] sm:$0xff] %vm744, %v2489
        %2534 = vst.msk [vmem:[#allocation2 + $0xe8] sm:$0xff] %vm744, %v2490
        %2535 = vst.msk [vmem:[#allocation2 + $0xf0] sm:$0xff] %vm744, %v2491
        %2536 = vst.msk [vmem:[#allocation2 + $0xf8] sm:$0xff] %vm744, %v2492
        %2537 = vst.msk [vmem:[#allocation2 + $0x100] sm:$0xff] %vm744, %v2493
        %2538 = vst.msk [vmem:[#allocation2 + $0x108] sm:$0xff] %vm744, %v2494
        %2539 = vst.msk [vmem:[#allocation2 + $0x110] sm:$0xff] %vm744, %v2495
        %2540 = vst.msk [vmem:[#allocation2 + $0x118] sm:$0xff] %vm744, %v2496
        %2541 = vst.msk [vmem:[#allocation2 + $0x120] sm:$0xff] %vm744, %v2497
        %2542 = vst.msk [vmem:[#allocation2 + $0x128] sm:$0xff] %vm744, %v2498
        %2543 = vst.msk [vmem:[#allocation2 + $0x130] sm:$0xff] %vm744, %v2499
        %2544 = vst.msk [vmem:[#allocation2 + $0x138] sm:$0xff] %vm744, %v2500
        %2545 = vst.msk [vmem:[#allocation2 + $0x140] sm:$0xff] %vm744, %v2501
        %2546 = vst.msk [vmem:[#allocation2 + $0x148] sm:$0xff] %vm744, %v2502
        %2547 = vst.msk [vmem:[#allocation2 + $0x150] sm:$0xff] %vm744, %v2503
        %2548 = vst.msk [vmem:[#allocation2 + $0x158] sm:$0xff] %vm744, %v2504
        %s2549 = scalar_lea.vmem [#allocation5], 112
        %v2550 = vld [vmem:[%s2549] sm:$0xf]
        %v2551 = vld [vmem:[%s2549 + $0x4] sm:$0xf]
        %v2552 = vld [vmem:[%s2549 + $0x8] sm:$0xf]
        %v2553 = vld [vmem:[%s2549 + $0xc] sm:$0xf]
        %v2554 = vshrl.u32 %v1561, 16
        %v2556 = vor.u32 %v2554, %v2188
        %v2558 = vshll.u32 %v1562, 16
        %v2560 = vrot.slane %v2558, 1
        %v2561 = vsel %vm1569, %v2556, %v2560
        %v2562 = vshrl.u32 %v1562, 16
        %v2564 = vor.u32 %v2562, %v2560
        %v2566 = vshll.u32 %v1563, 16
        %v2568 = vrot.slane %v2566, 1
        %v2569 = vsel %vm1569, %v2564, %v2568
        %v2574 = vunpack.c.l.b16 %v2550
        %v2575 = vunpack.c.l.b16 %v2551
        %v2576 = vunpack.c.l.b16 %v2552
        %v2577 = vunpack.c.l.b16 %v2553
        %v2578 = vpack.c.b16 %v2575, %v2574
        %v2579 = vpack.c.b16 %v2577, %v2576
        %v2583 = vsel %vm468, %v2561, 0
        %v2586 = vsel %vm468, %v2569, 0
        %2588 = vmatprep.subr.bf16.mxu0 0
        %2589 = vmatpush1.bf16.msra.mxu0 %v2578
        %2590 = vmatprep.subr.bf16.mxu0 0
        %2591 = vmatpush1.bf16.msra.mxu0 %v2579
        %2592 = vmatprep.subr.bf16.mxu0 0
        %2593 = vmatpush1.bf16.msra.mxu0 0
        %2594 = vmatprep.subr.bf16.mxu0 0
        %2595 = vmatpush1.bf16.msra.mxu0 0
        %2596 = vmatprep.subr.bf16.mxu0 0
        %2597 = vmatpush1.bf16.msra.mxu0 0
        %2598 = vmatprep.subr.bf16.mxu0 0
        %2599 = vmatpush1.bf16.msra.mxu0 0
        %2600 = vmatprep.subr.bf16.mxu0 0
        %2601 = vmatpush1.bf16.msra.mxu0 0
        %2602 = vmatprep.subr.bf16.mxu0 0
        %2603 = vmatpush1.bf16.msra.mxu0 0
        %2604 = vmatprep.subr.bf16.mxu0 0
        %2605 = vmatpush1.bf16.msra.mxu0 0
        %2606 = vmatprep.subr.bf16.mxu0 0
        %2607 = vmatpush1.bf16.msra.mxu0 0
        %2608 = vmatprep.subr.bf16.mxu0 0
        %2609 = vmatpush1.bf16.msra.mxu0 0
        %2610 = vmatprep.subr.bf16.mxu0 0
        %2611 = vmatpush1.bf16.msra.mxu0 0
        %2612 = vmatprep.subr.bf16.mxu0 0
        %2613 = vmatpush1.bf16.msra.mxu0 0
        %2614 = vmatprep.subr.bf16.mxu0 0
        %2615 = vmatpush1.bf16.msra.mxu0 0
        %2616 = vmatprep.subr.bf16.mxu0 0
        %2617 = vmatpush1.bf16.msra.mxu0 0
        %2618 = vmatprep.subr.bf16.mxu0 0
        %2619 = vmatpush1.bf16.msra.mxu0 0
        %2620 = vmatprep.mubr.bf16.mxu0 0
        %2621 = vmatmul.mubr.bf16.gmra.mrb[0].mxu0 %v1775
        %v2622 = vpop.f32.mrb[0].mxu0
        %v2623 = vadd.f32 0.0, %v2622
        %v2624 = vpop.f32.mrb[0].mxu0
        %v2625 = vpop.f32.mrb[0].mxu0
        %v2626 = vadd.f32 0.0, %v2625
        %v2627 = vpop.f32.mrb[0].mxu0
        %2628 = vmatprep.mubr.bf16.mxu0 0
        %2629 = vmatmul.mubr.bf16.gmra.mrb[0].mxu0 %v1778
        %v2630 = vpop.f32.mrb[0].mxu0
        %v2631 = vadd.f32 0.0, %v2630
        %v2632 = vpop.f32.mrb[0].mxu0
        %v2633 = vpop.f32.mrb[0].mxu0
        %v2634 = vadd.f32 0.0, %v2633
        %v2635 = vpop.f32.mrb[0].mxu0
        %2636 = vmatprep.mubr.bf16.mxu0 0
        %2637 = vmatmul.mubr.bf16.gmra.mrb[0].mxu0 %v1781
        %v2638 = vpop.f32.mrb[0].mxu0
        %v2639 = vadd.f32 0.0, %v2638
        %v2640 = vpop.f32.mrb[0].mxu0
        %v2641 = vpop.f32.mrb[0].mxu0
        %v2642 = vadd.f32 0.0, %v2641
        %v2643 = vpop.f32.mrb[0].mxu0
        %2644 = vmatprep.mubr.bf16.mxu0 0
        %2645 = vmatmul.mubr.bf16.gmra.mrb[0].mxu0 %v1784
        %v2646 = vpop.f32.mrb[0].mxu0
        %v2647 = vadd.f32 0.0, %v2646
        %v2648 = vpop.f32.mrb[0].mxu0
        %v2649 = vpop.f32.mrb[0].mxu0
        %v2650 = vadd.f32 0.0, %v2649
        %v2651 = vpop.f32.mrb[0].mxu0
        %2652 = vmatprep.mubr.bf16.mxu0 0
        %2653 = vmatmul.mubr.bf16.gmra.mrb[0].mxu0 %v1787
        %v2654 = vpop.f32.mrb[0].mxu0
        %v2655 = vadd.f32 0.0, %v2654
        %v2656 = vpop.f32.mrb[0].mxu0
        %v2657 = vpop.f32.mrb[0].mxu0
        %v2658 = vadd.f32 0.0, %v2657
        %v2659 = vpop.f32.mrb[0].mxu0
        %2660 = vmatprep.mubr.bf16.mxu0 0
        %2661 = vmatmul.mubr.bf16.gmra.mrb[0].mxu0 %v1790
        %v2662 = vpop.f32.mrb[0].mxu0
        %v2663 = vadd.f32 0.0, %v2662
        %v2664 = vpop.f32.mrb[0].mxu0
        %v2665 = vpop.f32.mrb[0].mxu0
        %v2666 = vadd.f32 0.0, %v2665
        %v2667 = vpop.f32.mrb[0].mxu0
        %2668 = vmatprep.mubr.bf16.mxu0 0
        %2669 = vmatmul.mubr.bf16.gmra.mrb[0].mxu0 %v1793
        %v2670 = vpop.f32.mrb[0].mxu0
        %v2671 = vadd.f32 0.0, %v2670
        %v2672 = vpop.f32.mrb[0].mxu0
        %v2673 = vpop.f32.mrb[0].mxu0
        %v2674 = vadd.f32 0.0, %v2673
        %v2675 = vpop.f32.mrb[0].mxu0
        %2676 = vmatprep.mubr.bf16.mxu0 0
        %2677 = vmatmul.mubr.bf16.gmra.mrb[0].mxu0 %v1796
        %v2678 = vpop.f32.mrb[0].mxu0
        %v2679 = vadd.f32 0.0, %v2678
        %v2680 = vpop.f32.mrb[0].mxu0
        %v2681 = vpop.f32.mrb[0].mxu0
        %v2682 = vadd.f32 0.0, %v2681
        %v2683 = vpop.f32.mrb[0].mxu0
        %2684 = vmatprep.mubr.bf16.mxu0 0
        %2685 = vmatmul.mubr.bf16.gmra.mrb[0].mxu0 %v1799
        %v2686 = vpop.f32.mrb[0].mxu0
        %v2687 = vadd.f32 0.0, %v2686
        %v2688 = vpop.f32.mrb[0].mxu0
        %v2689 = vpop.f32.mrb[0].mxu0
        %v2690 = vadd.f32 0.0, %v2689
        %v2691 = vpop.f32.mrb[0].mxu0
        %2692 = vmatprep.mubr.bf16.mxu0 0
        %2693 = vmatmul.mubr.bf16.gmra.mrb[0].mxu0 %v1802
        %v2694 = vpop.f32.mrb[0].mxu0
        %v2695 = vadd.f32 0.0, %v2694
        %v2696 = vpop.f32.mrb[0].mxu0
        %v2697 = vpop.f32.mrb[0].mxu0
        %v2698 = vadd.f32 0.0, %v2697
        %v2699 = vpop.f32.mrb[0].mxu0
        %2700 = vmatprep.mubr.bf16.mxu0 0
        %2701 = vmatmul.mubr.bf16.gmra.mrb[0].mxu0 %v1805
        %v2702 = vpop.f32.mrb[0].mxu0
        %v2703 = vadd.f32 0.0, %v2702
        %v2704 = vpop.f32.mrb[0].mxu0
        %v2705 = vpop.f32.mrb[0].mxu0
        %v2706 = vadd.f32 0.0, %v2705
        %v2707 = vpop.f32.mrb[0].mxu0
        %2708 = vmatprep.mubr.bf16.mxu0 0
        %2709 = vmatmul.mubr.bf16.gmra.mrb[0].mxu0 %v1808
        %v2710 = vpop.f32.mrb[0].mxu0
        %v2711 = vadd.f32 0.0, %v2710
        %v2712 = vpop.f32.mrb[0].mxu0
        %v2713 = vpop.f32.mrb[0].mxu0
        %v2714 = vadd.f32 0.0, %v2713
        %v2715 = vpop.f32.mrb[0].mxu0
        %2716 = vmatprep.mubr.bf16.mxu0 0
        %2717 = vmatmul.mubr.bf16.gmra.mrb[0].mxu0 %v1811
        %v2718 = vpop.f32.mrb[0].mxu0
        %v2719 = vadd.f32 0.0, %v2718
        %v2720 = vpop.f32.mrb[0].mxu0
        %v2721 = vpop.f32.mrb[0].mxu0
        %v2722 = vadd.f32 0.0, %v2721
        %v2723 = vpop.f32.mrb[0].mxu0
        %2724 = vmatprep.mubr.bf16.mxu0 0
        %2725 = vmatmul.mubr.bf16.gmra.mrb[0].mxu0 %v1814
        %v2726 = vpop.f32.mrb[0].mxu0
        %v2727 = vadd.f32 0.0, %v2726
        %v2728 = vpop.f32.mrb[0].mxu0
        %v2729 = vpop.f32.mrb[0].mxu0
        %v2730 = vadd.f32 0.0, %v2729
        %v2731 = vpop.f32.mrb[0].mxu0
        %2732 = vmatprep.mubr.bf16.mxu0 0
        %2733 = vmatmul.mubr.bf16.gmra.mrb[0].mxu0 %v1817
        %v2734 = vpop.f32.mrb[0].mxu0
        %v2735 = vadd.f32 0.0, %v2734
        %v2736 = vpop.f32.mrb[0].mxu0
        %v2737 = vpop.f32.mrb[0].mxu0
        %v2738 = vadd.f32 0.0, %v2737
        %v2739 = vpop.f32.mrb[0].mxu0
        %2740 = vmatprep.mubr.bf16.mxu0 0
        %2741 = vmatmul.mubr.bf16.gmra.mrb[0].mxu0 %v1820
        %v2742 = vpop.f32.mrb[0].mxu0
        %v2743 = vadd.f32 0.0, %v2742
        %v2744 = vpop.f32.mrb[0].mxu0
        %v2745 = vpop.f32.mrb[0].mxu0
        %v2746 = vadd.f32 0.0, %v2745
        %v2747 = vpop.f32.mrb[0].mxu0
        %2748 = vmatprep.mubr.bf16.mxu0 0
        %2749 = vmatmul.mubr.bf16.gmra.mrb[0].mxu0 %v1823
        %v2750 = vpop.f32.mrb[0].mxu0
        %v2751 = vadd.f32 0.0, %v2750
        %v2752 = vpop.f32.mrb[0].mxu0
        %v2753 = vpop.f32.mrb[0].mxu0
        %v2754 = vadd.f32 0.0, %v2753
        %v2755 = vpop.f32.mrb[0].mxu0
        %2756 = vmatprep.mubr.bf16.mxu0 0
        %2757 = vmatmul.mubr.bf16.gmra.mrb[0].mxu0 %v1826
        %v2758 = vpop.f32.mrb[0].mxu0
        %v2759 = vadd.f32 0.0, %v2758
        %v2760 = vpop.f32.mrb[0].mxu0
        %v2761 = vpop.f32.mrb[0].mxu0
        %v2762 = vadd.f32 0.0, %v2761
        %v2763 = vpop.f32.mrb[0].mxu0
        %2764 = vmatprep.mubr.bf16.mxu0 0
        %2765 = vmatmul.mubr.bf16.gmra.mrb[0].mxu0 %v2203
        %v2766 = vpop.f32.mrb[0].mxu0
        %v2767 = vadd.f32 0.0, %v2766
        %v2768 = vpop.f32.mrb[0].mxu0
        %v2769 = vpop.f32.mrb[0].mxu0
        %v2770 = vadd.f32 0.0, %v2769
        %v2771 = vpop.f32.mrb[0].mxu0
        %2772 = vmatprep.mubr.bf16.mxu0 0
        %2773 = vmatmul.mubr.bf16.gmra.mrb[0].mxu0 %v2206
        %v2774 = vpop.f32.mrb[0].mxu0
        %v2775 = vadd.f32 0.0, %v2774
        %v2776 = vpop.f32.mrb[0].mxu0
        %v2777 = vpop.f32.mrb[0].mxu0
        %v2778 = vadd.f32 0.0, %v2777
        %v2779 = vpop.f32.mrb[0].mxu0
        %2780 = vmatprep.mubr.bf16.mxu0 0
        %2781 = vmatmul.mubr.bf16.gmra.mrb[0].mxu0 %v2583
        %v2782 = vpop.f32.mrb[0].mxu0
        %v2783 = vadd.f32 0.0, %v2782
        %v2784 = vpop.f32.mrb[0].mxu0
        %v2785 = vpop.f32.mrb[0].mxu0
        %v2786 = vadd.f32 0.0, %v2785
        %v2787 = vpop.f32.mrb[0].mxu0
        %2788 = vmatprep.mubr.bf16.mxu0 0
        %2789 = vmatmul.mubr.bf16.gmra.mrb[0].mxu0 %v2586
        %v2790 = vpop.f32.mrb[0].mxu0
        %v2791 = vadd.f32 0.0, %v2790
        %v2792 = vpop.f32.mrb[0].mxu0
        %v2793 = vpop.f32.mrb[0].mxu0
        %v2794 = vadd.f32 0.0, %v2793
        %v2795 = vpop.f32.mrb[0].mxu0
        %2796 = vdwg.mxu0
        %v2797 = vld [vmem:[#allocation2] sm:$0xff]
        %v2798 = vld [vmem:[#allocation2 + $0x8] sm:$0xff]
        %v2799 = vld [vmem:[#allocation2 + $0x10] sm:$0xff]
        %v2800 = vld [vmem:[#allocation2 + $0x18] sm:$0xff]
        %v2801 = vld [vmem:[#allocation2 + $0x20] sm:$0xff]
        %v2802 = vld [vmem:[#allocation2 + $0x28] sm:$0xff]
        %v2803 = vld [vmem:[#allocation2 + $0x30] sm:$0xff]
        %v2804 = vld [vmem:[#allocation2 + $0x38] sm:$0xff]
        %v2805 = vld [vmem:[#allocation2 + $0x40] sm:$0xff]
        %v2806 = vld [vmem:[#allocation2 + $0x48] sm:$0xff]
        %v2807 = vld [vmem:[#allocation2 + $0x50] sm:$0xff]
        %v2808 = vld [vmem:[#allocation2 + $0x58] sm:$0xff]
        %v2809 = vld [vmem:[#allocation2 + $0x60] sm:$0xff]
        %v2810 = vld [vmem:[#allocation2 + $0x68] sm:$0xff]
        %v2811 = vld [vmem:[#allocation2 + $0x70] sm:$0xff]
        %v2812 = vld [vmem:[#allocation2 + $0x78] sm:$0xff]
        %v2813 = vld [vmem:[#allocation2 + $0x80] sm:$0xff]
        %v2814 = vld [vmem:[#allocation2 + $0x88] sm:$0xff]
        %v2815 = vld [vmem:[#allocation2 + $0x90] sm:$0xff]
        %v2816 = vld [vmem:[#allocation2 + $0x98] sm:$0xff]
        %v2817 = vld [vmem:[#allocation2 + $0xa0] sm:$0xff]
        %v2818 = vld [vmem:[#allocation2 + $0xa8] sm:$0xff]
        %v2819 = vld [vmem:[#allocation2 + $0xb0] sm:$0xff]
        %v2820 = vld [vmem:[#allocation2 + $0xb8] sm:$0xff]
        %v2821 = vld [vmem:[#allocation2 + $0xc0] sm:$0xff]
        %v2822 = vld [vmem:[#allocation2 + $0xc8] sm:$0xff]
        %v2823 = vld [vmem:[#allocation2 + $0xd0] sm:$0xff]
        %v2824 = vld [vmem:[#allocation2 + $0xd8] sm:$0xff]
        %v2825 = vld [vmem:[#allocation2 + $0xe0] sm:$0xff]
        %v2826 = vld [vmem:[#allocation2 + $0xe8] sm:$0xff]
        %v2827 = vld [vmem:[#allocation2 + $0xf0] sm:$0xff]
        %v2828 = vld [vmem:[#allocation2 + $0xf8] sm:$0xff]
        %v2829 = vld [vmem:[#allocation2 + $0x100] sm:$0xff]
        %v2830 = vld [vmem:[#allocation2 + $0x108] sm:$0xff]
        %v2831 = vld [vmem:[#allocation2 + $0x110] sm:$0xff]
        %v2832 = vld [vmem:[#allocation2 + $0x118] sm:$0xff]
        %v2833 = vld [vmem:[#allocation2 + $0x120] sm:$0xff]
        %v2834 = vld [vmem:[#allocation2 + $0x128] sm:$0xff]
        %v2835 = vld [vmem:[#allocation2 + $0x130] sm:$0xff]
        %v2836 = vld [vmem:[#allocation2 + $0x138] sm:$0xff]
        %v2837 = vld [vmem:[#allocation2 + $0x140] sm:$0xff]
        %v2838 = vld [vmem:[#allocation2 + $0x148] sm:$0xff]
        %v2839 = vld [vmem:[#allocation2 + $0x150] sm:$0xff]
        %v2840 = vld [vmem:[#allocation2 + $0x158] sm:$0xff]
        %v2841 = vadd.f32 %v2797, %v2623
        %v2842 = vadd.f32 %v2798, %v2626
        %v2843 = vadd.f32 %v2799, %v2631
        %v2844 = vadd.f32 %v2800, %v2634
        %v2845 = vadd.f32 %v2801, %v2639
        %v2846 = vadd.f32 %v2802, %v2642
        %v2847 = vadd.f32 %v2803, %v2647
        %v2848 = vadd.f32 %v2804, %v2650
        %v2849 = vadd.f32 %v2805, %v2655
        %v2850 = vadd.f32 %v2806, %v2658
        %v2851 = vadd.f32 %v2807, %v2663
        %v2852 = vadd.f32 %v2808, %v2666
        %v2853 = vadd.f32 %v2809, %v2671
        %v2854 = vadd.f32 %v2810, %v2674
        %v2855 = vadd.f32 %v2811, %v2679
        %v2856 = vadd.f32 %v2812, %v2682
        %v2857 = vadd.f32 %v2813, %v2687
        %v2858 = vadd.f32 %v2814, %v2690
        %v2859 = vadd.f32 %v2815, %v2695
        %v2860 = vadd.f32 %v2816, %v2698
        %v2861 = vadd.f32 %v2817, %v2703
        %v2862 = vadd.f32 %v2818, %v2706
        %v2863 = vadd.f32 %v2819, %v2711
        %v2864 = vadd.f32 %v2820, %v2714
        %v2865 = vadd.f32 %v2821, %v2719
        %v2866 = vadd.f32 %v2822, %v2722
        %v2867 = vadd.f32 %v2823, %v2727
        %v2868 = vadd.f32 %v2824, %v2730
        %v2869 = vadd.f32 %v2825, %v2735
        %v2870 = vadd.f32 %v2826, %v2738
        %v2871 = vadd.f32 %v2827, %v2743
        %v2872 = vadd.f32 %v2828, %v2746
        %v2873 = vadd.f32 %v2829, %v2751
        %v2874 = vadd.f32 %v2830, %v2754
        %v2875 = vadd.f32 %v2831, %v2759
        %v2876 = vadd.f32 %v2832, %v2762
        %v2877 = vadd.f32 %v2833, %v2767
        %v2878 = vadd.f32 %v2834, %v2770
        %v2879 = vadd.f32 %v2835, %v2775
        %v2880 = vadd.f32 %v2836, %v2778
        %v2881 = vadd.f32 %v2837, %v2783
        %v2882 = vadd.f32 %v2838, %v2786
        %v2883 = vadd.f32 %v2839, %v2791
        %v2884 = vadd.f32 %v2840, %v2794
        %2885 = vst.msk [vmem:[#allocation2] sm:$0xff] %vm744, %v2841
        %2886 = vst.msk [vmem:[#allocation2 + $0x8] sm:$0xff] %vm744, %v2842
        %2887 = vst.msk [vmem:[#allocation2 + $0x10] sm:$0xff] %vm744, %v2843
        %2888 = vst.msk [vmem:[#allocation2 + $0x18] sm:$0xff] %vm744, %v2844
        %2889 = vst.msk [vmem:[#allocation2 + $0x20] sm:$0xff] %vm744, %v2845
        %2890 = vst.msk [vmem:[#allocation2 + $0x28] sm:$0xff] %vm744, %v2846
        %2891 = vst.msk [vmem:[#allocation2 + $0x30] sm:$0xff] %vm744, %v2847
        %2892 = vst.msk [vmem:[#allocation2 + $0x38] sm:$0xff] %vm744, %v2848
        %2893 = vst.msk [vmem:[#allocation2 + $0x40] sm:$0xff] %vm744, %v2849
        %2894 = vst.msk [vmem:[#allocation2 + $0x48] sm:$0xff] %vm744, %v2850
        %2895 = vst.msk [vmem:[#allocation2 + $0x50] sm:$0xff] %vm744, %v2851
        %2896 = vst.msk [vmem:[#allocation2 + $0x58] sm:$0xff] %vm744, %v2852
        %2897 = vst.msk [vmem:[#allocation2 + $0x60] sm:$0xff] %vm744, %v2853
        %2898 = vst.msk [vmem:[#allocation2 + $0x68] sm:$0xff] %vm744, %v2854
        %2899 = vst.msk [vmem:[#allocation2 + $0x70] sm:$0xff] %vm744, %v2855
        %2900 = vst.msk [vmem:[#allocation2 + $0x78] sm:$0xff] %vm744, %v2856
        %2901 = vst.msk [vmem:[#allocation2 + $0x80] sm:$0xff] %vm744, %v2857
        %2902 = vst.msk [vmem:[#allocation2 + $0x88] sm:$0xff] %vm744, %v2858
        %2903 = vst.msk [vmem:[#allocation2 + $0x90] sm:$0xff] %vm744, %v2859
        %2904 = vst.msk [vmem:[#allocation2 + $0x98] sm:$0xff] %vm744, %v2860
        %2905 = vst.msk [vmem:[#allocation2 + $0xa0] sm:$0xff] %vm744, %v2861
        %2906 = vst.msk [vmem:[#allocation2 + $0xa8] sm:$0xff] %vm744, %v2862
        %2907 = vst.msk [vmem:[#allocation2 + $0xb0] sm:$0xff] %vm744, %v2863
        %2908 = vst.msk [vmem:[#allocation2 + $0xb8] sm:$0xff] %vm744, %v2864
        %2909 = vst.msk [vmem:[#allocation2 + $0xc0] sm:$0xff] %vm744, %v2865
        %2910 = vst.msk [vmem:[#allocation2 + $0xc8] sm:$0xff] %vm744, %v2866
        %2911 = vst.msk [vmem:[#allocation2 + $0xd0] sm:$0xff] %vm744, %v2867
        %2912 = vst.msk [vmem:[#allocation2 + $0xd8] sm:$0xff] %vm744, %v2868
        %2913 = vst.msk [vmem:[#allocation2 + $0xe0] sm:$0xff] %vm744, %v2869
        %2914 = vst.msk [vmem:[#allocation2 + $0xe8] sm:$0xff] %vm744, %v2870
        %2915 = vst.msk [vmem:[#allocation2 + $0xf0] sm:$0xff] %vm744, %v2871
        %2916 = vst.msk [vmem:[#allocation2 + $0xf8] sm:$0xff] %vm744, %v2872
        %2917 = vst.msk [vmem:[#allocation2 + $0x100] sm:$0xff] %vm744, %v2873
        %2918 = vst.msk [vmem:[#allocation2 + $0x108] sm:$0xff] %vm744, %v2874
        %2919 = vst.msk [vmem:[#allocation2 + $0x110] sm:$0xff] %vm744, %v2875
        %2920 = vst.msk [vmem:[#allocation2 + $0x118] sm:$0xff] %vm744, %v2876
        %2921 = vst.msk [vmem:[#allocation2 + $0x120] sm:$0xff] %vm744, %v2877
        %2922 = vst.msk [vmem:[#allocation2 + $0x128] sm:$0xff] %vm744, %v2878
        %2923 = vst.msk [vmem:[#allocation2 + $0x130] sm:$0xff] %vm744, %v2879
        %2924 = vst.msk [vmem:[#allocation2 + $0x138] sm:$0xff] %vm744, %v2880
        %2925 = vst.msk [vmem:[#allocation2 + $0x140] sm:$0xff] %vm744, %v2881
        %2926 = vst.msk [vmem:[#allocation2 + $0x148] sm:$0xff] %vm744, %v2882
        %2927 = vst.msk [vmem:[#allocation2 + $0x150] sm:$0xff] %vm744, %v2883
        %2928 = vst.msk [vmem:[#allocation2 + $0x158] sm:$0xff] %vm744, %v2884
        %s2929 = scalar_lea.vmem [#allocation5], 32
        %v2930 = vld [vmem:[%s2929] sm:$0xf]
        %v2931 = vld [vmem:[%s2929 + $0x4] sm:$0xf]
        %v2932 = vld [vmem:[%s2929 + $0x8] sm:$0xf]
        %v2933 = vld [vmem:[%s2929 + $0xc] sm:$0xf]
        %vm2957 = vcmask 1046528
        %v2958 = vrot.slane %v1537, 1
        %v2959 = vrot.slane %v1538, 1
        %v2960 = vsel %vm2957, %v2958, %v2959
        %v2961 = vrot.slane %v1539, 1
        %v2962 = vsel %vm2957, %v2959, %v2961
        %v2963 = vrot.slane %v1540, 1
        %v2964 = vsel %vm2957, %v2961, %v2963
        %v2965 = vrot.slane %v1541, 1
        %v2966 = vsel %vm2957, %v2963, %v2965
        %v2967 = vrot.slane %v1542, 1
        %v2968 = vsel %vm2957, %v2965, %v2967
        %v2969 = vrot.slane %v1543, 1
        %v2970 = vsel %vm2957, %v2967, %v2969
        %v2971 = vrot.slane %v1544, 1
        %v2972 = vsel %vm2957, %v2969, %v2971
        %v2973 = vrot.slane %v1545, 1
        %v2974 = vsel %vm2957, %v2971, %v2973
        %v2975 = vrot.slane %v1546, 1
        %v2976 = vsel %vm2957, %v2973, %v2975
        %v2977 = vrot.slane %v1547, 1
        %v2978 = vsel %vm2957, %v2975, %v2977
        %v2979 = vrot.slane %v1548, 1
        %v2980 = vsel %vm2957, %v2977, %v2979
        %v2981 = vrot.slane %v1549, 1
        %v2982 = vsel %vm2957, %v2979, %v2981
        %v2983 = vrot.slane %v1550, 1
        %v2984 = vsel %vm2957, %v2981, %v2983
        %v2985 = vrot.slane %v1551, 1
        %v2986 = vsel %vm2957, %v2983, %v2985
        %v2987 = vrot.slane %v1552, 1
        %v2988 = vsel %vm2957, %v2985, %v2987
        %v2989 = vrot.slane %v1553, 1
        %v2990 = vsel %vm2957, %v2987, %v2989
        %v2991 = vrot.slane %v1554, 1
        %v2992 = vsel %vm2957, %v2989, %v2991
        %v2993 = vrot.slane %v1555, 1
        %v2994 = vsel %vm2957, %v2991, %v2993
        %v2995 = vrot.slane %v1556, 1
        %v2996 = vsel %vm2957, %v2993, %v2995
        %v2997 = vrot.slane %v1557, 1
        %v2998 = vsel %vm2957, %v2995, %v2997
        %v2999 = vrot.slane %v1558, 1
        %v3000 = vsel %vm2957, %v2997, %v2999
        %v3001 = vrot.slane %v1559, 1
        %v3002 = vsel %vm2957, %v2999, %v3001
        %v3007 = vunpack.c.l.b16 %v2930
        %v3008 = vunpack.c.l.b16 %v2931
        %v3009 = vunpack.c.l.b16 %v2932
        %v3010 = vunpack.c.l.b16 %v2933
        %v3011 = vpack.c.b16 %v3008, %v3007
        %v3012 = vpack.c.b16 %v3010, %v3009
        %v3016 = vsel %vm468, %v2960, 0
        %v3019 = vsel %vm468, %v2962, 0
        %v3022 = vsel %vm468, %v2964, 0
        %v3025 = vsel %vm468, %v2966, 0
        %v3028 = vsel %vm468, %v2968, 0
        %v3031 = vsel %vm468, %v2970, 0
        %v3034 = vsel %vm468, %v2972, 0
        %v3037 = vsel %vm468, %v2974, 0
        %v3040 = vsel %vm468, %v2976, 0
        %v3043 = vsel %vm468, %v2978, 0
        %v3046 = vsel %vm468, %v2980, 0
        %v3049 = vsel %vm468, %v2982, 0
        %v3052 = vsel %vm468, %v2984, 0
        %v3055 = vsel %vm468, %v2986, 0
        %v3058 = vsel %vm468, %v2988, 0
        %v3061 = vsel %vm468, %v2990, 0
        %v3064 = vsel %vm468, %v2992, 0
        %v3067 = vsel %vm468, %v2994, 0
        %v3070 = vsel %vm468, %v2996, 0
        %v3073 = vsel %vm468, %v2998, 0
        %v3076 = vsel %vm468, %v3000, 0
        %v3079 = vsel %vm468, %v3002, 0
        %3081 = vmatprep.subr.bf16.mxu0 0
        %3082 = vmatpush1.bf16.msra.mxu0 %v3011
        %3083 = vmatprep.subr.bf16.mxu0 0
        %3084 = vmatpush1.bf16.msra.mxu0 %v3012
        %3085 = vmatprep.subr.bf16.mxu0 0
        %3086 = vmatpush1.bf16.msra.mxu0 0
        %3087 = vmatprep.subr.bf16.mxu0 0
        %3088 = vmatpush1.bf16.msra.mxu0 0
        %3089 = vmatprep.subr.bf16.mxu0 0
        %3090 = vmatpush1.bf16.msra.mxu0 0
        %3091 = vmatprep.subr.bf16.mxu0 0
        %3092 = vmatpush1.bf16.msra.mxu0 0
        %3093 = vmatprep.subr.bf16.mxu0 0
        %3094 = vmatpush1.bf16.msra.mxu0 0
        %3095 = vmatprep.subr.bf16.mxu0 0
        %3096 = vmatpush1.bf16.msra.mxu0 0
        %3097 = vmatprep.subr.bf16.mxu0 0
        %3098 = vmatpush1.bf16.msra.mxu0 0
        %3099 = vmatprep.subr.bf16.mxu0 0
        %3100 = vmatpush1.bf16.msra.mxu0 0
        %3101 = vmatprep.subr.bf16.mxu0 0
        %3102 = vmatpush1.bf16.msra.mxu0 0
        %3103 = vmatprep.subr.bf16.mxu0 0
        %3104 = vmatpush1.bf16.msra.mxu0 0
        %3105 = vmatprep.subr.bf16.mxu0 0
        %3106 = vmatpush1.bf16.msra.mxu0 0
        %3107 = vmatprep.subr.bf16.mxu0 0
        %3108 = vmatpush1.bf16.msra.mxu0 0
        %3109 = vmatprep.subr.bf16.mxu0 0
        %3110 = vmatpush1.bf16.msra.mxu0 0
        %3111 = vmatprep.subr.bf16.mxu0 0
        %3112 = vmatpush1.bf16.msra.mxu0 0
        %3113 = vmatprep.mubr.bf16.mxu0 0
        %3114 = vmatmul.mubr.bf16.gmra.mrb[0].mxu0 %v3016
        %v3115 = vpop.f32.mrb[0].mxu0
        %v3116 = vadd.f32 0.0, %v3115
        %v3117 = vpop.f32.mrb[0].mxu0
        %v3118 = vpop.f32.mrb[0].mxu0
        %v3119 = vadd.f32 0.0, %v3118
        %v3120 = vpop.f32.mrb[0].mxu0
        %3121 = vmatprep.mubr.bf16.mxu0 0
        %3122 = vmatmul.mubr.bf16.gmra.mrb[0].mxu0 %v3019
        %v3123 = vpop.f32.mrb[0].mxu0
        %v3124 = vadd.f32 0.0, %v3123
        %v3125 = vpop.f32.mrb[0].mxu0
        %v3126 = vpop.f32.mrb[0].mxu0
        %v3127 = vadd.f32 0.0, %v3126
        %v3128 = vpop.f32.mrb[0].mxu0
        %3129 = vmatprep.mubr.bf16.mxu0 0
        %3130 = vmatmul.mubr.bf16.gmra.mrb[0].mxu0 %v3022
        %v3131 = vpop.f32.mrb[0].mxu0
        %v3132 = vadd.f32 0.0, %v3131
        %v3133 = vpop.f32.mrb[0].mxu0
        %v3134 = vpop.f32.mrb[0].mxu0
        %v3135 = vadd.f32 0.0, %v3134
        %v3136 = vpop.f32.mrb[0].mxu0
        %3137 = vmatprep.mubr.bf16.mxu0 0
        %3138 = vmatmul.mubr.bf16.gmra.mrb[0].mxu0 %v3025
        %v3139 = vpop.f32.mrb[0].mxu0
        %v3140 = vadd.f32 0.0, %v3139
        %v3141 = vpop.f32.mrb[0].mxu0
        %v3142 = vpop.f32.mrb[0].mxu0
        %v3143 = vadd.f32 0.0, %v3142
        %v3144 = vpop.f32.mrb[0].mxu0
        %3145 = vmatprep.mubr.bf16.mxu0 0
        %3146 = vmatmul.mubr.bf16.gmra.mrb[0].mxu0 %v3028
        %v3147 = vpop.f32.mrb[0].mxu0
        %v3148 = vadd.f32 0.0, %v3147
        %v3149 = vpop.f32.mrb[0].mxu0
        %v3150 = vpop.f32.mrb[0].mxu0
        %v3151 = vadd.f32 0.0, %v3150
        %v3152 = vpop.f32.mrb[0].mxu0
        %3153 = vmatprep.mubr.bf16.mxu0 0
        %3154 = vmatmul.mubr.bf16.gmra.mrb[0].mxu0 %v3031
        %v3155 = vpop.f32.mrb[0].mxu0
        %v3156 = vadd.f32 0.0, %v3155
        %v3157 = vpop.f32.mrb[0].mxu0
        %v3158 = vpop.f32.mrb[0].mxu0
        %v3159 = vadd.f32 0.0, %v3158
        %v3160 = vpop.f32.mrb[0].mxu0
        %3161 = vmatprep.mubr.bf16.mxu0 0
        %3162 = vmatmul.mubr.bf16.gmra.mrb[0].mxu0 %v3034
        %v3163 = vpop.f32.mrb[0].mxu0
        %v3164 = vadd.f32 0.0, %v3163
        %v3165 = vpop.f32.mrb[0].mxu0
        %v3166 = vpop.f32.mrb[0].mxu0
        %v3167 = vadd.f32 0.0, %v3166
        %v3168 = vpop.f32.mrb[0].mxu0
        %3169 = vmatprep.mubr.bf16.mxu0 0
        %3170 = vmatmul.mubr.bf16.gmra.mrb[0].mxu0 %v3037
        %v3171 = vpop.f32.mrb[0].mxu0
        %v3172 = vadd.f32 0.0, %v3171
        %v3173 = vpop.f32.mrb[0].mxu0
        %v3174 = vpop.f32.mrb[0].mxu0
        %v3175 = vadd.f32 0.0, %v3174
        %v3176 = vpop.f32.mrb[0].mxu0
        %3177 = vmatprep.mubr.bf16.mxu0 0
        %3178 = vmatmul.mubr.bf16.gmra.mrb[0].mxu0 %v3040
        %v3179 = vpop.f32.mrb[0].mxu0
        %v3180 = vadd.f32 0.0, %v3179
        %v3181 = vpop.f32.mrb[0].mxu0
        %v3182 = vpop.f32.mrb[0].mxu0
        %v3183 = vadd.f32 0.0, %v3182
        %v3184 = vpop.f32.mrb[0].mxu0
        %3185 = vmatprep.mubr.bf16.mxu0 0
        %3186 = vmatmul.mubr.bf16.gmra.mrb[0].mxu0 %v3043
        %v3187 = vpop.f32.mrb[0].mxu0
        %v3188 = vadd.f32 0.0, %v3187
        %v3189 = vpop.f32.mrb[0].mxu0
        %v3190 = vpop.f32.mrb[0].mxu0
        %v3191 = vadd.f32 0.0, %v3190
        %v3192 = vpop.f32.mrb[0].mxu0
        %3193 = vmatprep.mubr.bf16.mxu0 0
        %3194 = vmatmul.mubr.bf16.gmra.mrb[0].mxu0 %v3046
        %v3195 = vpop.f32.mrb[0].mxu0
        %v3196 = vadd.f32 0.0, %v3195
        %v3197 = vpop.f32.mrb[0].mxu0
        %v3198 = vpop.f32.mrb[0].mxu0
        %v3199 = vadd.f32 0.0, %v3198
        %v3200 = vpop.f32.mrb[0].mxu0
        %3201 = vmatprep.mubr.bf16.mxu0 0
        %3202 = vmatmul.mubr.bf16.gmra.mrb[0].mxu0 %v3049
        %v3203 = vpop.f32.mrb[0].mxu0
        %v3204 = vadd.f32 0.0, %v3203
        %v3205 = vpop.f32.mrb[0].mxu0
        %v3206 = vpop.f32.mrb[0].mxu0
        %v3207 = vadd.f32 0.0, %v3206
        %v3208 = vpop.f32.mrb[0].mxu0
        %3209 = vmatprep.mubr.bf16.mxu0 0
        %3210 = vmatmul.mubr.bf16.gmra.mrb[0].mxu0 %v3052
        %v3211 = vpop.f32.mrb[0].mxu0
        %v3212 = vadd.f32 0.0, %v3211
        %v3213 = vpop.f32.mrb[0].mxu0
        %v3214 = vpop.f32.mrb[0].mxu0
        %v3215 = vadd.f32 0.0, %v3214
        %v3216 = vpop.f32.mrb[0].mxu0
        %3217 = vmatprep.mubr.bf16.mxu0 0
        %3218 = vmatmul.mubr.bf16.gmra.mrb[0].mxu0 %v3055
        %v3219 = vpop.f32.mrb[0].mxu0
        %v3220 = vadd.f32 0.0, %v3219
        %v3221 = vpop.f32.mrb[0].mxu0
        %v3222 = vpop.f32.mrb[0].mxu0
        %v3223 = vadd.f32 0.0, %v3222
        %v3224 = vpop.f32.mrb[0].mxu0
        %3225 = vmatprep.mubr.bf16.mxu0 0
        %3226 = vmatmul.mubr.bf16.gmra.mrb[0].mxu0 %v3058
        %v3227 = vpop.f32.mrb[0].mxu0
        %v3228 = vadd.f32 0.0, %v3227
        %v3229 = vpop.f32.mrb[0].mxu0
        %v3230 = vpop.f32.mrb[0].mxu0
        %v3231 = vadd.f32 0.0, %v3230
        %v3232 = vpop.f32.mrb[0].mxu0
        %3233 = vmatprep.mubr.bf16.mxu0 0
        %3234 = vmatmul.mubr.bf16.gmra.mrb[0].mxu0 %v3061
        %v3235 = vpop.f32.mrb[0].mxu0
        %v3236 = vadd.f32 0.0, %v3235
        %v3237 = vpop.f32.mrb[0].mxu0
        %v3238 = vpop.f32.mrb[0].mxu0
        %v3239 = vadd.f32 0.0, %v3238
        %v3240 = vpop.f32.mrb[0].mxu0
        %3241 = vmatprep.mubr.bf16.mxu0 0
        %3242 = vmatmul.mubr.bf16.gmra.mrb[0].mxu0 %v3064
        %v3243 = vpop.f32.mrb[0].mxu0
        %v3244 = vadd.f32 0.0, %v3243
        %v3245 = vpop.f32.mrb[0].mxu0
        %v3246 = vpop.f32.mrb[0].mxu0
        %v3247 = vadd.f32 0.0, %v3246
        %v3248 = vpop.f32.mrb[0].mxu0
        %3249 = vmatprep.mubr.bf16.mxu0 0
        %3250 = vmatmul.mubr.bf16.gmra.mrb[0].mxu0 %v3067
        %v3251 = vpop.f32.mrb[0].mxu0
        %v3252 = vadd.f32 0.0, %v3251
        %v3253 = vpop.f32.mrb[0].mxu0
        %v3254 = vpop.f32.mrb[0].mxu0
        %v3255 = vadd.f32 0.0, %v3254
        %v3256 = vpop.f32.mrb[0].mxu0
        %3257 = vmatprep.mubr.bf16.mxu0 0
        %3258 = vmatmul.mubr.bf16.gmra.mrb[0].mxu0 %v3070
        %v3259 = vpop.f32.mrb[0].mxu0
        %v3260 = vadd.f32 0.0, %v3259
        %v3261 = vpop.f32.mrb[0].mxu0
        %v3262 = vpop.f32.mrb[0].mxu0
        %v3263 = vadd.f32 0.0, %v3262
        %v3264 = vpop.f32.mrb[0].mxu0
        %3265 = vmatprep.mubr.bf16.mxu0 0
        %3266 = vmatmul.mubr.bf16.gmra.mrb[0].mxu0 %v3073
        %v3267 = vpop.f32.mrb[0].mxu0
        %v3268 = vadd.f32 0.0, %v3267
        %v3269 = vpop.f32.mrb[0].mxu0
        %v3270 = vpop.f32.mrb[0].mxu0
        %v3271 = vadd.f32 0.0, %v3270
        %v3272 = vpop.f32.mrb[0].mxu0
        %3273 = vmatprep.mubr.bf16.mxu0 0
        %3274 = vmatmul.mubr.bf16.gmra.mrb[0].mxu0 %v3076
        %v3275 = vpop.f32.mrb[0].mxu0
        %v3276 = vadd.f32 0.0, %v3275
        %v3277 = vpop.f32.mrb[0].mxu0
        %v3278 = vpop.f32.mrb[0].mxu0
        %v3279 = vadd.f32 0.0, %v3278
        %v3280 = vpop.f32.mrb[0].mxu0
        %3281 = vmatprep.mubr.bf16.mxu0 0
        %3282 = vmatmul.mubr.bf16.gmra.mrb[0].mxu0 %v3079
        %v3283 = vpop.f32.mrb[0].mxu0
        %v3284 = vadd.f32 0.0, %v3283
        %v3285 = vpop.f32.mrb[0].mxu0
        %v3286 = vpop.f32.mrb[0].mxu0
        %v3287 = vadd.f32 0.0, %v3286
        %v3288 = vpop.f32.mrb[0].mxu0
        %3289 = vdwg.mxu0
        %v3290 = vld [vmem:[#allocation2] sm:$0xff]
        %v3291 = vld [vmem:[#allocation2 + $0x8] sm:$0xff]
        %v3292 = vld [vmem:[#allocation2 + $0x10] sm:$0xff]
        %v3293 = vld [vmem:[#allocation2 + $0x18] sm:$0xff]
        %v3294 = vld [vmem:[#allocation2 + $0x20] sm:$0xff]
        %v3295 = vld [vmem:[#allocation2 + $0x28] sm:$0xff]
        %v3296 = vld [vmem:[#allocation2 + $0x30] sm:$0xff]
        %v3297 = vld [vmem:[#allocation2 + $0x38] sm:$0xff]
        %v3298 = vld [vmem:[#allocation2 + $0x40] sm:$0xff]
        %v3299 = vld [vmem:[#allocation2 + $0x48] sm:$0xff]
        %v3300 = vld [vmem:[#allocation2 + $0x50] sm:$0xff]
        %v3301 = vld [vmem:[#allocation2 + $0x58] sm:$0xff]
        %v3302 = vld [vmem:[#allocation2 + $0x60] sm:$0xff]
        %v3303 = vld [vmem:[#allocation2 + $0x68] sm:$0xff]
        %v3304 = vld [vmem:[#allocation2 + $0x70] sm:$0xff]
        %v3305 = vld [vmem:[#allocation2 + $0x78] sm:$0xff]
        %v3306 = vld [vmem:[#allocation2 + $0x80] sm:$0xff]
        %v3307 = vld [vmem:[#allocation2 + $0x88] sm:$0xff]
        %v3308 = vld [vmem:[#allocation2 + $0x90] sm:$0xff]
        %v3309 = vld [vmem:[#allocation2 + $0x98] sm:$0xff]
        %v3310 = vld [vmem:[#allocation2 + $0xa0] sm:$0xff]
        %v3311 = vld [vmem:[#allocation2 + $0xa8] sm:$0xff]
        %v3312 = vld [vmem:[#allocation2 + $0xb0] sm:$0xff]
        %v3313 = vld [vmem:[#allocation2 + $0xb8] sm:$0xff]
        %v3314 = vld [vmem:[#allocation2 + $0xc0] sm:$0xff]
        %v3315 = vld [vmem:[#allocation2 + $0xc8] sm:$0xff]
        %v3316 = vld [vmem:[#allocation2 + $0xd0] sm:$0xff]
        %v3317 = vld [vmem:[#allocation2 + $0xd8] sm:$0xff]
        %v3318 = vld [vmem:[#allocation2 + $0xe0] sm:$0xff]
        %v3319 = vld [vmem:[#allocation2 + $0xe8] sm:$0xff]
        %v3320 = vld [vmem:[#allocation2 + $0xf0] sm:$0xff]
        %v3321 = vld [vmem:[#allocation2 + $0xf8] sm:$0xff]
        %v3322 = vld [vmem:[#allocation2 + $0x100] sm:$0xff]
        %v3323 = vld [vmem:[#allocation2 + $0x108] sm:$0xff]
        %v3324 = vld [vmem:[#allocation2 + $0x110] sm:$0xff]
        %v3325 = vld [vmem:[#allocation2 + $0x118] sm:$0xff]
        %v3326 = vld [vmem:[#allocation2 + $0x120] sm:$0xff]
        %v3327 = vld [vmem:[#allocation2 + $0x128] sm:$0xff]
        %v3328 = vld [vmem:[#allocation2 + $0x130] sm:$0xff]
        %v3329 = vld [vmem:[#allocation2 + $0x138] sm:$0xff]
        %v3330 = vld [vmem:[#allocation2 + $0x140] sm:$0xff]
        %v3331 = vld [vmem:[#allocation2 + $0x148] sm:$0xff]
        %v3332 = vld [vmem:[#allocation2 + $0x150] sm:$0xff]
        %v3333 = vld [vmem:[#allocation2 + $0x158] sm:$0xff]
        %v3334 = vadd.f32 %v3290, %v3116
        %v3335 = vadd.f32 %v3291, %v3119
        %v3336 = vadd.f32 %v3292, %v3124
        %v3337 = vadd.f32 %v3293, %v3127
        %v3338 = vadd.f32 %v3294, %v3132
        %v3339 = vadd.f32 %v3295, %v3135
        %v3340 = vadd.f32 %v3296, %v3140
        %v3341 = vadd.f32 %v3297, %v3143
        %v3342 = vadd.f32 %v3298, %v3148
        %v3343 = vadd.f32 %v3299, %v3151
        %v3344 = vadd.f32 %v3300, %v3156
        %v3345 = vadd.f32 %v3301, %v3159
        %v3346 = vadd.f32 %v3302, %v3164
        %v3347 = vadd.f32 %v3303, %v3167
        %v3348 = vadd.f32 %v3304, %v3172
        %v3349 = vadd.f32 %v3305, %v3175
        %v3350 = vadd.f32 %v3306, %v3180
        %v3351 = vadd.f32 %v3307, %v3183
        %v3352 = vadd.f32 %v3308, %v3188
        %v3353 = vadd.f32 %v3309, %v3191
        %v3354 = vadd.f32 %v3310, %v3196
        %v3355 = vadd.f32 %v3311, %v3199
        %v3356 = vadd.f32 %v3312, %v3204
        %v3357 = vadd.f32 %v3313, %v3207
        %v3358 = vadd.f32 %v3314, %v3212
        %v3359 = vadd.f32 %v3315, %v3215
        %v3360 = vadd.f32 %v3316, %v3220
        %v3361 = vadd.f32 %v3317, %v3223
        %v3362 = vadd.f32 %v3318, %v3228
        %v3363 = vadd.f32 %v3319, %v3231
        %v3364 = vadd.f32 %v3320, %v3236
        %v3365 = vadd.f32 %v3321, %v3239
        %v3366 = vadd.f32 %v3322, %v3244
        %v3367 = vadd.f32 %v3323, %v3247
        %v3368 = vadd.f32 %v3324, %v3252
        %v3369 = vadd.f32 %v3325, %v3255
        %v3370 = vadd.f32 %v3326, %v3260
        %v3371 = vadd.f32 %v3327, %v3263
        %v3372 = vadd.f32 %v3328, %v3268
        %v3373 = vadd.f32 %v3329, %v3271
        %v3374 = vadd.f32 %v3330, %v3276
        %v3375 = vadd.f32 %v3331, %v3279
        %v3376 = vadd.f32 %v3332, %v3284
        %v3377 = vadd.f32 %v3333, %v3287
        %3378 = vst.msk [vmem:[#allocation2] sm:$0xff] %vm744, %v3334
        %3379 = vst.msk [vmem:[#allocation2 + $0x8] sm:$0xff] %vm744, %v3335
        %3380 = vst.msk [vmem:[#allocation2 + $0x10] sm:$0xff] %vm744, %v3336
        %3381 = vst.msk [vmem:[#allocation2 + $0x18] sm:$0xff] %vm744, %v3337
        %3382 = vst.msk [vmem:[#allocation2 + $0x20] sm:$0xff] %vm744, %v3338
        %3383 = vst.msk [vmem:[#allocation2 + $0x28] sm:$0xff] %vm744, %v3339
        %3384 = vst.msk [vmem:[#allocation2 + $0x30] sm:$0xff] %vm744, %v3340
        %3385 = vst.msk [vmem:[#allocation2 + $0x38] sm:$0xff] %vm744, %v3341
        %3386 = vst.msk [vmem:[#allocation2 + $0x40] sm:$0xff] %vm744, %v3342
        %3387 = vst.msk [vmem:[#allocation2 + $0x48] sm:$0xff] %vm744, %v3343
        %3388 = vst.msk [vmem:[#allocation2 + $0x50] sm:$0xff] %vm744, %v3344
        %3389 = vst.msk [vmem:[#allocation2 + $0x58] sm:$0xff] %vm744, %v3345
        %3390 = vst.msk [vmem:[#allocation2 + $0x60] sm:$0xff] %vm744, %v3346
        %3391 = vst.msk [vmem:[#allocation2 + $0x68] sm:$0xff] %vm744, %v3347
        %3392 = vst.msk [vmem:[#allocation2 + $0x70] sm:$0xff] %vm744, %v3348
        %3393 = vst.msk [vmem:[#allocation2 + $0x78] sm:$0xff] %vm744, %v3349
        %3394 = vst.msk [vmem:[#allocation2 + $0x80] sm:$0xff] %vm744, %v3350
        %3395 = vst.msk [vmem:[#allocation2 + $0x88] sm:$0xff] %vm744, %v3351
        %3396 = vst.msk [vmem:[#allocation2 + $0x90] sm:$0xff] %vm744, %v3352
        %3397 = vst.msk [vmem:[#allocation2 + $0x98] sm:$0xff] %vm744, %v3353
        %3398 = vst.msk [vmem:[#allocation2 + $0xa0] sm:$0xff] %vm744, %v3354
        %3399 = vst.msk [vmem:[#allocation2 + $0xa8] sm:$0xff] %vm744, %v3355
        %3400 = vst.msk [vmem:[#allocation2 + $0xb0] sm:$0xff] %vm744, %v3356
        %3401 = vst.msk [vmem:[#allocation2 + $0xb8] sm:$0xff] %vm744, %v3357
        %3402 = vst.msk [vmem:[#allocation2 + $0xc0] sm:$0xff] %vm744, %v3358
        %3403 = vst.msk [vmem:[#allocation2 + $0xc8] sm:$0xff] %vm744, %v3359
        %3404 = vst.msk [vmem:[#allocation2 + $0xd0] sm:$0xff] %vm744, %v3360
        %3405 = vst.msk [vmem:[#allocation2 + $0xd8] sm:$0xff] %vm744, %v3361
        %3406 = vst.msk [vmem:[#allocation2 + $0xe0] sm:$0xff] %vm744, %v3362
        %3407 = vst.msk [vmem:[#allocation2 + $0xe8] sm:$0xff] %vm744, %v3363
        %3408 = vst.msk [vmem:[#allocation2 + $0xf0] sm:$0xff] %vm744, %v3364
        %3409 = vst.msk [vmem:[#allocation2 + $0xf8] sm:$0xff] %vm744, %v3365
        %3410 = vst.msk [vmem:[#allocation2 + $0x100] sm:$0xff] %vm744, %v3366
        %3411 = vst.msk [vmem:[#allocation2 + $0x108] sm:$0xff] %vm744, %v3367
        %3412 = vst.msk [vmem:[#allocation2 + $0x110] sm:$0xff] %vm744, %v3368
        %3413 = vst.msk [vmem:[#allocation2 + $0x118] sm:$0xff] %vm744, %v3369
        %3414 = vst.msk [vmem:[#allocation2 + $0x120] sm:$0xff] %vm744, %v3370
        %3415 = vst.msk [vmem:[#allocation2 + $0x128] sm:$0xff] %vm744, %v3371
        %3416 = vst.msk [vmem:[#allocation2 + $0x130] sm:$0xff] %vm744, %v3372
        %3417 = vst.msk [vmem:[#allocation2 + $0x138] sm:$0xff] %vm744, %v3373
        %3418 = vst.msk [vmem:[#allocation2 + $0x140] sm:$0xff] %vm744, %v3374
        %3419 = vst.msk [vmem:[#allocation2 + $0x148] sm:$0xff] %vm744, %v3375
        %3420 = vst.msk [vmem:[#allocation2 + $0x150] sm:$0xff] %vm744, %v3376
        %3421 = vst.msk [vmem:[#allocation2 + $0x158] sm:$0xff] %vm744, %v3377
        %s3422 = scalar_lea.vmem [#allocation5], 80
        %v3423 = vld [vmem:[%s3422] sm:$0xf]
        %v3424 = vld [vmem:[%s3422 + $0x4] sm:$0xf]
        %v3425 = vld [vmem:[%s3422 + $0x8] sm:$0xf]
        %v3426 = vld [vmem:[%s3422 + $0xc] sm:$0xf]
        %v3429 = vrot.slane %v1560, 1
        %v3430 = vsel %vm2957, %v3001, %v3429
        %v3431 = vrot.slane %v1561, 1
        %v3432 = vsel %vm2957, %v3429, %v3431
        %v3437 = vunpack.c.l.b16 %v3423
        %v3438 = vunpack.c.l.b16 %v3424
        %v3439 = vunpack.c.l.b16 %v3425
        %v3440 = vunpack.c.l.b16 %v3426
        %v3441 = vpack.c.b16 %v3438, %v3437
        %v3442 = vpack.c.b16 %v3440, %v3439
        %v3446 = vsel %vm468, %v3430, 0
        %v3449 = vsel %vm468, %v3432, 0
        %3451 = vmatprep.subr.bf16.mxu0 0
        %3452 = vmatpush1.bf16.msra.mxu0 %v3441
        %3453 = vmatprep.subr.bf16.mxu0 0
        %3454 = vmatpush1.bf16.msra.mxu0 %v3442
        %3455 = vmatprep.subr.bf16.mxu0 0
        %3456 = vmatpush1.bf16.msra.mxu0 0
        %3457 = vmatprep.subr.bf16.mxu0 0
        %3458 = vmatpush1.bf16.msra.mxu0 0
        %3459 = vmatprep.subr.bf16.mxu0 0
        %3460 = vmatpush1.bf16.msra.mxu0 0
        %3461 = vmatprep.subr.bf16.mxu0 0
        %3462 = vmatpush1.bf16.msra.mxu0 0
        %3463 = vmatprep.subr.bf16.mxu0 0
        %3464 = vmatpush1.bf16.msra.mxu0 0
        %3465 = vmatprep.subr.bf16.mxu0 0
        %3466 = vmatpush1.bf16.msra.mxu0 0
        %3467 = vmatprep.subr.bf16.mxu0 0
        %3468 = vmatpush1.bf16.msra.mxu0 0
        %3469 = vmatprep.subr.bf16.mxu0 0
        %3470 = vmatpush1.bf16.msra.mxu0 0
        %3471 = vmatprep.subr.bf16.mxu0 0
        %3472 = vmatpush1.bf16.msra.mxu0 0
        %3473 = vmatprep.subr.bf16.mxu0 0
        %3474 = vmatpush1.bf16.msra.mxu0 0
        %3475 = vmatprep.subr.bf16.mxu0 0
        %3476 = vmatpush1.bf16.msra.mxu0 0
        %3477 = vmatprep.subr.bf16.mxu0 0
        %3478 = vmatpush1.bf16.msra.mxu0 0
        %3479 = vmatprep.subr.bf16.mxu0 0
        %3480 = vmatpush1.bf16.msra.mxu0 0
        %3481 = vmatprep.subr.bf16.mxu0 0
        %3482 = vmatpush1.bf16.msra.mxu0 0
        %3483 = vmatprep.mubr.bf16.mxu0 0
        %3484 = vmatmul.mubr.bf16.gmra.mrb[0].mxu0 %v3022
        %v3485 = vpop.f32.mrb[0].mxu0
        %v3486 = vadd.f32 0.0, %v3485
        %v3487 = vpop.f32.mrb[0].mxu0
        %v3488 = vpop.f32.mrb[0].mxu0
        %v3489 = vadd.f32 0.0, %v3488
        %v3490 = vpop.f32.mrb[0].mxu0
        %3491 = vmatprep.mubr.bf16.mxu0 0
        %3492 = vmatmul.mubr.bf16.gmra.mrb[0].mxu0 %v3025
        %v3493 = vpop.f32.mrb[0].mxu0
        %v3494 = vadd.f32 0.0, %v3493
        %v3495 = vpop.f32.mrb[0].mxu0
        %v3496 = vpop.f32.mrb[0].mxu0
        %v3497 = vadd.f32 0.0, %v3496
        %v3498 = vpop.f32.mrb[0].mxu0
        %3499 = vmatprep.mubr.bf16.mxu0 0
        %3500 = vmatmul.mubr.bf16.gmra.mrb[0].mxu0 %v3028
        %v3501 = vpop.f32.mrb[0].mxu0
        %v3502 = vadd.f32 0.0, %v3501
        %v3503 = vpop.f32.mrb[0].mxu0
        %v3504 = vpop.f32.mrb[0].mxu0
        %v3505 = vadd.f32 0.0, %v3504
        %v3506 = vpop.f32.mrb[0].mxu0
        %3507 = vmatprep.mubr.bf16.mxu0 0
        %3508 = vmatmul.mubr.bf16.gmra.mrb[0].mxu0 %v3031
        %v3509 = vpop.f32.mrb[0].mxu0
        %v3510 = vadd.f32 0.0, %v3509
        %v3511 = vpop.f32.mrb[0].mxu0
        %v3512 = vpop.f32.mrb[0].mxu0
        %v3513 = vadd.f32 0.0, %v3512
        %v3514 = vpop.f32.mrb[0].mxu0
        %3515 = vmatprep.mubr.bf16.mxu0 0
        %3516 = vmatmul.mubr.bf16.gmra.mrb[0].mxu0 %v3034
        %v3517 = vpop.f32.mrb[0].mxu0
        %v3518 = vadd.f32 0.0, %v3517
        %v3519 = vpop.f32.mrb[0].mxu0
        %v3520 = vpop.f32.mrb[0].mxu0
        %v3521 = vadd.f32 0.0, %v3520
        %v3522 = vpop.f32.mrb[0].mxu0
        %3523 = vmatprep.mubr.bf16.mxu0 0
        %3524 = vmatmul.mubr.bf16.gmra.mrb[0].mxu0 %v3037
        %v3525 = vpop.f32.mrb[0].mxu0
        %v3526 = vadd.f32 0.0, %v3525
        %v3527 = vpop.f32.mrb[0].mxu0
        %v3528 = vpop.f32.mrb[0].mxu0
        %v3529 = vadd.f32 0.0, %v3528
        %v3530 = vpop.f32.mrb[0].mxu0
        %3531 = vmatprep.mubr.bf16.mxu0 0
        %3532 = vmatmul.mubr.bf16.gmra.mrb[0].mxu0 %v3040
        %v3533 = vpop.f32.mrb[0].mxu0
        %v3534 = vadd.f32 0.0, %v3533
        %v3535 = vpop.f32.mrb[0].mxu0
        %v3536 = vpop.f32.mrb[0].mxu0
        %v3537 = vadd.f32 0.0, %v3536
        %v3538 = vpop.f32.mrb[0].mxu0
        %3539 = vmatprep.mubr.bf16.mxu0 0
        %3540 = vmatmul.mubr.bf16.gmra.mrb[0].mxu0 %v3043
        %v3541 = vpop.f32.mrb[0].mxu0
        %v3542 = vadd.f32 0.0, %v3541
        %v3543 = vpop.f32.mrb[0].mxu0
        %v3544 = vpop.f32.mrb[0].mxu0
        %v3545 = vadd.f32 0.0, %v3544
        %v3546 = vpop.f32.mrb[0].mxu0
        %3547 = vmatprep.mubr.bf16.mxu0 0
        %3548 = vmatmul.mubr.bf16.gmra.mrb[0].mxu0 %v3046
        %v3549 = vpop.f32.mrb[0].mxu0
        %v3550 = vadd.f32 0.0, %v3549
        %v3551 = vpop.f32.mrb[0].mxu0
        %v3552 = vpop.f32.mrb[0].mxu0
        %v3553 = vadd.f32 0.0, %v3552
        %v3554 = vpop.f32.mrb[0].mxu0
        %3555 = vmatprep.mubr.bf16.mxu0 0
        %3556 = vmatmul.mubr.bf16.gmra.mrb[0].mxu0 %v3049
        %v3557 = vpop.f32.mrb[0].mxu0
        %v3558 = vadd.f32 0.0, %v3557
        %v3559 = vpop.f32.mrb[0].mxu0
        %v3560 = vpop.f32.mrb[0].mxu0
        %v3561 = vadd.f32 0.0, %v3560
        %v3562 = vpop.f32.mrb[0].mxu0
        %3563 = vmatprep.mubr.bf16.mxu0 0
        %3564 = vmatmul.mubr.bf16.gmra.mrb[0].mxu0 %v3052
        %v3565 = vpop.f32.mrb[0].mxu0
        %v3566 = vadd.f32 0.0, %v3565
        %v3567 = vpop.f32.mrb[0].mxu0
        %v3568 = vpop.f32.mrb[0].mxu0
        %v3569 = vadd.f32 0.0, %v3568
        %v3570 = vpop.f32.mrb[0].mxu0
        %3571 = vmatprep.mubr.bf16.mxu0 0
        %3572 = vmatmul.mubr.bf16.gmra.mrb[0].mxu0 %v3055
        %v3573 = vpop.f32.mrb[0].mxu0
        %v3574 = vadd.f32 0.0, %v3573
        %v3575 = vpop.f32.mrb[0].mxu0
        %v3576 = vpop.f32.mrb[0].mxu0
        %v3577 = vadd.f32 0.0, %v3576
        %v3578 = vpop.f32.mrb[0].mxu0
        %3579 = vmatprep.mubr.bf16.mxu0 0
        %3580 = vmatmul.mubr.bf16.gmra.mrb[0].mxu0 %v3058
        %v3581 = vpop.f32.mrb[0].mxu0
        %v3582 = vadd.f32 0.0, %v3581
        %v3583 = vpop.f32.mrb[0].mxu0
        %v3584 = vpop.f32.mrb[0].mxu0
        %v3585 = vadd.f32 0.0, %v3584
        %v3586 = vpop.f32.mrb[0].mxu0
        %3587 = vmatprep.mubr.bf16.mxu0 0
        %3588 = vmatmul.mubr.bf16.gmra.mrb[0].mxu0 %v3061
        %v3589 = vpop.f32.mrb[0].mxu0
        %v3590 = vadd.f32 0.0, %v3589
        %v3591 = vpop.f32.mrb[0].mxu0
        %v3592 = vpop.f32.mrb[0].mxu0
        %v3593 = vadd.f32 0.0, %v3592
        %v3594 = vpop.f32.mrb[0].mxu0
        %3595 = vmatprep.mubr.bf16.mxu0 0
        %3596 = vmatmul.mubr.bf16.gmra.mrb[0].mxu0 %v3064
        %v3597 = vpop.f32.mrb[0].mxu0
        %v3598 = vadd.f32 0.0, %v3597
        %v3599 = vpop.f32.mrb[0].mxu0
        %v3600 = vpop.f32.mrb[0].mxu0
        %v3601 = vadd.f32 0.0, %v3600
        %v3602 = vpop.f32.mrb[0].mxu0
        %3603 = vmatprep.mubr.bf16.mxu0 0
        %3604 = vmatmul.mubr.bf16.gmra.mrb[0].mxu0 %v3067
        %v3605 = vpop.f32.mrb[0].mxu0
        %v3606 = vadd.f32 0.0, %v3605
        %v3607 = vpop.f32.mrb[0].mxu0
        %v3608 = vpop.f32.mrb[0].mxu0
        %v3609 = vadd.f32 0.0, %v3608
        %v3610 = vpop.f32.mrb[0].mxu0
        %3611 = vmatprep.mubr.bf16.mxu0 0
        %3612 = vmatmul.mubr.bf16.gmra.mrb[0].mxu0 %v3070
        %v3613 = vpop.f32.mrb[0].mxu0
        %v3614 = vadd.f32 0.0, %v3613
        %v3615 = vpop.f32.mrb[0].mxu0
        %v3616 = vpop.f32.mrb[0].mxu0
        %v3617 = vadd.f32 0.0, %v3616
        %v3618 = vpop.f32.mrb[0].mxu0
        %3619 = vmatprep.mubr.bf16.mxu0 0
        %3620 = vmatmul.mubr.bf16.gmra.mrb[0].mxu0 %v3073
        %v3621 = vpop.f32.mrb[0].mxu0
        %v3622 = vadd.f32 0.0, %v3621
        %v3623 = vpop.f32.mrb[0].mxu0
        %v3624 = vpop.f32.mrb[0].mxu0
        %v3625 = vadd.f32 0.0, %v3624
        %v3626 = vpop.f32.mrb[0].mxu0
        %3627 = vmatprep.mubr.bf16.mxu0 0
        %3628 = vmatmul.mubr.bf16.gmra.mrb[0].mxu0 %v3076
        %v3629 = vpop.f32.mrb[0].mxu0
        %v3630 = vadd.f32 0.0, %v3629
        %v3631 = vpop.f32.mrb[0].mxu0
        %v3632 = vpop.f32.mrb[0].mxu0
        %v3633 = vadd.f32 0.0, %v3632
        %v3634 = vpop.f32.mrb[0].mxu0
        %3635 = vmatprep.mubr.bf16.mxu0 0
        %3636 = vmatmul.mubr.bf16.gmra.mrb[0].mxu0 %v3079
        %v3637 = vpop.f32.mrb[0].mxu0
        %v3638 = vadd.f32 0.0, %v3637
        %v3639 = vpop.f32.mrb[0].mxu0
        %v3640 = vpop.f32.mrb[0].mxu0
        %v3641 = vadd.f32 0.0, %v3640
        %v3642 = vpop.f32.mrb[0].mxu0
        %3643 = vmatprep.mubr.bf16.mxu0 0
        %3644 = vmatmul.mubr.bf16.gmra.mrb[0].mxu0 %v3446
        %v3645 = vpop.f32.mrb[0].mxu0
        %v3646 = vadd.f32 0.0, %v3645
        %v3647 = vpop.f32.mrb[0].mxu0
        %v3648 = vpop.f32.mrb[0].mxu0
        %v3649 = vadd.f32 0.0, %v3648
        %v3650 = vpop.f32.mrb[0].mxu0
        %3651 = vmatprep.mubr.bf16.mxu0 0
        %3652 = vmatmul.mubr.bf16.gmra.mrb[0].mxu0 %v3449
        %v3653 = vpop.f32.mrb[0].mxu0
        %v3654 = vadd.f32 0.0, %v3653
        %v3655 = vpop.f32.mrb[0].mxu0
        %v3656 = vpop.f32.mrb[0].mxu0
        %v3657 = vadd.f32 0.0, %v3656
        %v3658 = vpop.f32.mrb[0].mxu0
        %3659 = vdwg.mxu0
        %v3660 = vld [vmem:[#allocation2] sm:$0xff]
        %v3661 = vld [vmem:[#allocation2 + $0x8] sm:$0xff]
        %v3662 = vld [vmem:[#allocation2 + $0x10] sm:$0xff]
        %v3663 = vld [vmem:[#allocation2 + $0x18] sm:$0xff]
        %v3664 = vld [vmem:[#allocation2 + $0x20] sm:$0xff]
        %v3665 = vld [vmem:[#allocation2 + $0x28] sm:$0xff]
        %v3666 = vld [vmem:[#allocation2 + $0x30] sm:$0xff]
        %v3667 = vld [vmem:[#allocation2 + $0x38] sm:$0xff]
        %v3668 = vld [vmem:[#allocation2 + $0x40] sm:$0xff]
        %v3669 = vld [vmem:[#allocation2 + $0x48] sm:$0xff]
        %v3670 = vld [vmem:[#allocation2 + $0x50] sm:$0xff]
        %v3671 = vld [vmem:[#allocation2 + $0x58] sm:$0xff]
        %v3672 = vld [vmem:[#allocation2 + $0x60] sm:$0xff]
        %v3673 = vld [vmem:[#allocation2 + $0x68] sm:$0xff]
        %v3674 = vld [vmem:[#allocation2 + $0x70] sm:$0xff]
        %v3675 = vld [vmem:[#allocation2 + $0x78] sm:$0xff]
        %v3676 = vld [vmem:[#allocation2 + $0x80] sm:$0xff]
        %v3677 = vld [vmem:[#allocation2 + $0x88] sm:$0xff]
        %v3678 = vld [vmem:[#allocation2 + $0x90] sm:$0xff]
        %v3679 = vld [vmem:[#allocation2 + $0x98] sm:$0xff]
        %v3680 = vld [vmem:[#allocation2 + $0xa0] sm:$0xff]
        %v3681 = vld [vmem:[#allocation2 + $0xa8] sm:$0xff]
        %v3682 = vld [vmem:[#allocation2 + $0xb0] sm:$0xff]
        %v3683 = vld [vmem:[#allocation2 + $0xb8] sm:$0xff]
        %v3684 = vld [vmem:[#allocation2 + $0xc0] sm:$0xff]
        %v3685 = vld [vmem:[#allocation2 + $0xc8] sm:$0xff]
        %v3686 = vld [vmem:[#allocation2 + $0xd0] sm:$0xff]
        %v3687 = vld [vmem:[#allocation2 + $0xd8] sm:$0xff]
        %v3688 = vld [vmem:[#allocation2 + $0xe0] sm:$0xff]
        %v3689 = vld [vmem:[#allocation2 + $0xe8] sm:$0xff]
        %v3690 = vld [vmem:[#allocation2 + $0xf0] sm:$0xff]
        %v3691 = vld [vmem:[#allocation2 + $0xf8] sm:$0xff]
        %v3692 = vld [vmem:[#allocation2 + $0x100] sm:$0xff]
        %v3693 = vld [vmem:[#allocation2 + $0x108] sm:$0xff]
        %v3694 = vld [vmem:[#allocation2 + $0x110] sm:$0xff]
        %v3695 = vld [vmem:[#allocation2 + $0x118] sm:$0xff]
        %v3696 = vld [vmem:[#allocation2 + $0x120] sm:$0xff]
        %v3697 = vld [vmem:[#allocation2 + $0x128] sm:$0xff]
        %v3698 = vld [vmem:[#allocation2 + $0x130] sm:$0xff]
        %v3699 = vld [vmem:[#allocation2 + $0x138] sm:$0xff]
        %v3700 = vld [vmem:[#allocation2 + $0x140] sm:$0xff]
        %v3701 = vld [vmem:[#allocation2 + $0x148] sm:$0xff]
        %v3702 = vld [vmem:[#allocation2 + $0x150] sm:$0xff]
        %v3703 = vld [vmem:[#allocation2 + $0x158] sm:$0xff]
        %v3704 = vadd.f32 %v3660, %v3486
        %v3705 = vadd.f32 %v3661, %v3489
        %v3706 = vadd.f32 %v3662, %v3494
        %v3707 = vadd.f32 %v3663, %v3497
        %v3708 = vadd.f32 %v3664, %v3502
        %v3709 = vadd.f32 %v3665, %v3505
        %v3710 = vadd.f32 %v3666, %v3510
        %v3711 = vadd.f32 %v3667, %v3513
        %v3712 = vadd.f32 %v3668, %v3518
        %v3713 = vadd.f32 %v3669, %v3521
        %v3714 = vadd.f32 %v3670, %v3526
        %v3715 = vadd.f32 %v3671, %v3529
        %v3716 = vadd.f32 %v3672, %v3534
        %v3717 = vadd.f32 %v3673, %v3537
        %v3718 = vadd.f32 %v3674, %v3542
        %v3719 = vadd.f32 %v3675, %v3545
        %v3720 = vadd.f32 %v3676, %v3550
        %v3721 = vadd.f32 %v3677, %v3553
        %v3722 = vadd.f32 %v3678, %v3558
        %v3723 = vadd.f32 %v3679, %v3561
        %v3724 = vadd.f32 %v3680, %v3566
        %v3725 = vadd.f32 %v3681, %v3569
        %v3726 = vadd.f32 %v3682, %v3574
        %v3727 = vadd.f32 %v3683, %v3577
        %v3728 = vadd.f32 %v3684, %v3582
        %v3729 = vadd.f32 %v3685, %v3585
        %v3730 = vadd.f32 %v3686, %v3590
        %v3731 = vadd.f32 %v3687, %v3593
        %v3732 = vadd.f32 %v3688, %v3598
        %v3733 = vadd.f32 %v3689, %v3601
        %v3734 = vadd.f32 %v3690, %v3606
        %v3735 = vadd.f32 %v3691, %v3609
        %v3736 = vadd.f32 %v3692, %v3614
        %v3737 = vadd.f32 %v3693, %v3617
        %v3738 = vadd.f32 %v3694, %v3622
        %v3739 = vadd.f32 %v3695, %v3625
        %v3740 = vadd.f32 %v3696, %v3630
        %v3741 = vadd.f32 %v3697, %v3633
        %v3742 = vadd.f32 %v3698, %v3638
        %v3743 = vadd.f32 %v3699, %v3641
        %v3744 = vadd.f32 %v3700, %v3646
        %v3745 = vadd.f32 %v3701, %v3649
        %v3746 = vadd.f32 %v3702, %v3654
        %v3747 = vadd.f32 %v3703, %v3657
        %3748 = vst.msk [vmem:[#allocation2] sm:$0xff] %vm744, %v3704
        %3749 = vst.msk [vmem:[#allocation2 + $0x8] sm:$0xff] %vm744, %v3705
        %3750 = vst.msk [vmem:[#allocation2 + $0x10] sm:$0xff] %vm744, %v3706
        %3751 = vst.msk [vmem:[#allocation2 + $0x18] sm:$0xff] %vm744, %v3707
        %3752 = vst.msk [vmem:[#allocation2 + $0x20] sm:$0xff] %vm744, %v3708
        %3753 = vst.msk [vmem:[#allocation2 + $0x28] sm:$0xff] %vm744, %v3709
        %3754 = vst.msk [vmem:[#allocation2 + $0x30] sm:$0xff] %vm744, %v3710
        %3755 = vst.msk [vmem:[#allocation2 + $0x38] sm:$0xff] %vm744, %v3711
        %3756 = vst.msk [vmem:[#allocation2 + $0x40] sm:$0xff] %vm744, %v3712
        %3757 = vst.msk [vmem:[#allocation2 + $0x48] sm:$0xff] %vm744, %v3713
        %3758 = vst.msk [vmem:[#allocation2 + $0x50] sm:$0xff] %vm744, %v3714
        %3759 = vst.msk [vmem:[#allocation2 + $0x58] sm:$0xff] %vm744, %v3715
        %3760 = vst.msk [vmem:[#allocation2 + $0x60] sm:$0xff] %vm744, %v3716
        %3761 = vst.msk [vmem:[#allocation2 + $0x68] sm:$0xff] %vm744, %v3717
        %3762 = vst.msk [vmem:[#allocation2 + $0x70] sm:$0xff] %vm744, %v3718
        %3763 = vst.msk [vmem:[#allocation2 + $0x78] sm:$0xff] %vm744, %v3719
        %3764 = vst.msk [vmem:[#allocation2 + $0x80] sm:$0xff] %vm744, %v3720
        %3765 = vst.msk [vmem:[#allocation2 + $0x88] sm:$0xff] %vm744, %v3721
        %3766 = vst.msk [vmem:[#allocation2 + $0x90] sm:$0xff] %vm744, %v3722
        %3767 = vst.msk [vmem:[#allocation2 + $0x98] sm:$0xff] %vm744, %v3723
        %3768 = vst.msk [vmem:[#allocation2 + $0xa0] sm:$0xff] %vm744, %v3724
        %3769 = vst.msk [vmem:[#allocation2 + $0xa8] sm:$0xff] %vm744, %v3725
        %3770 = vst.msk [vmem:[#allocation2 + $0xb0] sm:$0xff] %vm744, %v3726
        %3771 = vst.msk [vmem:[#allocation2 + $0xb8] sm:$0xff] %vm744, %v3727
        %3772 = vst.msk [vmem:[#allocation2 + $0xc0] sm:$0xff] %vm744, %v3728
        %3773 = vst.msk [vmem:[#allocation2 + $0xc8] sm:$0xff] %vm744, %v3729
        %3774 = vst.msk [vmem:[#allocation2 + $0xd0] sm:$0xff] %vm744, %v3730
        %3775 = vst.msk [vmem:[#allocation2 + $0xd8] sm:$0xff] %vm744, %v3731
        %3776 = vst.msk [vmem:[#allocation2 + $0xe0] sm:$0xff] %vm744, %v3732
        %3777 = vst.msk [vmem:[#allocation2 + $0xe8] sm:$0xff] %vm744, %v3733
        %3778 = vst.msk [vmem:[#allocation2 + $0xf0] sm:$0xff] %vm744, %v3734
        %3779 = vst.msk [vmem:[#allocation2 + $0xf8] sm:$0xff] %vm744, %v3735
        %3780 = vst.msk [vmem:[#allocation2 + $0x100] sm:$0xff] %vm744, %v3736
        %3781 = vst.msk [vmem:[#allocation2 + $0x108] sm:$0xff] %vm744, %v3737
        %3782 = vst.msk [vmem:[#allocation2 + $0x110] sm:$0xff] %vm744, %v3738
        %3783 = vst.msk [vmem:[#allocation2 + $0x118] sm:$0xff] %vm744, %v3739
        %3784 = vst.msk [vmem:[#allocation2 + $0x120] sm:$0xff] %vm744, %v3740
        %3785 = vst.msk [vmem:[#allocation2 + $0x128] sm:$0xff] %vm744, %v3741
        %3786 = vst.msk [vmem:[#allocation2 + $0x130] sm:$0xff] %vm744, %v3742
        %3787 = vst.msk [vmem:[#allocation2 + $0x138] sm:$0xff] %vm744, %v3743
        %3788 = vst.msk [vmem:[#allocation2 + $0x140] sm:$0xff] %vm744, %v3744
        %3789 = vst.msk [vmem:[#allocation2 + $0x148] sm:$0xff] %vm744, %v3745
        %3790 = vst.msk [vmem:[#allocation2 + $0x150] sm:$0xff] %vm744, %v3746
        %3791 = vst.msk [vmem:[#allocation2 + $0x158] sm:$0xff] %vm744, %v3747
        %s3792 = scalar_lea.vmem [#allocation5], 128
        %v3793 = vld [vmem:[%s3792] sm:$0xf]
        %v3794 = vld [vmem:[%s3792 + $0x4] sm:$0xf]
        %v3795 = vld [vmem:[%s3792 + $0x8] sm:$0xf]
        %v3796 = vld [vmem:[%s3792 + $0xc] sm:$0xf]
        %v3799 = vrot.slane %v1562, 1
        %v3800 = vsel %vm2957, %v3431, %v3799
        %v3801 = vrot.slane %v1563, 1
        %v3802 = vsel %vm2957, %v3799, %v3801
        %v3807 = vunpack.c.l.b16 %v3793
        %v3808 = vunpack.c.l.b16 %v3794
        %v3809 = vunpack.c.l.b16 %v3795
        %v3810 = vunpack.c.l.b16 %v3796
        %v3811 = vpack.c.b16 %v3808, %v3807
        %v3812 = vpack.c.b16 %v3810, %v3809
        %v3816 = vsel %vm468, %v3800, 0
        %v3819 = vsel %vm468, %v3802, 0
        %3821 = vmatprep.subr.bf16.mxu0 0
        %3822 = vmatpush1.bf16.msra.mxu0 %v3811
        %3823 = vmatprep.subr.bf16.mxu0 0
        %3824 = vmatpush1.bf16.msra.mxu0 %v3812
        %3825 = vmatprep.subr.bf16.mxu0 0
        %3826 = vmatpush1.bf16.msra.mxu0 0
        %3827 = vmatprep.subr.bf16.mxu0 0
        %3828 = vmatpush1.bf16.msra.mxu0 0
        %3829 = vmatprep.subr.bf16.mxu0 0
        %3830 = vmatpush1.bf16.msra.mxu0 0
        %3831 = vmatprep.subr.bf16.mxu0 0
        %3832 = vmatpush1.bf16.msra.mxu0 0
        %3833 = vmatprep.subr.bf16.mxu0 0
        %3834 = vmatpush1.bf16.msra.mxu0 0
        %3835 = vmatprep.subr.bf16.mxu0 0
        %3836 = vmatpush1.bf16.msra.mxu0 0
        %3837 = vmatprep.subr.bf16.mxu0 0
        %3838 = vmatpush1.bf16.msra.mxu0 0
        %3839 = vmatprep.subr.bf16.mxu0 0
        %3840 = vmatpush1.bf16.msra.mxu0 0
        %3841 = vmatprep.subr.bf16.mxu0 0
        %3842 = vmatpush1.bf16.msra.mxu0 0
        %3843 = vmatprep.subr.bf16.mxu0 0
        %3844 = vmatpush1.bf16.msra.mxu0 0
        %3845 = vmatprep.subr.bf16.mxu0 0
        %3846 = vmatpush1.bf16.msra.mxu0 0
        %3847 = vmatprep.subr.bf16.mxu0 0
        %3848 = vmatpush1.bf16.msra.mxu0 0
        %3849 = vmatprep.subr.bf16.mxu0 0
        %3850 = vmatpush1.bf16.msra.mxu0 0
        %3851 = vmatprep.subr.bf16.mxu0 0
        %3852 = vmatpush1.bf16.msra.mxu0 0
        %3853 = vmatprep.mubr.bf16.mxu0 0
        %3854 = vmatmul.mubr.bf16.gmra.mrb[0].mxu0 %v3028
        %v3855 = vpop.f32.mrb[0].mxu0
        %v3856 = vadd.f32 0.0, %v3855
        %v3857 = vpop.f32.mrb[0].mxu0
        %v3858 = vpop.f32.mrb[0].mxu0
        %v3859 = vadd.f32 0.0, %v3858
        %v3860 = vpop.f32.mrb[0].mxu0
        %3861 = vmatprep.mubr.bf16.mxu0 0
        %3862 = vmatmul.mubr.bf16.gmra.mrb[0].mxu0 %v3031
        %v3863 = vpop.f32.mrb[0].mxu0
        %v3864 = vadd.f32 0.0, %v3863
        %v3865 = vpop.f32.mrb[0].mxu0
        %v3866 = vpop.f32.mrb[0].mxu0
        %v3867 = vadd.f32 0.0, %v3866
        %v3868 = vpop.f32.mrb[0].mxu0
        %3869 = vmatprep.mubr.bf16.mxu0 0
        %3870 = vmatmul.mubr.bf16.gmra.mrb[0].mxu0 %v3034
        %v3871 = vpop.f32.mrb[0].mxu0
        %v3872 = vadd.f32 0.0, %v3871
        %v3873 = vpop.f32.mrb[0].mxu0
        %v3874 = vpop.f32.mrb[0].mxu0
        %v3875 = vadd.f32 0.0, %v3874
        %v3876 = vpop.f32.mrb[0].mxu0
        %3877 = vmatprep.mubr.bf16.mxu0 0
        %3878 = vmatmul.mubr.bf16.gmra.mrb[0].mxu0 %v3037
        %v3879 = vpop.f32.mrb[0].mxu0
        %v3880 = vadd.f32 0.0, %v3879
        %v3881 = vpop.f32.mrb[0].mxu0
        %v3882 = vpop.f32.mrb[0].mxu0
        %v3883 = vadd.f32 0.0, %v3882
        %v3884 = vpop.f32.mrb[0].mxu0
        %3885 = vmatprep.mubr.bf16.mxu0 0
        %3886 = vmatmul.mubr.bf16.gmra.mrb[0].mxu0 %v3040
        %v3887 = vpop.f32.mrb[0].mxu0
        %v3888 = vadd.f32 0.0, %v3887
        %v3889 = vpop.f32.mrb[0].mxu0
        %v3890 = vpop.f32.mrb[0].mxu0
        %v3891 = vadd.f32 0.0, %v3890
        %v3892 = vpop.f32.mrb[0].mxu0
        %3893 = vmatprep.mubr.bf16.mxu0 0
        %3894 = vmatmul.mubr.bf16.gmra.mrb[0].mxu0 %v3043
        %v3895 = vpop.f32.mrb[0].mxu0
        %v3896 = vadd.f32 0.0, %v3895
        %v3897 = vpop.f32.mrb[0].mxu0
        %v3898 = vpop.f32.mrb[0].mxu0
        %v3899 = vadd.f32 0.0, %v3898
        %v3900 = vpop.f32.mrb[0].mxu0
        %3901 = vmatprep.mubr.bf16.mxu0 0
        %3902 = vmatmul.mubr.bf16.gmra.mrb[0].mxu0 %v3046
        %v3903 = vpop.f32.mrb[0].mxu0
        %v3904 = vadd.f32 0.0, %v3903
        %v3905 = vpop.f32.mrb[0].mxu0
        %v3906 = vpop.f32.mrb[0].mxu0
        %v3907 = vadd.f32 0.0, %v3906
        %v3908 = vpop.f32.mrb[0].mxu0
        %3909 = vmatprep.mubr.bf16.mxu0 0
        %3910 = vmatmul.mubr.bf16.gmra.mrb[0].mxu0 %v3049
        %v3911 = vpop.f32.mrb[0].mxu0
        %v3912 = vadd.f32 0.0, %v3911
        %v3913 = vpop.f32.mrb[0].mxu0
        %v3914 = vpop.f32.mrb[0].mxu0
        %v3915 = vadd.f32 0.0, %v3914
        %v3916 = vpop.f32.mrb[0].mxu0
        %3917 = vmatprep.mubr.bf16.mxu0 0
        %3918 = vmatmul.mubr.bf16.gmra.mrb[0].mxu0 %v3052
        %v3919 = vpop.f32.mrb[0].mxu0
        %v3920 = vadd.f32 0.0, %v3919
        %v3921 = vpop.f32.mrb[0].mxu0
        %v3922 = vpop.f32.mrb[0].mxu0
        %v3923 = vadd.f32 0.0, %v3922
        %v3924 = vpop.f32.mrb[0].mxu0
        %3925 = vmatprep.mubr.bf16.mxu0 0
        %3926 = vmatmul.mubr.bf16.gmra.mrb[0].mxu0 %v3055
        %v3927 = vpop.f32.mrb[0].mxu0
        %v3928 = vadd.f32 0.0, %v3927
        %v3929 = vpop.f32.mrb[0].mxu0
        %v3930 = vpop.f32.mrb[0].mxu0
        %v3931 = vadd.f32 0.0, %v3930
        %v3932 = vpop.f32.mrb[0].mxu0
        %3933 = vmatprep.mubr.bf16.mxu0 0
        %3934 = vmatmul.mubr.bf16.gmra.mrb[0].mxu0 %v3058
        %v3935 = vpop.f32.mrb[0].mxu0
        %v3936 = vadd.f32 0.0, %v3935
        %v3937 = vpop.f32.mrb[0].mxu0
        %v3938 = vpop.f32.mrb[0].mxu0
        %v3939 = vadd.f32 0.0, %v3938
        %v3940 = vpop.f32.mrb[0].mxu0
        %3941 = vmatprep.mubr.bf16.mxu0 0
        %3942 = vmatmul.mubr.bf16.gmra.mrb[0].mxu0 %v3061
        %v3943 = vpop.f32.mrb[0].mxu0
        %v3944 = vadd.f32 0.0, %v3943
        %v3945 = vpop.f32.mrb[0].mxu0
        %v3946 = vpop.f32.mrb[0].mxu0
        %v3947 = vadd.f32 0.0, %v3946
        %v3948 = vpop.f32.mrb[0].mxu0
        %3949 = vmatprep.mubr.bf16.mxu0 0
        %3950 = vmatmul.mubr.bf16.gmra.mrb[0].mxu0 %v3064
        %v3951 = vpop.f32.mrb[0].mxu0
        %v3952 = vadd.f32 0.0, %v3951
        %v3953 = vpop.f32.mrb[0].mxu0
        %v3954 = vpop.f32.mrb[0].mxu0
        %v3955 = vadd.f32 0.0, %v3954
        %v3956 = vpop.f32.mrb[0].mxu0
        %3957 = vmatprep.mubr.bf16.mxu0 0
        %3958 = vmatmul.mubr.bf16.gmra.mrb[0].mxu0 %v3067
        %v3959 = vpop.f32.mrb[0].mxu0
        %v3960 = vadd.f32 0.0, %v3959
        %v3961 = vpop.f32.mrb[0].mxu0
        %v3962 = vpop.f32.mrb[0].mxu0
        %v3963 = vadd.f32 0.0, %v3962
        %v3964 = vpop.f32.mrb[0].mxu0
        %3965 = vmatprep.mubr.bf16.mxu0 0
        %3966 = vmatmul.mubr.bf16.gmra.mrb[0].mxu0 %v3070
        %v3967 = vpop.f32.mrb[0].mxu0
        %v3968 = vadd.f32 0.0, %v3967
        %v3969 = vpop.f32.mrb[0].mxu0
        %v3970 = vpop.f32.mrb[0].mxu0
        %v3971 = vadd.f32 0.0, %v3970
        %v3972 = vpop.f32.mrb[0].mxu0
        %3973 = vmatprep.mubr.bf16.mxu0 0
        %3974 = vmatmul.mubr.bf16.gmra.mrb[0].mxu0 %v3073
        %v3975 = vpop.f32.mrb[0].mxu0
        %v3976 = vadd.f32 0.0, %v3975
        %v3977 = vpop.f32.mrb[0].mxu0
        %v3978 = vpop.f32.mrb[0].mxu0
        %v3979 = vadd.f32 0.0, %v3978
        %v3980 = vpop.f32.mrb[0].mxu0
        %3981 = vmatprep.mubr.bf16.mxu0 0
        %3982 = vmatmul.mubr.bf16.gmra.mrb[0].mxu0 %v3076
        %v3983 = vpop.f32.mrb[0].mxu0
        %v3984 = vadd.f32 0.0, %v3983
        %v3985 = vpop.f32.mrb[0].mxu0
        %v3986 = vpop.f32.mrb[0].mxu0
        %v3987 = vadd.f32 0.0, %v3986
        %v3988 = vpop.f32.mrb[0].mxu0
        %3989 = vmatprep.mubr.bf16.mxu0 0
        %3990 = vmatmul.mubr.bf16.gmra.mrb[0].mxu0 %v3079
        %v3991 = vpop.f32.mrb[0].mxu0
        %v3992 = vadd.f32 0.0, %v3991
        %v3993 = vpop.f32.mrb[0].mxu0
        %v3994 = vpop.f32.mrb[0].mxu0
        %v3995 = vadd.f32 0.0, %v3994
        %v3996 = vpop.f32.mrb[0].mxu0
        %3997 = vmatprep.mubr.bf16.mxu0 0
        %3998 = vmatmul.mubr.bf16.gmra.mrb[0].mxu0 %v3446
        %v3999 = vpop.f32.mrb[0].mxu0
        %v4000 = vadd.f32 0.0, %v3999
        %v4001 = vpop.f32.mrb[0].mxu0
        %v4002 = vpop.f32.mrb[0].mxu0
        %v4003 = vadd.f32 0.0, %v4002
        %v4004 = vpop.f32.mrb[0].mxu0
        %4005 = vmatprep.mubr.bf16.mxu0 0
        %4006 = vmatmul.mubr.bf16.gmra.mrb[0].mxu0 %v3449
        %v4007 = vpop.f32.mrb[0].mxu0
        %v4008 = vadd.f32 0.0, %v4007
        %v4009 = vpop.f32.mrb[0].mxu0
        %v4010 = vpop.f32.mrb[0].mxu0
        %v4011 = vadd.f32 0.0, %v4010
        %v4012 = vpop.f32.mrb[0].mxu0
        %4013 = vmatprep.mubr.bf16.mxu0 0
        %4014 = vmatmul.mubr.bf16.gmra.mrb[0].mxu0 %v3816
        %v4015 = vpop.f32.mrb[0].mxu0
        %v4016 = vadd.f32 0.0, %v4015
        %v4017 = vpop.f32.mrb[0].mxu0
        %v4018 = vpop.f32.mrb[0].mxu0
        %v4019 = vadd.f32 0.0, %v4018
        %v4020 = vpop.f32.mrb[0].mxu0
        %4021 = vmatprep.mubr.bf16.mxu0 0
        %4022 = vmatmul.mubr.bf16.gmra.mrb[0].mxu0 %v3819
        %v4023 = vpop.f32.mrb[0].mxu0
        %v4024 = vadd.f32 0.0, %v4023
        %v4025 = vpop.f32.mrb[0].mxu0
        %v4026 = vpop.f32.mrb[0].mxu0
        %v4027 = vadd.f32 0.0, %v4026
        %v4028 = vpop.f32.mrb[0].mxu0
        %4029 = vdwg.mxu0
        %v4030 = vld [vmem:[#allocation2] sm:$0xff]
        %v4031 = vld [vmem:[#allocation2 + $0x8] sm:$0xff]
        %v4032 = vld [vmem:[#allocation2 + $0x10] sm:$0xff]
        %v4033 = vld [vmem:[#allocation2 + $0x18] sm:$0xff]
        %v4034 = vld [vmem:[#allocation2 + $0x20] sm:$0xff]
        %v4035 = vld [vmem:[#allocation2 + $0x28] sm:$0xff]
        %v4036 = vld [vmem:[#allocation2 + $0x30] sm:$0xff]
        %v4037 = vld [vmem:[#allocation2 + $0x38] sm:$0xff]
        %v4038 = vld [vmem:[#allocation2 + $0x40] sm:$0xff]
        %v4039 = vld [vmem:[#allocation2 + $0x48] sm:$0xff]
        %v4040 = vld [vmem:[#allocation2 + $0x50] sm:$0xff]
        %v4041 = vld [vmem:[#allocation2 + $0x58] sm:$0xff]
        %v4042 = vld [vmem:[#allocation2 + $0x60] sm:$0xff]
        %v4043 = vld [vmem:[#allocation2 + $0x68] sm:$0xff]
        %v4044 = vld [vmem:[#allocation2 + $0x70] sm:$0xff]
        %v4045 = vld [vmem:[#allocation2 + $0x78] sm:$0xff]
        %v4046 = vld [vmem:[#allocation2 + $0x80] sm:$0xff]
        %v4047 = vld [vmem:[#allocation2 + $0x88] sm:$0xff]
        %v4048 = vld [vmem:[#allocation2 + $0x90] sm:$0xff]
        %v4049 = vld [vmem:[#allocation2 + $0x98] sm:$0xff]
        %v4050 = vld [vmem:[#allocation2 + $0xa0] sm:$0xff]
        %v4051 = vld [vmem:[#allocation2 + $0xa8] sm:$0xff]
        %v4052 = vld [vmem:[#allocation2 + $0xb0] sm:$0xff]
        %v4053 = vld [vmem:[#allocation2 + $0xb8] sm:$0xff]
        %v4054 = vld [vmem:[#allocation2 + $0xc0] sm:$0xff]
        %v4055 = vld [vmem:[#allocation2 + $0xc8] sm:$0xff]
        %v4056 = vld [vmem:[#allocation2 + $0xd0] sm:$0xff]
        %v4057 = vld [vmem:[#allocation2 + $0xd8] sm:$0xff]
        %v4058 = vld [vmem:[#allocation2 + $0xe0] sm:$0xff]
        %v4059 = vld [vmem:[#allocation2 + $0xe8] sm:$0xff]
        %v4060 = vld [vmem:[#allocation2 + $0xf0] sm:$0xff]
        %v4061 = vld [vmem:[#allocation2 + $0xf8] sm:$0xff]
        %v4062 = vld [vmem:[#allocation2 + $0x100] sm:$0xff]
        %v4063 = vld [vmem:[#allocation2 + $0x108] sm:$0xff]
        %v4064 = vld [vmem:[#allocation2 + $0x110] sm:$0xff]
        %v4065 = vld [vmem:[#allocation2 + $0x118] sm:$0xff]
        %v4066 = vld [vmem:[#allocation2 + $0x120] sm:$0xff]
        %v4067 = vld [vmem:[#allocation2 + $0x128] sm:$0xff]
        %v4068 = vld [vmem:[#allocation2 + $0x130] sm:$0xff]
        %v4069 = vld [vmem:[#allocation2 + $0x138] sm:$0xff]
        %v4070 = vld [vmem:[#allocation2 + $0x140] sm:$0xff]
        %v4071 = vld [vmem:[#allocation2 + $0x148] sm:$0xff]
        %v4072 = vld [vmem:[#allocation2 + $0x150] sm:$0xff]
        %v4073 = vld [vmem:[#allocation2 + $0x158] sm:$0xff]
        %v4074 = vadd.f32 %v4030, %v3856
        %v4075 = vadd.f32 %v4031, %v3859
        %v4076 = vadd.f32 %v4032, %v3864
        %v4077 = vadd.f32 %v4033, %v3867
        %v4078 = vadd.f32 %v4034, %v3872
        %v4079 = vadd.f32 %v4035, %v3875
        %v4080 = vadd.f32 %v4036, %v3880
        %v4081 = vadd.f32 %v4037, %v3883
        %v4082 = vadd.f32 %v4038, %v3888
        %v4083 = vadd.f32 %v4039, %v3891
        %v4084 = vadd.f32 %v4040, %v3896
        %v4085 = vadd.f32 %v4041, %v3899
        %v4086 = vadd.f32 %v4042, %v3904
        %v4087 = vadd.f32 %v4043, %v3907
        %v4088 = vadd.f32 %v4044, %v3912
        %v4089 = vadd.f32 %v4045, %v3915
        %v4090 = vadd.f32 %v4046, %v3920
        %v4091 = vadd.f32 %v4047, %v3923
        %v4092 = vadd.f32 %v4048, %v3928
        %v4093 = vadd.f32 %v4049, %v3931
        %v4094 = vadd.f32 %v4050, %v3936
        %v4095 = vadd.f32 %v4051, %v3939
        %v4096 = vadd.f32 %v4052, %v3944
        %v4097 = vadd.f32 %v4053, %v3947
        %v4098 = vadd.f32 %v4054, %v3952
        %v4099 = vadd.f32 %v4055, %v3955
        %v4100 = vadd.f32 %v4056, %v3960
        %v4101 = vadd.f32 %v4057, %v3963
        %v4102 = vadd.f32 %v4058, %v3968
        %v4103 = vadd.f32 %v4059, %v3971
        %v4104 = vadd.f32 %v4060, %v3976
        %v4105 = vadd.f32 %v4061, %v3979
        %v4106 = vadd.f32 %v4062, %v3984
        %v4107 = vadd.f32 %v4063, %v3987
        %v4108 = vadd.f32 %v4064, %v3992
        %v4109 = vadd.f32 %v4065, %v3995
        %v4110 = vadd.f32 %v4066, %v4000
        %v4111 = vadd.f32 %v4067, %v4003
        %v4112 = vadd.f32 %v4068, %v4008
        %v4113 = vadd.f32 %v4069, %v4011
        %v4114 = vadd.f32 %v4070, %v4016
        %v4115 = vadd.f32 %v4071, %v4019
        %v4116 = vadd.f32 %v4072, %v4024
        %v4117 = vadd.f32 %v4073, %v4027
        %4118 = vst.msk [vmem:[#allocation2] sm:$0xff] %vm744, %v4074
        %4119 = vst.msk [vmem:[#allocation2 + $0x8] sm:$0xff] %vm744, %v4075
        %4120 = vst.msk [vmem:[#allocation2 + $0x10] sm:$0xff] %vm744, %v4076
        %4121 = vst.msk [vmem:[#allocation2 + $0x18] sm:$0xff] %vm744, %v4077
        %4122 = vst.msk [vmem:[#allocation2 + $0x20] sm:$0xff] %vm744, %v4078
        %4123 = vst.msk [vmem:[#allocation2 + $0x28] sm:$0xff] %vm744, %v4079
        %4124 = vst.msk [vmem:[#allocation2 + $0x30] sm:$0xff] %vm744, %v4080
        %4125 = vst.msk [vmem:[#allocation2 + $0x38] sm:$0xff] %vm744, %v4081
        %4126 = vst.msk [vmem:[#allocation2 + $0x40] sm:$0xff] %vm744, %v4082
        %4127 = vst.msk [vmem:[#allocation2 + $0x48] sm:$0xff] %vm744, %v4083
        %4128 = vst.msk [vmem:[#allocation2 + $0x50] sm:$0xff] %vm744, %v4084
        %4129 = vst.msk [vmem:[#allocation2 + $0x58] sm:$0xff] %vm744, %v4085
        %4130 = vst.msk [vmem:[#allocation2 + $0x60] sm:$0xff] %vm744, %v4086
        %4131 = vst.msk [vmem:[#allocation2 + $0x68] sm:$0xff] %vm744, %v4087
        %4132 = vst.msk [vmem:[#allocation2 + $0x70] sm:$0xff] %vm744, %v4088
        %4133 = vst.msk [vmem:[#allocation2 + $0x78] sm:$0xff] %vm744, %v4089
        %4134 = vst.msk [vmem:[#allocation2 + $0x80] sm:$0xff] %vm744, %v4090
        %4135 = vst.msk [vmem:[#allocation2 + $0x88] sm:$0xff] %vm744, %v4091
        %4136 = vst.msk [vmem:[#allocation2 + $0x90] sm:$0xff] %vm744, %v4092
        %4137 = vst.msk [vmem:[#allocation2 + $0x98] sm:$0xff] %vm744, %v4093
        %4138 = vst.msk [vmem:[#allocation2 + $0xa0] sm:$0xff] %vm744, %v4094
        %4139 = vst.msk [vmem:[#allocation2 + $0xa8] sm:$0xff] %vm744, %v4095
        %4140 = vst.msk [vmem:[#allocation2 + $0xb0] sm:$0xff] %vm744, %v4096
        %4141 = vst.msk [vmem:[#allocation2 + $0xb8] sm:$0xff] %vm744, %v4097
        %4142 = vst.msk [vmem:[#allocation2 + $0xc0] sm:$0xff] %vm744, %v4098
        %4143 = vst.msk [vmem:[#allocation2 + $0xc8] sm:$0xff] %vm744, %v4099
        %4144 = vst.msk [vmem:[#allocation2 + $0xd0] sm:$0xff] %vm744, %v4100
        %4145 = vst.msk [vmem:[#allocation2 + $0xd8] sm:$0xff] %vm744, %v4101
        %4146 = vst.msk [vmem:[#allocation2 + $0xe0] sm:$0xff] %vm744, %v4102
        %4147 = vst.msk [vmem:[#allocation2 + $0xe8] sm:$0xff] %vm744, %v4103
        %4148 = vst.msk [vmem:[#allocation2 + $0xf0] sm:$0xff] %vm744, %v4104
        %4149 = vst.msk [vmem:[#allocation2 + $0xf8] sm:$0xff] %vm744, %v4105
        %4150 = vst.msk [vmem:[#allocation2 + $0x100] sm:$0xff] %vm744, %v4106
        %4151 = vst.msk [vmem:[#allocation2 + $0x108] sm:$0xff] %vm744, %v4107
        %4152 = vst.msk [vmem:[#allocation2 + $0x110] sm:$0xff] %vm744, %v4108
        %4153 = vst.msk [vmem:[#allocation2 + $0x118] sm:$0xff] %vm744, %v4109
        %4154 = vst.msk [vmem:[#allocation2 + $0x120] sm:$0xff] %vm744, %v4110
        %4155 = vst.msk [vmem:[#allocation2 + $0x128] sm:$0xff] %vm744, %v4111
        %4156 = vst.msk [vmem:[#allocation2 + $0x130] sm:$0xff] %vm744, %v4112
        %4157 = vst.msk [vmem:[#allocation2 + $0x138] sm:$0xff] %vm744, %v4113
        %4158 = vst.msk [vmem:[#allocation2 + $0x140] sm:$0xff] %vm744, %v4114
        %4159 = vst.msk [vmem:[#allocation2 + $0x148] sm:$0xff] %vm744, %v4115
        %4160 = vst.msk [vmem:[#allocation2 + $0x150] sm:$0xff] %vm744, %v4116
        %4161 = vst.msk [vmem:[#allocation2 + $0x158] sm:$0xff] %vm744, %v4117
        %v4162 = vld [vmem:[#allocation2] sm:$0xff]
        %v4163 = vld [vmem:[#allocation2 + $0x8] sm:$0xff]
        %v4164 = vld [vmem:[#allocation2 + $0x10] sm:$0xff]
        %v4165 = vld [vmem:[#allocation2 + $0x20] sm:$0xff]
        %v4166 = vld [vmem:[#allocation2 + $0x28] sm:$0xff]
        %v4167 = vld [vmem:[#allocation2 + $0x30] sm:$0xff]
        %v4168 = vld [vmem:[#allocation2 + $0x40] sm:$0xff]
        %v4169 = vld [vmem:[#allocation2 + $0x48] sm:$0xff]
        %v4170 = vld [vmem:[#allocation2 + $0x50] sm:$0xff]
        %v4171 = vld [vmem:[#allocation2 + $0x60] sm:$0xff]
        %v4172 = vld [vmem:[#allocation2 + $0x68] sm:$0xff]
        %v4173 = vld [vmem:[#allocation2 + $0x70] sm:$0xff]
        %v4174 = vld [vmem:[#allocation2 + $0x80] sm:$0xff]
        %v4175 = vld [vmem:[#allocation2 + $0x88] sm:$0xff]
        %v4176 = vld [vmem:[#allocation2 + $0x90] sm:$0xff]
        %v4177 = vld [vmem:[#allocation2 + $0xa0] sm:$0xff]
        %v4178 = vld [vmem:[#allocation2 + $0xa8] sm:$0xff]
        %v4179 = vld [vmem:[#allocation2 + $0xb0] sm:$0xff]
        %v4180 = vld [vmem:[#allocation2 + $0xc0] sm:$0xff]
        %v4181 = vld [vmem:[#allocation2 + $0xc8] sm:$0xff]
        %v4182 = vld [vmem:[#allocation2 + $0xd0] sm:$0xff]
        %v4183 = vld [vmem:[#allocation2 + $0xe0] sm:$0xff]
        %v4184 = vld [vmem:[#allocation2 + $0xe8] sm:$0xff]
        %v4185 = vld [vmem:[#allocation2 + $0xf0] sm:$0xff]
        %v4186 = vld [vmem:[#allocation2 + $0x100] sm:$0xff]
        %v4187 = vld [vmem:[#allocation2 + $0x108] sm:$0xff]
        %v4188 = vld [vmem:[#allocation2 + $0x110] sm:$0xff]
        %v4189 = vld [vmem:[#allocation2 + $0x120] sm:$0xff]
        %v4190 = vld [vmem:[#allocation2 + $0x128] sm:$0xff]
        %v4191 = vld [vmem:[#allocation2 + $0x130] sm:$0xff]
        %v4192 = vld [vmem:[#allocation2 + $0x140] sm:$0xff]
        %v4193 = vld [vmem:[#allocation2 + $0x148] sm:$0xff]
        %v4194 = vld [vmem:[#allocation2 + $0x150] sm:$0xff]
        %v4195 = vld [vmem:[%s2] sm:$0x1]
        %v4197 = vlaneseq
        %v4198 = vshrl.u32 %v4197, 7
        %v4199 = vsub.s32 0, %v4198
        %v4200 = vrot.slane %v4195, %v4199
        %v4202 = vadd.f32 %v4162, %v4200
        %v4203 = vadd.f32 %v4163, %v4200
        %v4204 = vadd.f32 %v4164, %v4200
        %v4205 = vadd.f32 %v4165, %v4200
        %v4206 = vadd.f32 %v4166, %v4200
        %v4207 = vadd.f32 %v4167, %v4200
        %v4208 = vadd.f32 %v4168, %v4200
        %v4209 = vadd.f32 %v4169, %v4200
        %v4210 = vadd.f32 %v4170, %v4200
        %v4211 = vadd.f32 %v4171, %v4200
        %v4212 = vadd.f32 %v4172, %v4200
        %v4213 = vadd.f32 %v4173, %v4200
        %v4214 = vadd.f32 %v4174, %v4200
        %v4215 = vadd.f32 %v4175, %v4200
        %v4216 = vadd.f32 %v4176, %v4200
        %v4217 = vadd.f32 %v4177, %v4200
        %v4218 = vadd.f32 %v4178, %v4200
        %v4219 = vadd.f32 %v4179, %v4200
        %v4220 = vadd.f32 %v4180, %v4200
        %v4221 = vadd.f32 %v4181, %v4200
        %v4222 = vadd.f32 %v4182, %v4200
        %v4223 = vadd.f32 %v4183, %v4200
        %v4224 = vadd.f32 %v4184, %v4200
        %v4225 = vadd.f32 %v4185, %v4200
        %v4226 = vadd.f32 %v4186, %v4200
        %v4227 = vadd.f32 %v4187, %v4200
        %v4228 = vadd.f32 %v4188, %v4200
        %v4229 = vadd.f32 %v4189, %v4200
        %v4230 = vadd.f32 %v4190, %v4200
        %v4231 = vadd.f32 %v4191, %v4200
        %v4232 = vadd.f32 %v4192, %v4200
        %v4233 = vadd.f32 %v4193, %v4200
        %v4234 = vadd.f32 %v4194, %v4200
        %v4235 = vmax.f32 %v4202, 0.0
        %v4236 = vmax.f32 %v4203, 0.0
        %v4237 = vmax.f32 %v4204, 0.0
        %v4238 = vmax.f32 %v4205, 0.0
        %v4239 = vmax.f32 %v4206, 0.0
        %v4240 = vmax.f32 %v4207, 0.0
        %v4241 = vmax.f32 %v4208, 0.0
        %v4242 = vmax.f32 %v4209, 0.0
        %v4243 = vmax.f32 %v4210, 0.0
        %v4244 = vmax.f32 %v4211, 0.0
        %v4245 = vmax.f32 %v4212, 0.0
        %v4246 = vmax.f32 %v4213, 0.0
        %v4247 = vmax.f32 %v4214, 0.0
        %v4248 = vmax.f32 %v4215, 0.0
        %v4249 = vmax.f32 %v4216, 0.0
        %v4250 = vmax.f32 %v4217, 0.0
        %v4251 = vmax.f32 %v4218, 0.0
        %v4252 = vmax.f32 %v4219, 0.0
        %v4253 = vmax.f32 %v4220, 0.0
        %v4254 = vmax.f32 %v4221, 0.0
        %v4255 = vmax.f32 %v4222, 0.0
        %v4256 = vmax.f32 %v4223, 0.0
        %v4257 = vmax.f32 %v4224, 0.0
        %v4258 = vmax.f32 %v4225, 0.0
        %v4259 = vmax.f32 %v4226, 0.0
        %v4260 = vmax.f32 %v4227, 0.0
        %v4261 = vmax.f32 %v4228, 0.0
        %v4262 = vmax.f32 %v4229, 0.0
        %v4263 = vmax.f32 %v4230, 0.0
        %v4264 = vmax.f32 %v4231, 0.0
        %v4265 = vmax.f32 %v4232, 0.0
        %v4266 = vmax.f32 %v4233, 0.0
        %v4267 = vmax.f32 %v4234, 0.0
        %v4268 = vpack.c.bf16 %v4236, %v4235
        %v4269 = vpack.c.bf16 %v4237, %v4237
        %v4270 = vpack.c.bf16 %v4239, %v4238
        %v4271 = vpack.c.bf16 %v4240, %v4240
        %v4272 = vpack.c.bf16 %v4242, %v4241
        %v4273 = vpack.c.bf16 %v4243, %v4243
        %v4274 = vpack.c.bf16 %v4245, %v4244
        %v4275 = vpack.c.bf16 %v4246, %v4246
        %v4276 = vpack.c.bf16 %v4248, %v4247
        %v4277 = vpack.c.bf16 %v4249, %v4249
        %v4278 = vpack.c.bf16 %v4251, %v4250
        %v4279 = vpack.c.bf16 %v4252, %v4252
        %v4280 = vpack.c.bf16 %v4254, %v4253
        %v4281 = vpack.c.bf16 %v4255, %v4255
        %v4282 = vpack.c.bf16 %v4257, %v4256
        %v4283 = vpack.c.bf16 %v4258, %v4258
        %v4284 = vpack.c.bf16 %v4260, %v4259
        %v4285 = vpack.c.bf16 %v4261, %v4261
        %v4286 = vpack.c.bf16 %v4263, %v4262
        %v4287 = vpack.c.bf16 %v4264, %v4264
        %v4288 = vpack.c.bf16 %v4266, %v4265
        %v4289 = vpack.c.bf16 %v4267, %v4267
        %v4312 = vunpack.c.l.b16 %v4268
        %v4313 = vunpack.c.h.b16 %v4268
        %v4314 = vunpack.c.l.b16 %v4269
        %v4315 = vunpack.c.l.b16 %v4270
        %v4316 = vunpack.c.h.b16 %v4270
        %v4317 = vunpack.c.l.b16 %v4271
        %v4318 = vunpack.c.l.b16 %v4272
        %v4319 = vunpack.c.h.b16 %v4272
        %v4320 = vunpack.c.l.b16 %v4273
        %v4321 = vunpack.c.l.b16 %v4274
        %v4322 = vunpack.c.h.b16 %v4274
        %v4323 = vunpack.c.l.b16 %v4275
        %v4324 = vunpack.c.l.b16 %v4276
        %v4325 = vunpack.c.h.b16 %v4276
        %v4326 = vunpack.c.l.b16 %v4277
        %v4327 = vunpack.c.l.b16 %v4278
        %v4328 = vunpack.c.h.b16 %v4278
        %v4329 = vunpack.c.l.b16 %v4279
        %v4330 = vunpack.c.l.b16 %v4280
        %v4331 = vunpack.c.h.b16 %v4280
        %v4332 = vunpack.c.l.b16 %v4281
        %v4333 = vunpack.c.l.b16 %v4282
        %v4334 = vunpack.c.h.b16 %v4282
        %v4335 = vunpack.c.l.b16 %v4283
        %v4336 = vunpack.c.l.b16 %v4284
        %v4337 = vunpack.c.h.b16 %v4284
        %v4338 = vunpack.c.l.b16 %v4285
        %v4339 = vunpack.c.l.b16 %v4286
        %v4340 = vunpack.c.h.b16 %v4286
        %v4341 = vunpack.c.l.b16 %v4287
        %v4342 = vunpack.c.l.b16 %v4288
        %v4343 = vunpack.c.h.b16 %v4288
        %v4344 = vunpack.c.l.b16 %v4289
        %v4345 = vpack.c.b16 %v4312, %v4312
        %v4346 = vpack.c.b16 %v4313, %v4313
        %v4347 = vpack.c.b16 %v4314, %v4314
        %v4348 = vpack.c.b16 %v4315, %v4315
        %v4349 = vpack.c.b16 %v4316, %v4316
        %v4350 = vpack.c.b16 %v4317, %v4317
        %v4351 = vpack.c.b16 %v4318, %v4318
        %v4352 = vpack.c.b16 %v4319, %v4319
        %v4353 = vpack.c.b16 %v4320, %v4320
        %v4354 = vpack.c.b16 %v4321, %v4321
        %v4355 = vpack.c.b16 %v4322, %v4322
        %v4356 = vpack.c.b16 %v4323, %v4323
        %v4357 = vpack.c.b16 %v4324, %v4324
        %v4358 = vpack.c.b16 %v4325, %v4325
        %v4359 = vpack.c.b16 %v4326, %v4326
        %v4360 = vpack.c.b16 %v4327, %v4327
        %v4361 = vpack.c.b16 %v4328, %v4328
        %v4362 = vpack.c.b16 %v4329, %v4329
        %v4363 = vpack.c.b16 %v4330, %v4330
        %v4364 = vpack.c.b16 %v4331, %v4331
        %v4365 = vpack.c.b16 %v4332, %v4332
        %v4366 = vpack.c.b16 %v4333, %v4333
        %v4367 = vpack.c.b16 %v4334, %v4334
        %v4368 = vpack.c.b16 %v4335, %v4335
        %v4369 = vpack.c.b16 %v4336, %v4336
        %v4370 = vpack.c.b16 %v4337, %v4337
        %v4371 = vpack.c.b16 %v4338, %v4338
        %v4372 = vpack.c.b16 %v4339, %v4339
        %v4373 = vpack.c.b16 %v4340, %v4340
        %v4374 = vpack.c.b16 %v4341, %v4341
        %v4375 = vpack.c.b16 %v4342, %v4342
        %v4376 = vpack.c.b16 %v4343, %v4343
        %v4377 = vpack.c.b16 %v4344, %v4344
        %vm4411 = vcmask 519168
        %4412 = vst.msk [vmem:[%s229] sm:$0xf] %vm4411, %v4345
        %4413 = vst.msk [vmem:[%s229 + $0x4] sm:$0xf] %vm4411, %v4346
        %vm4414 = vcmask 517120
        %vm4415 = vsmask.f32 1280
        %vm4416 = vmand %vm4414, %vm4415
        %v4417 = vld [vmem:[%s229 + $0x8] sm:$0x3]
        %v4418 = vsel %vm4416, %v4347, %v4417
        %4419 = vst [vmem:[%s229 + $0x8] sm:$0x3] %v4418
        %4420 = vst.msk [vmem:[%s229 + $0xc] sm:$0xf] %vm4411, %v4348
        %4421 = vst.msk [vmem:[%s229 + $0x10] sm:$0xf] %vm4411, %v4349
        %v4422 = vld [vmem:[%s229 + $0x14] sm:$0x3]
        %v4423 = vsel %vm4416, %v4350, %v4422
        %4424 = vst [vmem:[%s229 + $0x14] sm:$0x3] %v4423
        %4425 = vst.msk [vmem:[%s229 + $0x18] sm:$0xf] %vm4411, %v4351
        %4426 = vst.msk [vmem:[%s229 + $0x1c] sm:$0xf] %vm4411, %v4352
        %v4427 = vld [vmem:[%s229 + $0x20] sm:$0x3]
        %v4428 = vsel %vm4416, %v4353, %v4427
        %4429 = vst [vmem:[%s229 + $0x20] sm:$0x3] %v4428
        %4430 = vst.msk [vmem:[%s229 + $0x24] sm:$0xf] %vm4411, %v4354
        %4431 = vst.msk [vmem:[%s229 + $0x28] sm:$0xf] %vm4411, %v4355
        %v4432 = vld [vmem:[%s229 + $0x2c] sm:$0x3]
        %v4433 = vsel %vm4416, %v4356, %v4432
        %4434 = vst [vmem:[%s229 + $0x2c] sm:$0x3] %v4433
        %4435 = vst.msk [vmem:[%s229 + $0x30] sm:$0xf] %vm4411, %v4357
        %4436 = vst.msk [vmem:[%s229 + $0x34] sm:$0xf] %vm4411, %v4358
        %v4437 = vld [vmem:[%s229 + $0x38] sm:$0x3]
        %v4438 = vsel %vm4416, %v4359, %v4437
        %4439 = vst [vmem:[%s229 + $0x38] sm:$0x3] %v4438
        %4440 = vst.msk [vmem:[%s229 + $0x3c] sm:$0xf] %vm4411, %v4360
        %4441 = vst.msk [vmem:[%s229 + $0x40] sm:$0xf] %vm4411, %v4361
        %v4442 = vld [vmem:[%s229 + $0x44] sm:$0x3]
        %v4443 = vsel %vm4416, %v4362, %v4442
        %4444 = vst [vmem:[%s229 + $0x44] sm:$0x3] %v4443
        %4445 = vst.msk [vmem:[%s229 + $0x48] sm:$0xf] %vm4411, %v4363
        %4446 = vst.msk [vmem:[%s229 + $0x4c] sm:$0xf] %vm4411, %v4364
        %v4447 = vld [vmem:[%s229 + $0x50] sm:$0x3]
        %v4448 = vsel %vm4416, %v4365, %v4447
        %4449 = vst [vmem:[%s229 + $0x50] sm:$0x3] %v4448
        %4450 = vst.msk [vmem:[%s229 + $0x54] sm:$0xf] %vm4411, %v4366
        %4451 = vst.msk [vmem:[%s229 + $0x58] sm:$0xf] %vm4411, %v4367
        %v4452 = vld [vmem:[%s229 + $0x5c] sm:$0x3]
        %v4453 = vsel %vm4416, %v4368, %v4452
        %4454 = vst [vmem:[%s229 + $0x5c] sm:$0x3] %v4453
        %4455 = vst.msk [vmem:[%s229 + $0x60] sm:$0xf] %vm4411, %v4369
        %4456 = vst.msk [vmem:[%s229 + $0x64] sm:$0xf] %vm4411, %v4370
        %v4457 = vld [vmem:[%s229 + $0x68] sm:$0x3]
        %v4458 = vsel %vm4416, %v4371, %v4457
        %4459 = vst [vmem:[%s229 + $0x68] sm:$0x3] %v4458
        %4460 = vst.msk [vmem:[%s229 + $0x6c] sm:$0xf] %vm4411, %v4372
        %4461 = vst.msk [vmem:[%s229 + $0x70] sm:$0xf] %vm4411, %v4373
        %v4462 = vld [vmem:[%s229 + $0x74] sm:$0x3]
        %v4463 = vsel %vm4416, %v4374, %v4462
        %4464 = vst [vmem:[%s229 + $0x74] sm:$0x3] %v4463
        %4465 = vst.msk [vmem:[%s229 + $0x78] sm:$0xf] %vm4411, %v4375
        %4466 = vst.msk [vmem:[%s229 + $0x7c] sm:$0xf] %vm4411, %v4376
        %v4467 = vld [vmem:[%s229 + $0x80] sm:$0x3]
        %v4468 = vsel %vm4416, %v4377, %v4467
        %4469 = vst [vmem:[%s229 + $0x80] sm:$0x3] %v4468
        %s4470 = smul.u32 11, %s23
        %p4471 = scmp.lt.s32.totalorder %s22, 1
        %s4472 = scalar_select %p4471, %s22, 1
        %p4473 = scmp.lt.s32.totalorder %s4470, 10
        %s4474 = scalar_select %p4473, %s4470, 10
        %s4475 = smul.addr %s4474, 3
        %s4476 = smul.addr %s4472, 33
        %s4477 = sadd.s32 %s4475, %s4476
        %s4478 = smul.addr %s4477, 4
        %s4479 = scalar_lea.vmem %s3, %s4478
        // Predicated region
        $region41: #{tpu_custom_call.1} parent=31 // pred_check
          %p4480 = pneg %p118
        $region42: #{tpu_custom_call.1} parent=31 // pred_check_branch
          %4482 = sbr.rel (%p4480) target = $region44
        $region43: #{tpu_custom_call.1} parent=31 // pred_region
          %s4483 = smul.u32 11, %s23
        $region44: #{tpu_custom_call.1} parent=31 // pred_fallthru
          _
      $region32: #{tpu_custom_call.1} parent=5 // pred_fallthru
        _
      %p4484 = scmp.le.s32.totalorder 2, %s13
      // Predicated region
      $region45: #{tpu_custom_call.1} parent=5 // pred_check
        %p4485 = pneg %p4484
      $region46: #{tpu_custom_call.1} parent=5 // pred_check_branch
        %4487 = sbr.rel (%p4485) target = $region48
      $region47: #{tpu_custom_call.1} parent=5 // pred_region
        %s4488 = ssub.s32 %s13, 2
        // Predicated region
        $region49: #{tpu_custom_call.1} parent=47 // pred_check
          %p4489 = pneg %p124
        $region50: #{tpu_custom_call.1} parent=47 // pred_check_branch
          %4491 = sbr.rel (%p4489) target = $region52
        $region51: #{tpu_custom_call.1} parent=47 // pred_region
          %s4492 = smul.u32 11, %s25
          %p4493 = scmp.lt.s32.totalorder %s24, 1
          %s4494 = scalar_select %p4493, %s24, 1
          %p4495 = scmp.lt.s32.totalorder %s4492, 10
          %s4496 = scalar_select %p4495, %s4492, 10
          %s4497 = smul.addr %s4496, 3
          %s4498 = smul.addr %s4494, 33
          %s4499 = sadd.s32 %s4497, %s4498
          %s4500 = smul.addr %s4499, 4
          %s4501 = scalar_lea.vmem %s3, %s4500
        $region52: #{tpu_custom_call.1} parent=47 // pred_fallthru
          _
      $region48: #{tpu_custom_call.1} parent=5 // pred_fallthru
        _
    $region6: #{tpu_custom_call.1} parent=1 // loop_footer
      %s17 = sadd.s32 1, %s13
    $region7: #{tpu_custom_call.1} parent=1 // loop_footer_branch
      %12 = sbr.rel target = $region3
    $region8: #{tpu_custom_call.1} parent=1 // loop_exit
      _
    %4502 = vsyncpa [#allocation4], 1
    %s4503 = scalar_lea.sflag [#allocation4], 1
    %4504 = vsyncpa %s4503, 1
    %4505 = vsyncpa [#allocation6], 1

</llo_original>
